<compile_context>
chip_gen: v7x
topology: tpu7x:2x2x1
jax: 0.10.0
libtpu: 0.0.40
codegen_flags: <defaults>
</compile_context>

<pallas_src>
import functools

import jax
import jax.numpy as jnp
from jax.experimental import pallas as pl
from jax.experimental.pallas import tpu as pltpu

_LANES = 128  # TPU lane width; channels are padded to a multiple of this.


def _basic_block_kernel(x_ref, w1_ref, w2_ref, w3_ref, sc_ref, sh_ref,
                        out_ref, pad1_ref, pad2_ref, pool_ref, *,
                        full_resblock):
    H, W, cin = x_ref.shape
    hh, wh, planes = out_ref.shape
    cp = pad1_ref.shape[-1]

    def conv3x3(pad_ref, w_ref, hc, wc):
        # im2col the 3x3 taps into the contraction axis: one
        # (hc*wc, 9*cp) x (9*cp, cp) bf16 MXU matmul with f32 accumulation.
        cols = [pad_ref[dy:dy + hc, dx:dx + wc, :].reshape(hc * wc, cp)
                for dy in range(3) for dx in range(3)]
        patch = jnp.concatenate(cols, axis=1).astype(jnp.bfloat16)
        return jnp.dot(patch, w_ref[...], preferred_element_type=jnp.float32)

    def bn_relu(y, i):
        # eval-mode BN folded to per-channel scale/shift (conv bias folded in).
        s = sc_ref[i:i + 1, :].reshape(1, 1, cp)
        t = sh_ref[i:i + 1, :].reshape(1, 1, cp)
        return jnp.maximum(y * s + t, 0.0)

    # In-kernel zero padding for conv padding=1.  Borders stay zero; padded
    # channel lanes stay exactly zero through every layer (zero weight rows /
    # zero scale+shift), so they never pollute the real channels.
    pad1_ref[...] = jnp.zeros_like(pad1_ref)
    pad2_ref[...] = jnp.zeros_like(pad2_ref)
    pad1_ref[1:H + 1, 1:W + 1, 0:cin] = x_ref[...].astype(pad1_ref.dtype)

    # ---- layer1: conv3x3 -> maxpool(2,2) -> BN -> ReLU ----------------------
    acc1 = conv3x3(pad1_ref, w1_ref, H, W)                  # (H*W, cp) f32
    # maxpool along W: rows of acc1 are ordered m = y*W + x (x fastest), so
    # the 2x2 W-pairs are adjacent rows -> strided-sublane reads.
    pool_ref[...] = acc1
    wmax = jnp.maximum(pool_ref[pl.ds(0, H * wh, 2), :],
                       pool_ref[pl.ds(1, H * wh, 2), :])    # (H*wh, cp)
    # maxpool along H: tile-aligned reshape + max over a leading axis.
    w4 = wmax.reshape(hh, 2, wh, cp)
    pooled = jnp.maximum(w4[:, 0], w4[:, 1])                # (hh, wh, cp)
    out0 = bn_relu(pooled, 0)                               # f32

    if full_resblock:
        # ---- resblock: (conv3x3 -> BN -> ReLU) x 2 ---------------------------
        pad2_ref[1:hh + 1, 1:wh + 1, :] = out0
        h = bn_relu(conv3x3(pad2_ref, w2_ref, hh, wh).reshape(hh, wh, cp), 1)
        pad2_ref[1:hh + 1, 1:wh + 1, :] = h
        res = bn_relu(conv3x3(pad2_ref, w3_ref, hh, wh).reshape(hh, wh, cp), 2)
    else:
        res = out0                                          # empty resblock

    out = res + out0
    out_ref[...] = out[:, :, :planes].astype(out_ref.dtype)


def basic_block_forward(x_nchw, p, count='a', pre='n'):
    """BasicBlock forward.  x_nchw: (N, C, H, W), PyTorch layout."""
    # TODO(synk): pre == 'p' applies transforms.RandomCrop((32,32), padding=4),
    # a stochastic torchvision augmentation with no clean Pallas equivalent;
    # the identity preprocessing path is used.
    x = jnp.transpose(x_nchw, (0, 2, 3, 1)).astype(jnp.float32)  # NCHW -> NHWC
    N, H, W, cin = x.shape
    planes = p['w1'].shape[-1]
    assert H % 2 == 0 and W % 2 == 0
    hh, wh = H // 2, W // 2
    cp = pl.cdiv(max(cin, planes), _LANES) * _LANES

    def prep_w(w):
        ci, co = w.shape[2], w.shape[3]
        wp = jnp.zeros((3, 3, cp, cp), jnp.float32).at[:, :, :ci, :co].set(w)
        return wp.reshape(9 * cp, cp).astype(jnp.bfloat16)   # im2col-flat, bf16

    def prep_affine(b, s, t):
        # (conv(x) + b) * s + t  ==  conv(x) * s + (b*s + t)
        scale = jnp.zeros((cp,), jnp.float32).at[:planes].set(s)
        shift = jnp.zeros((cp,), jnp.float32).at[:planes].set(b * s + t)
        return scale, shift

    w1f, w2f, w3f = prep_w(p['w1']), prep_w(p['w2']), prep_w(p['w3'])
    s1, t1 = prep_affine(p['b1'], p['s1'], p['t1'])
    s2, t2 = prep_affine(p['b2'], p['s2'], p['t2'])
    s3, t3 = prep_affine(p['b3'], p['s3'], p['t3'])
    scales = jnp.stack([s1, s2, s3])                         # (3, cp)
    shifts = jnp.stack([t1, t2, t3])                         # (3, cp)

    kern = functools.partial(_basic_block_kernel, full_resblock=(count == 'a'))
    out_nhwc = pl.pallas_call(
        kern,
        out_shape=jax.ShapeDtypeStruct((N, hh, wh, planes), x.dtype),
        grid=(N,),
        in_specs=[
            pl.BlockSpec((None, H, W, cin), lambda n: (n, 0, 0, 0)),
            pl.BlockSpec((9 * cp, cp), lambda n: (0, 0)),
            pl.BlockSpec((9 * cp, cp), lambda n: (0, 0)),
            pl.BlockSpec((9 * cp, cp), lambda n: (0, 0)),
            pl.BlockSpec((3, cp), lambda n: (0, 0)),
            pl.BlockSpec((3, cp), lambda n: (0, 0)),
        ],
        out_specs=pl.BlockSpec((None, hh, wh, planes), lambda n: (n, 0, 0, 0)),
        scratch_shapes=[
            pltpu.VMEM((H + 2, W + 2, cp), jnp.float32),     # padded layer1 input
            pltpu.VMEM((hh + 2, wh + 2, cp), jnp.float32),   # padded resblock input
            pltpu.VMEM((H * W, cp), jnp.float32),            # maxpool staging
        ],
        compiler_params=pltpu.CompilerParams(
            dimension_semantics=("parallel",)),
    )(x, w1f, w2f, w3f, scales, shifts)
    return jnp.transpose(out_nhwc, (0, 3, 1, 2))             # NHWC -> NCHW


# --------------------------- parameters & reference ---------------------------

def _fold_bn(gamma, beta, mean, var, eps=1e-5):
    scale = gamma / jnp.sqrt(var + eps)
    shift = beta - mean * scale
    return scale, shift


def init_params(key, in_planes, planes):
    ks = jax.random.split(key, 9)

    def conv_w(k, ci, co):
        return jax.random.normal(k, (3, 3, ci, co), jnp.float32) / jnp.sqrt(9.0 * ci)

    def bn(k, c):
        k1, k2, k3, k4 = jax.random.split(k, 4)
        gamma = 1.0 + 0.1 * jax.random.normal(k1, (c,), jnp.float32)
        beta = 0.1 * jax.random.normal(k2, (c,), jnp.float32)
        mean = 0.1 * jax.random.normal(k3, (c,), jnp.float32)
        var = jax.random.uniform(k4, (c,), jnp.float32, minval=0.5, maxval=1.5)
        return _fold_bn(gamma, beta, mean, var)

    p = {}
    p['w1'] = conv_w(ks[0], in_planes, planes)
    p['b1'] = 0.01 * jax.random.normal(ks[1], (planes,), jnp.float32)
    p['s1'], p['t1'] = bn(ks[2], planes)
    p['w2'] = conv_w(ks[3], planes, planes)
    p['b2'] = 0.01 * jax.random.normal(ks[4], (planes,), jnp.float32)
    p['s2'], p['t2'] = bn(ks[5], planes)
    p['w3'] = conv_w(ks[6], planes, planes)
    p['b3'] = 0.01 * jax.random.normal(ks[7], (planes,), jnp.float32)
    p['s3'], p['t3'] = bn(ks[8], planes)
    return p


def _reference_forward(x_nchw, p, count='a'):
    """Plain-XLA reference (f32) for a numerical sanity check."""
    x = jnp.transpose(x_nchw, (0, 2, 3, 1)).astype(jnp.float32)

    def conv(z, w, b):
        y = jax.lax.conv_general_dilated(
            z, w, window_strides=(1, 1), padding=((1, 1), (1, 1)),
            dimension_numbers=('NHWC', 'HWIO', 'NHWC'))
        return y + b.reshape(1, 1, 1, -1)

    def bn_relu(y, s, t):
        return jnp.maximum(y * s.reshape(1, 1, 1, -1) + t.reshape(1, 1, 1, -1), 0.0)

    def pool(y):
        n, hq, wq, c = y.shape
        return jnp.max(y.reshape(n, hq // 2, 2, wq // 2, 2, c), axis=(2, 4))

    out = bn_relu(pool(conv(x, p['w1'], p['b1'])), p['s1'], p['t1'])
    if count == 'a':
        h = bn_relu(conv(out, p['w2'], p['b2']), p['s2'], p['t2'])
        res = bn_relu(conv(h, p['w3'], p['b3']), p['s3'], p['t3'])
    else:
        res = out
    return jnp.transpose(res + out, (0, 3, 1, 2))


if __name__ == "__main__":
    key = jax.random.PRNGKey(0)
    kx, kp = jax.random.split(key)

    in_planes, planes = 4, 8
    N, H, W = 2, 16, 16

    x = jax.random.normal(kx, (N, in_planes, H, W), jnp.float32)  # NCHW
    params = init_params(kp, in_planes, planes)

    out = jax.block_until_ready(basic_block_forward(x, params, count='a', pre='n'))

    assert out.shape == (N, planes, H // 2, W // 2), out.shape
    assert bool(jnp.all(jnp.isfinite(out)))

    # Numerical sanity vs plain XLA (bf16 MXU inputs -> loose aggregate tolerance).
    ref = _reference_forward(x, params, count='a')
    rel_err = float(jnp.linalg.norm(out - ref) / (jnp.linalg.norm(ref) + 1e-6))
    assert rel_err < 5e-2, rel_err

    print("KERNEL_OK")
</pallas_src>

<mosaic_0001>
module attributes {stable_mosaic.version = 11 : i64} {
  func.func @_basic_block_kernel(%arg0: i32, %arg1: memref<1x16x16x4xf32, #tpu.memory_space<vmem>>, %arg2: memref<1152x128xbf16, #tpu.memory_space<vmem>>, %arg3: memref<1152x128xbf16, #tpu.memory_space<vmem>>, %arg4: memref<1152x128xbf16, #tpu.memory_space<vmem>>, %arg5: memref<3x128xf32, #tpu.memory_space<vmem>>, %arg6: memref<3x128xf32, #tpu.memory_space<vmem>>, %arg7: memref<1x8x8x8xf32, #tpu.memory_space<vmem>>, %arg8: memref<18x18x128xf32, #tpu.memory_space<vmem>>, %arg9: memref<10x10x128xf32, #tpu.memory_space<vmem>>, %arg10: memref<256x128xf32, #tpu.memory_space<vmem>>) attributes {dimension_semantics = [#tpu.dimension_semantics<parallel>], iteration_bounds = array<i64: 2>, scalar_prefetch = 0 : i64, scratch_operands = 3 : i64, tpu.core_type = #tpu.core_type<tc>, window_params = [{transform_indices = @transform_0, window_bounds = array<i64: 1, 16, 16, 4>}, {pipeline_mode = #tpu.pipeline_mode<synchronous>, transform_indices = @transform_1, window_bounds = array<i64: 1152, 128>}, {pipeline_mode = #tpu.pipeline_mode<synchronous>, transform_indices = @transform_2, window_bounds = array<i64: 1152, 128>}, {pipeline_mode = #tpu.pipeline_mode<synchronous>, transform_indices = @transform_3, window_bounds = array<i64: 1152, 128>}, {pipeline_mode = #tpu.pipeline_mode<synchronous>, transform_indices = @transform_4, window_bounds = array<i64: 3, 128>}, {pipeline_mode = #tpu.pipeline_mode<synchronous>, transform_indices = @transform_5, window_bounds = array<i64: 3, 128>}, {transform_indices = @transform_6, window_bounds = array<i64: 1, 8, 8, 8>}]} {
    %cst = arith.constant 0.000000e+00 : f32
    %0 = vector.broadcast %cst : f32 to vector<18x18x128xf32>
    %c0 = arith.constant 0 : index
    %c0_0 = arith.constant 0 : index
    %c0_1 = arith.constant 0 : index
    %1 = vector.load %arg8[%c0, %c0_0, %c0_1] : memref<18x18x128xf32, #tpu.memory_space<vmem>>, vector<18x18x128xf32>
    tpu.vector_store %arg8[%c0, %c0_0, %c0_1], %0 {strides = array<i32>} : memref<18x18x128xf32, #tpu.memory_space<vmem>>, vector<18x18x128xf32>,
    %cst_2 = arith.constant 0.000000e+00 : f32
    %2 = vector.broadcast %cst_2 : f32 to vector<10x10x128xf32>
    %c0_3 = arith.constant 0 : index
    %c0_4 = arith.constant 0 : index
    %c0_5 = arith.constant 0 : index
    %3 = vector.load %arg9[%c0_3, %c0_4, %c0_5] : memref<10x10x128xf32, #tpu.memory_space<vmem>>, vector<10x10x128xf32>
    tpu.vector_store %arg9[%c0_3, %c0_4, %c0_5], %2 {strides = array<i32>} : memref<10x10x128xf32, #tpu.memory_space<vmem>>, vector<10x10x128xf32>,
    %c0_6 = arith.constant 0 : index
    %c0_7 = arith.constant 0 : index
    %c0_8 = arith.constant 0 : index
    %c0_9 = arith.constant 0 : index
    %4 = vector.load %arg1[%c0_6, %c0_7, %c0_8, %c0_9] : memref<1x16x16x4xf32, #tpu.memory_space<vmem>>, vector<1x16x16x4xf32>
    %5 = vector.shape_cast %4 : vector<1x16x16x4xf32> to vector<16x16x4xf32>
    %c1 = arith.constant 1 : index
    %c1_10 = arith.constant 1 : index
    %c0_11 = arith.constant 0 : index
    %6 = vector.load %arg8[%c1, %c1_10, %c0_11] : memref<18x18x128xf32, #tpu.memory_space<vmem>>, vector<16x16x4xf32>
    tpu.vector_store %arg8[%c1, %c1_10, %c0_11], %5 {strides = array<i32>} : memref<18x18x128xf32, #tpu.memory_space<vmem>>, vector<16x16x4xf32>,
    %c0_12 = arith.constant 0 : index
    %c0_13 = arith.constant 0 : index
    %c0_14 = arith.constant 0 : index
    %7 = vector.load %arg8[%c0_12, %c0_13, %c0_14] : memref<18x18x128xf32, #tpu.memory_space<vmem>>, vector<16x16x128xf32>
    %8 = vector.shape_cast %7 : vector<16x16x128xf32> to vector<256x128xf32>
    %c0_15 = arith.constant 0 : index
    %c1_16 = arith.constant 1 : index
    %c0_17 = arith.constant 0 : index
    %9 = vector.load %arg8[%c0_15, %c1_16, %c0_17] : memref<18x18x128xf32, #tpu.memory_space<vmem>>, vector<16x16x128xf32>
    %10 = vector.shape_cast %9 : vector<16x16x128xf32> to vector<256x128xf32>
    %c0_18 = arith.constant 0 : index
    %c2 = arith.constant 2 : index
    %c0_19 = arith.constant 0 : index
    %11 = vector.load %arg8[%c0_18, %c2, %c0_19] : memref<18x18x128xf32, #tpu.memory_space<vmem>>, vector<16x16x128xf32>
    %12 = vector.shape_cast %11 : vector<16x16x128xf32> to vector<256x128xf32>
    %c1_20 = arith.constant 1 : index
    %c0_21 = arith.constant 0 : index
    %c0_22 = arith.constant 0 : index
    %13 = vector.load %arg8[%c1_20, %c0_21, %c0_22] : memref<18x18x128xf32, #tpu.memory_space<vmem>>, vector<16x16x128xf32>
    %14 = vector.shape_cast %13 : vector<16x16x128xf32> to vector<256x128xf32>
    %c1_23 = arith.constant 1 : index
    %c1_24 = arith.constant 1 : index
    %c0_25 = arith.constant 0 : index
    %15 = vector.load %arg8[%c1_23, %c1_24, %c0_25] : memref<18x18x128xf32, #tpu.memory_space<vmem>>, vector<16x16x128xf32>
    %16 = vector.shape_cast %15 : vector<16x16x128xf32> to vector<256x128xf32>
    %c1_26 = arith.constant 1 : index
    %c2_27 = arith.constant 2 : index
    %c0_28 = arith.constant 0 : index
    %17 = vector.load %arg8[%c1_26, %c2_27, %c0_28] : memref<18x18x128xf32, #tpu.memory_space<vmem>>, vector<16x16x128xf32>
    %18 = vector.shape_cast %17 : vector<16x16x128xf32> to vector<256x128xf32>
    %c2_29 = arith.constant 2 : index
    %c0_30 = arith.constant 0 : index
    %c0_31 = arith.constant 0 : index
    %19 = vector.load %arg8[%c2_29, %c0_30, %c0_31] : memref<18x18x128xf32, #tpu.memory_space<vmem>>, vector<16x16x128xf32>
    %20 = vector.shape_cast %19 : vector<16x16x128xf32> to vector<256x128xf32>
    %c2_32 = arith.constant 2 : index
    %c1_33 = arith.constant 1 : index
    %c0_34 = arith.constant 0 : index
    %21 = vector.load %arg8[%c2_32, %c1_33, %c0_34] : memref<18x18x128xf32, #tpu.memory_space<vmem>>, vector<16x16x128xf32>
    %22 = vector.shape_cast %21 : vector<16x16x128xf32> to vector<256x128xf32>
    %c2_35 = arith.constant 2 : index
    %c2_36 = arith.constant 2 : index
    %c0_37 = arith.constant 0 : index
    %23 = vector.load %arg8[%c2_35, %c2_36, %c0_37] : memref<18x18x128xf32, #tpu.memory_space<vmem>>, vector<16x16x128xf32>
    %24 = vector.shape_cast %23 : vector<16x16x128xf32> to vector<256x128xf32>
    %25 = tpu.concatenate %8, %10, %12, %14, %16, %18, %20, %22, %24 in 1 : vector<256x128xf32>, vector<256x128xf32>, vector<256x128xf32>, vector<256x128xf32>, vector<256x128xf32>, vector<256x128xf32>, vector<256x128xf32>, vector<256x128xf32>, vector<256x128xf32> -> vector<256x1152xf32>
    %26 = arith.truncf %25 : vector<256x1152xf32> to vector<256x1152xbf16>
    %c0_38 = arith.constant 0 : index
    %c0_39 = arith.constant 0 : index
    %27 = vector.load %arg2[%c0_38, %c0_39] : memref<1152x128xbf16, #tpu.memory_space<vmem>>, vector<1152x128xbf16>
    %cst_40 = arith.constant dense<0.000000e+00> : vector<256x128xf32>
    %28 = tpu.matmul %26, %27, %cst_40 {dimension_numbers = #tpu.dot_dimension_numbers<[1], [0], [0], [1], [0, 0, 1, 1], [], []>} : vector<256x1152xbf16>, vector<1152x128xbf16>, vector<256x128xf32> -> vector<256x128xf32>
    %c0_41 = arith.constant 0 : index
    %c0_42 = arith.constant 0 : index
    %29 = vector.load %arg10[%c0_41, %c0_42] : memref<256x128xf32, #tpu.memory_space<vmem>>, vector<256x128xf32>
    tpu.vector_store %arg10[%c0_41, %c0_42], %28 {strides = array<i32>} : memref<256x128xf32, #tpu.memory_space<vmem>>, vector<256x128xf32>,
    %c0_43 = arith.constant 0 : index
    %c0_44 = arith.constant 0 : index
    %30 = tpu.strided_load %arg10[%c0_43, %c0_44] {strides = array<i32: 2, 1>} : memref<256x128xf32, #tpu.memory_space<vmem>>, vector<128x128xf32>
    %c1_45 = arith.constant 1 : index
    %c0_46 = arith.constant 0 : index
    %31 = tpu.strided_load %arg10[%c1_45, %c0_46] {strides = array<i32: 2, 1>} : memref<256x128xf32, #tpu.memory_space<vmem>>, vector<128x128xf32>
    %32 = arith.maximumf %30, %31 : vector<128x128xf32>
    %33 = vector.shape_cast %32 : vector<128x128xf32> to vector<8x2x8x128xf32>
    %34 = vector.extract_strided_slice %33 {offsets = [0, 0, 0, 0], sizes = [8, 1, 8, 128], strides = [1, 1, 1, 1]} : vector<8x2x8x128xf32> to vector<8x1x8x128xf32>
    %35 = vector.shape_cast %34 : vector<8x1x8x128xf32> to vector<8x8x128xf32>
    %36 = vector.extract_strided_slice %33 {offsets = [0, 1, 0, 0], sizes = [8, 1, 8, 128], strides = [1, 1, 1, 1]} : vector<8x2x8x128xf32> to vector<8x1x8x128xf32>
    %37 = vector.shape_cast %36 : vector<8x1x8x128xf32> to vector<8x8x128xf32>
    %38 = arith.maximumf %35, %37 : vector<8x8x128xf32>
    %c0_47 = arith.constant 0 : index
    %c0_48 = arith.constant 0 : index
    %39 = vector.load %arg5[%c0_47, %c0_48] : memref<3x128xf32, #tpu.memory_space<vmem>>, vector<1x128xf32>
    %40 = vector.shape_cast %39 : vector<1x128xf32> to vector<1x1x128xf32>
    %c0_49 = arith.constant 0 : index
    %c0_50 = arith.constant 0 : index
    %41 = vector.load %arg6[%c0_49, %c0_50] : memref<3x128xf32, #tpu.memory_space<vmem>>, vector<1x128xf32>
    %42 = vector.shape_cast %41 : vector<1x128xf32> to vector<1x1x128xf32>
    %43 = vector.broadcast %40 : vector<1x1x128xf32> to vector<8x8x128xf32>
    %44 = arith.mulf %38, %43 : vector<8x8x128xf32>
    %45 = vector.broadcast %42 : vector<1x1x128xf32> to vector<8x8x128xf32>
    %46 = arith.addf %44, %45 : vector<8x8x128xf32>
    %cst_51 = arith.constant 0.000000e+00 : f32
    %47 = vector.broadcast %cst_51 : f32 to vector<8x8x128xf32>
    %48 = arith.maximumf %46, %47 : vector<8x8x128xf32>
    %c1_52 = arith.constant 1 : index
    %c1_53 = arith.constant 1 : index
    %c0_54 = arith.constant 0 : index
    %49 = vector.load %arg9[%c1_52, %c1_53, %c0_54] : memref<10x10x128xf32, #tpu.memory_space<vmem>>, vector<8x8x128xf32>
    tpu.vector_store %arg9[%c1_52, %c1_53, %c0_54], %48 {strides = array<i32>} : memref<10x10x128xf32, #tpu.memory_space<vmem>>, vector<8x8x128xf32>,
    %c0_55 = arith.constant 0 : index
    %c0_56 = arith.constant 0 : index
    %c0_57 = arith.constant 0 : index
    %50 = vector.load %arg9[%c0_55, %c0_56, %c0_57] : memref<10x10x128xf32, #tpu.memory_space<vmem>>, vector<8x8x128xf32>
    %51 = vector.shape_cast %50 : vector<8x8x128xf32> to vector<64x128xf32>
    %c0_58 = arith.constant 0 : index
    %c1_59 = arith.constant 1 : index
    %c0_60 = arith.constant 0 : index
    %52 = vector.load %arg9[%c0_58, %c1_59, %c0_60] : memref<10x10x128xf32, #tpu.memory_space<vmem>>, vector<8x8x128xf32>
    %53 = vector.shape_cast %52 : vector<8x8x128xf32> to vector<64x128xf32>
    %c0_61 = arith.constant 0 : index
    %c2_62 = arith.constant 2 : index
    %c0_63 = arith.constant 0 : index
    %54 = vector.load %arg9[%c0_61, %c2_62, %c0_63] : memref<10x10x128xf32, #tpu.memory_space<vmem>>, vector<8x8x128xf32>
    %55 = vector.shape_cast %54 : vector<8x8x128xf32> to vector<64x128xf32>
    %c1_64 = arith.constant 1 : index
    %c0_65 = arith.constant 0 : index
    %c0_66 = arith.constant 0 : index
    %56 = vector.load %arg9[%c1_64, %c0_65, %c0_66] : memref<10x10x128xf32, #tpu.memory_space<vmem>>, vector<8x8x128xf32>
    %57 = vector.shape_cast %56 : vector<8x8x128xf32> to vector<64x128xf32>
    %c1_67 = arith.constant 1 : index
    %c1_68 = arith.constant 1 : index
    %c0_69 = arith.constant 0 : index
    %58 = vector.load %arg9[%c1_67, %c1_68, %c0_69] : memref<10x10x128xf32, #tpu.memory_space<vmem>>, vector<8x8x128xf32>
    %59 = vector.shape_cast %58 : vector<8x8x128xf32> to vector<64x128xf32>
    %c1_70 = arith.constant 1 : index
    %c2_71 = arith.constant 2 : index
    %c0_72 = arith.constant 0 : index
    %60 = vector.load %arg9[%c1_70, %c2_71, %c0_72] : memref<10x10x128xf32, #tpu.memory_space<vmem>>, vector<8x8x128xf32>
    %61 = vector.shape_cast %60 : vector<8x8x128xf32> to vector<64x128xf32>
    %c2_73 = arith.constant 2 : index
    %c0_74 = arith.constant 0 : index
    %c0_75 = arith.constant 0 : index
    %62 = vector.load %arg9[%c2_73, %c0_74, %c0_75] : memref<10x10x128xf32, #tpu.memory_space<vmem>>, vector<8x8x128xf32>
    %63 = vector.shape_cast %62 : vector<8x8x128xf32> to vector<64x128xf32>
    %c2_76 = arith.constant 2 : index
    %c1_77 = arith.constant 1 : index
    %c0_78 = arith.constant 0 : index
    %64 = vector.load %arg9[%c2_76, %c1_77, %c0_78] : memref<10x10x128xf32, #tpu.memory_space<vmem>>, vector<8x8x128xf32>
    %65 = vector.shape_cast %64 : vector<8x8x128xf32> to vector<64x128xf32>
    %c2_79 = arith.constant 2 : index
    %c2_80 = arith.constant 2 : index
    %c0_81 = arith.constant 0 : index
    %66 = vector.load %arg9[%c2_79, %c2_80, %c0_81] : memref<10x10x128xf32, #tpu.memory_space<vmem>>, vector<8x8x128xf32>
    %67 = vector.shape_cast %66 : vector<8x8x128xf32> to vector<64x128xf32>
    %68 = tpu.concatenate %51, %53, %55, %57, %59, %61, %63, %65, %67 in 1 : vector<64x128xf32>, vector<64x128xf32>, vector<64x128xf32>, vector<64x128xf32>, vector<64x128xf32>, vector<64x128xf32>, vector<64x128xf32>, vector<64x128xf32>, vector<64x128xf32> -> vector<64x1152xf32>
    %69 = arith.truncf %68 : vector<64x1152xf32> to vector<64x1152xbf16>
    %c0_82 = arith.constant 0 : index
    %c0_83 = arith.constant 0 : index
    %70 = vector.load %arg3[%c0_82, %c0_83] : memref<1152x128xbf16, #tpu.memory_space<vmem>>, vector<1152x128xbf16>
    %cst_84 = arith.constant dense<0.000000e+00> : vector<64x128xf32>
    %71 = tpu.matmul %69, %70, %cst_84 {dimension_numbers = #tpu.dot_dimension_numbers<[1], [0], [0], [1], [0, 0, 1, 1], [], []>} : vector<64x1152xbf16>, vector<1152x128xbf16>, vector<64x128xf32> -> vector<64x128xf32>
    %72 = vector.shape_cast %71 : vector<64x128xf32> to vector<8x8x128xf32>
    %c1_85 = arith.constant 1 : index
    %c0_86 = arith.constant 0 : index
    %73 = vector.load %arg5[%c1_85, %c0_86] : memref<3x128xf32, #tpu.memory_space<vmem>>, vector<1x128xf32>
    %74 = vector.shape_cast %73 : vector<1x128xf32> to vector<1x1x128xf32>
    %c1_87 = arith.constant 1 : index
    %c0_88 = arith.constant 0 : index
    %75 = vector.load %arg6[%c1_87, %c0_88] : memref<3x128xf32, #tpu.memory_space<vmem>>, vector<1x128xf32>
    %76 = vector.shape_cast %75 : vector<1x128xf32> to vector<1x1x128xf32>
    %77 = vector.broadcast %74 : vector<1x1x128xf32> to vector<8x8x128xf32>
    %78 = arith.mulf %72, %77 : vector<8x8x128xf32>
    %79 = vector.broadcast %76 : vector<1x1x128xf32> to vector<8x8x128xf32>
    %80 = arith.addf %78, %79 : vector<8x8x128xf32>
    %cst_89 = arith.constant 0.000000e+00 : f32
    %81 = vector.broadcast %cst_89 : f32 to vector<8x8x128xf32>
    %82 = arith.maximumf %80, %81 : vector<8x8x128xf32>
    %c1_90 = arith.constant 1 : index
    %c1_91 = arith.constant 1 : index
    %c0_92 = arith.constant 0 : index
    %83 = vector.load %arg9[%c1_90, %c1_91, %c0_92] : memref<10x10x128xf32, #tpu.memory_space<vmem>>, vector<8x8x128xf32>
    tpu.vector_store %arg9[%c1_90, %c1_91, %c0_92], %82 {strides = array<i32>} : memref<10x10x128xf32, #tpu.memory_space<vmem>>, vector<8x8x128xf32>,
    %c0_93 = arith.constant 0 : index
    %c0_94 = arith.constant 0 : index
    %c0_95 = arith.constant 0 : index
    %84 = vector.load %arg9[%c0_93, %c0_94, %c0_95] : memref<10x10x128xf32, #tpu.memory_space<vmem>>, vector<8x8x128xf32>
    %85 = vector.shape_cast %84 : vector<8x8x128xf32> to vector<64x128xf32>
    %c0_96 = arith.constant 0 : index
    %c1_97 = arith.constant 1 : index
    %c0_98 = arith.constant 0 : index
    %86 = vector.load %arg9[%c0_96, %c1_97, %c0_98] : memref<10x10x128xf32, #tpu.memory_space<vmem>>, vector<8x8x128xf32>
    %87 = vector.shape_cast %86 : vector<8x8x128xf32> to vector<64x128xf32>
    %c0_99 = arith.constant 0 : index
    %c2_100 = arith.constant 2 : index
    %c0_101 = arith.constant 0 : index
    %88 = vector.load %arg9[%c0_99, %c2_100, %c0_101] : memref<10x10x128xf32, #tpu.memory_space<vmem>>, vector<8x8x128xf32>
    %89 = vector.shape_cast %88 : vector<8x8x128xf32> to vector<64x128xf32>
    %c1_102 = arith.constant 1 : index
    %c0_103 = arith.constant 0 : index
    %c0_104 = arith.constant 0 : index
    %90 = vector.load %arg9[%c1_102, %c0_103, %c0_104] : memref<10x10x128xf32, #tpu.memory_space<vmem>>, vector<8x8x128xf32>
    %91 = vector.shape_cast %90 : vector<8x8x128xf32> to vector<64x128xf32>
    %c1_105 = arith.constant 1 : index
    %c1_106 = arith.constant 1 : index
    %c0_107 = arith.constant 0 : index
    %92 = vector.load %arg9[%c1_105, %c1_106, %c0_107] : memref<10x10x128xf32, #tpu.memory_space<vmem>>, vector<8x8x128xf32>
    %93 = vector.shape_cast %92 : vector<8x8x128xf32> to vector<64x128xf32>
    %c1_108 = arith.constant 1 : index
    %c2_109 = arith.constant 2 : index
    %c0_110 = arith.constant 0 : index
    %94 = vector.load %arg9[%c1_108, %c2_109, %c0_110] : memref<10x10x128xf32, #tpu.memory_space<vmem>>, vector<8x8x128xf32>
    %95 = vector.shape_cast %94 : vector<8x8x128xf32> to vector<64x128xf32>
    %c2_111 = arith.constant 2 : index
    %c0_112 = arith.constant 0 : index
    %c0_113 = arith.constant 0 : index
    %96 = vector.load %arg9[%c2_111, %c0_112, %c0_113] : memref<10x10x128xf32, #tpu.memory_space<vmem>>, vector<8x8x128xf32>
    %97 = vector.shape_cast %96 : vector<8x8x128xf32> to vector<64x128xf32>
    %c2_114 = arith.constant 2 : index
    %c1_115 = arith.constant 1 : index
    %c0_116 = arith.constant 0 : index
    %98 = vector.load %arg9[%c2_114, %c1_115, %c0_116] : memref<10x10x128xf32, #tpu.memory_space<vmem>>, vector<8x8x128xf32>
    %99 = vector.shape_cast %98 : vector<8x8x128xf32> to vector<64x128xf32>
    %c2_117 = arith.constant 2 : index
    %c2_118 = arith.constant 2 : index
    %c0_119 = arith.constant 0 : index
    %100 = vector.load %arg9[%c2_117, %c2_118, %c0_119] : memref<10x10x128xf32, #tpu.memory_space<vmem>>, vector<8x8x128xf32>
    %101 = vector.shape_cast %100 : vector<8x8x128xf32> to vector<64x128xf32>
    %102 = tpu.concatenate %85, %87, %89, %91, %93, %95, %97, %99, %101 in 1 : vector<64x128xf32>, vector<64x128xf32>, vector<64x128xf32>, vector<64x128xf32>, vector<64x128xf32>, vector<64x128xf32>, vector<64x128xf32>, vector<64x128xf32>, vector<64x128xf32> -> vector<64x1152xf32>
    %103 = arith.truncf %102 : vector<64x1152xf32> to vector<64x1152xbf16>
    %c0_120 = arith.constant 0 : index
    %c0_121 = arith.constant 0 : index
    %104 = vector.load %arg4[%c0_120, %c0_121] : memref<1152x128xbf16, #tpu.memory_space<vmem>>, vector<1152x128xbf16>
    %cst_122 = arith.constant dense<0.000000e+00> : vector<64x128xf32>
    %105 = tpu.matmul %103, %104, %cst_122 {dimension_numbers = #tpu.dot_dimension_numbers<[1], [0], [0], [1], [0, 0, 1, 1], [], []>} : vector<64x1152xbf16>, vector<1152x128xbf16>, vector<64x128xf32> -> vector<64x128xf32>
    %106 = vector.shape_cast %105 : vector<64x128xf32> to vector<8x8x128xf32>
    %c2_123 = arith.constant 2 : index
    %c0_124 = arith.constant 0 : index
    %107 = vector.load %arg5[%c2_123, %c0_124] : memref<3x128xf32, #tpu.memory_space<vmem>>, vector<1x128xf32>
    %108 = vector.shape_cast %107 : vector<1x128xf32> to vector<1x1x128xf32>
    %c2_125 = arith.constant 2 : index
    %c0_126 = arith.constant 0 : index
    %109 = vector.load %arg6[%c2_125, %c0_126] : memref<3x128xf32, #tpu.memory_space<vmem>>, vector<1x128xf32>
    %110 = vector.shape_cast %109 : vector<1x128xf32> to vector<1x1x128xf32>
    %111 = vector.broadcast %108 : vector<1x1x128xf32> to vector<8x8x128xf32>
    %112 = arith.mulf %106, %111 : vector<8x8x128xf32>
    %113 = vector.broadcast %110 : vector<1x1x128xf32> to vector<8x8x128xf32>
    %114 = arith.addf %112, %113 : vector<8x8x128xf32>
    %cst_127 = arith.constant 0.000000e+00 : f32
    %115 = vector.broadcast %cst_127 : f32 to vector<8x8x128xf32>
    %116 = arith.maximumf %114, %115 : vector<8x8x128xf32>
    %117 = arith.addf %116, %48 : vector<8x8x128xf32>
    %118 = vector.extract_strided_slice %117 {offsets = [0, 0, 0], sizes = [8, 8, 8], strides = [1, 1, 1]} : vector<8x8x128xf32> to vector<8x8x8xf32>
    %c0_128 = arith.constant 0 : index
    %c0_129 = arith.constant 0 : index
    %c0_130 = arith.constant 0 : index
    %c0_131 = arith.constant 0 : index
    %119 = vector.load %arg7[%c0_128, %c0_129, %c0_130, %c0_131] : memref<1x8x8x8xf32, #tpu.memory_space<vmem>>, vector<1x8x8x8xf32>
    %120 = vector.shape_cast %119 : vector<1x8x8x8xf32> to vector<8x8x8xf32>
    %121 = vector.shape_cast %118 : vector<8x8x8xf32> to vector<1x8x8x8xf32>
    tpu.vector_store %arg7[%c0_128, %c0_129, %c0_130, %c0_131], %121 {strides = array<i32>} : memref<1x8x8x8xf32, #tpu.memory_space<vmem>>, vector<1x8x8x8xf32>,
    return
  }
  func.func @transform_0(%arg0: i32) -> (i32, i32, i32, i32) {
    %c0_i32 = arith.constant 0 : i32
    %c0_i32_0 = arith.constant 0 : i32
    %c0_i32_1 = arith.constant 0 : i32
    %c0_i32_2 = arith.constant 0 : i32
    return %arg0, %c0_i32, %c0_i32_0, %c0_i32_1 : i32, i32, i32, i32
  }
  func.func @transform_1(%arg0: i32) -> (i32, i32) {
    %c0_i32 = arith.constant 0 : i32
    %c0_i32_0 = arith.constant 0 : i32
    %c0_i32_1 = arith.constant 0 : i32
    return %c0_i32, %c0_i32_0 : i32, i32
  }
  func.func @transform_2(%arg0: i32) -> (i32, i32) {
    %c0_i32 = arith.constant 0 : i32
    %c0_i32_0 = arith.constant 0 : i32
    %c0_i32_1 = arith.constant 0 : i32
    return %c0_i32, %c0_i32_0 : i32, i32
  }
  func.func @transform_3(%arg0: i32) -> (i32, i32) {
    %c0_i32 = arith.constant 0 : i32
    %c0_i32_0 = arith.constant 0 : i32
    %c0_i32_1 = arith.constant 0 : i32
    return %c0_i32, %c0_i32_0 : i32, i32
  }
  func.func @transform_4(%arg0: i32) -> (i32, i32) {
    %c0_i32 = arith.constant 0 : i32
    %c0_i32_0 = arith.constant 0 : i32
    %c0_i32_1 = arith.constant 0 : i32
    return %c0_i32, %c0_i32_0 : i32, i32
  }
  func.func @transform_5(%arg0: i32) -> (i32, i32) {
    %c0_i32 = arith.constant 0 : i32
    %c0_i32_0 = arith.constant 0 : i32
    %c0_i32_1 = arith.constant 0 : i32
    return %c0_i32, %c0_i32_0 : i32, i32
  }
  func.func @transform_6(%arg0: i32) -> (i32, i32, i32, i32) {
    %c0_i32 = arith.constant 0 : i32
    %c0_i32_0 = arith.constant 0 : i32
    %c0_i32_1 = arith.constant 0 : i32
    %c0_i32_2 = arith.constant 0 : i32
    return %arg0, %c0_i32, %c0_i32_0, %c0_i32_1 : i32, i32, i32, i32
  }
}

</mosaic_0001>

<llo_original>
// kernel: tpu_custom_call.1
$region0: #{tpu_custom_call.1}
  #allocation0 [shape = 'u32[]', space=smem, size = 0x4, offset = 0x4, fixed_abs, tag = 'smem constant byte address 0x4 - core index']
  #allocation1 [shape = 'u32[144,128]{1,0:T(1,128)}', space=vmem, size = 0x12000, scoped, tag = 'internal scratch']
  #allocation2 [shape = 'f32[18,18,128]{2,1,0:T(8,128)}', space=vmem, size = 0x36000, scoped, tag = 'scratch operand']
  #allocation3 [shape = 'f32[10,10,128]{2,1,0:T(8,128)}', space=vmem, size = 0x14000, scoped, tag = 'scratch operand']
  #allocation4 [shape = 'f32[256,128]{1,0:T(8,128)}', space=vmem, size = 0x20000, scoped, tag = 'scratch operand']
  %s0 = inlined_call_operand.vmem [shape: f32[2,16,16,4], index: 0, kind: input, shape index: {}]
  %s1 = inlined_call_operand.vmem [shape: bf16[1152,128], index: 1, kind: input, shape index: {}]
  %s2 = inlined_call_operand.hbm [shape: bf16[1152,128], index: 2, kind: input, shape index: {}]
  %s3 = inlined_call_operand.hbm [shape: bf16[1152,128], index: 3, kind: input, shape index: {}]
  %s4 = inlined_call_operand.vmem [shape: f32[3,128], index: 4, kind: input, shape index: {}]
  %s5 = inlined_call_operand.vmem [shape: f32[3,128], index: 5, kind: input, shape index: {}]
  %s6 = inlined_call_operand.hbm [shape: f32[2,8,8,8], index: 6, kind: output, shape index: {}]
  %s7 = sld [smem:[#allocation0]]
  $region65: #{tpu_custom_call.1} parent=0
    _
  %s9 = ssub.s32 1, %s7
  %s10 = scalar_select 0, %s9, %s7
  $region1: #{tpu_custom_call.1} parent=0
    #allocation5 [shape = 'u8[294912]{0}', space=vmem, size = 0x48000, scoped, tag = 'input window, operand 2, single buffered']
    #allocation6 [shape = 's32[2]{0}', space=sflag, size = 0x8, scoped, tag = 'scoped memory for tpu_custom_call.1']
    #allocation7 [shape = 's32[2]{0}', space=sflag, size = 0x8, scoped, tag = 'scoped memory for tpu_custom_call.1']
    #allocation8 [shape = 'u8[294912]{0}', space=vmem, size = 0x48000, scoped, tag = 'input window, operand 3, single buffered']
    #allocation9 [shape = 's32[1]{0}', space=sflag, size = 0x4, scoped, tag = 'scoped memory for tpu_custom_call.1']
    #allocation10 [shape = 'u8[65536]{0}', space=vmem, size = 0x10000, scoped, tag = 'output window, operand 0']
    %11 = vsyncpa [#allocation6], 0
    %12 = vsyncpa [#allocation9], 0
    %13 = vsyncpa [#allocation7], 0
    %s14 = scalar_lea.sflag [#allocation7], 1
    %15 = vsyncpa %s14, 0
    loop: start=0, step=1, limit=4
    $region2: #{tpu_custom_call.1} parent=1 // loop_pre_header
      _
    $region3: #{tpu_custom_call.1} parent=1 // loop_header
      %s17 = sphi 0, %s21
      %p18 = scmp.ge.s32.totalorder %s17, 4
      %s27 = sphi 0, %s29
      %s30 = sphi 0, %s27
      %s31 = sphi 0, %s30
      %s47 = sphi 0, %s31
      %s51 = sphi 0, %s51
      %s53 = sphi 0, %s51
      %s54 = sphi 0, %s53
      %s68 = sphi 0, %s54
      %s72 = sphi 0, %s72
      %s74 = sphi 0, %s72
      %s75 = sphi 0, %s74
      %s89 = sphi 0, %s75
      %s93 = sphi 0, %s93
      %s95 = sphi 0, %s93
      %s96 = sphi 0, %s95
      %s110 = sphi 0, %s96
      %s114 = sphi 0, %s114
      %s116 = sphi 0, %s114
      %s117 = sphi 0, %s116
      %s131 = sphi 0, %s117
      %s135 = sphi 0, %s135
      %s137 = sphi 0, %s135
      %s138 = sphi 0, %s137
      %s152 = sphi 0, %s138
      %s158 = sphi 0, %s160
      %s161 = sphi 0, %s158
      %s162 = sphi 0, %s161
      %s178 = sphi 0, %s162
    $region4: #{tpu_custom_call.1} parent=1 // loop_header_branch
      %20 = sbr.rel (%p18) target = $region8
    $region5: #{tpu_custom_call.1} parent=1 // loop_body
      %s22 = ssub.s32 %s17, 1
      %s23 = ssub.s32 %s17, 2
      %s24 = sadd.s32 %s17, 1
      %s25 = ssub.s32 %s17, %s24
      %p26 = scmp.eq.s32.totalorder %s25, 0
      %s28 = sadd.s32 %s27, 1
      %s29 = scalar_select %p26, %s27, %s28
      %p32 = pneg %p26
      %p33 = scmp.eq.s32.totalorder %s17, 1
      %p34 = por %p32, %p33
      %p35 = scmp.ne.s32.totalorder %s27, %s30
      %p36 = scmp.eq.s32.totalorder %s17, 0
      %p37 = por %p35, %p36
      %p38 = scmp.ne.s32.totalorder %s27, %s30
      %p39 = scmp.eq.s32.totalorder %s22, 1
      %p40 = por %p38, %p39
      %p41 = scmp.ne.s32.totalorder %s30, %s31
      %p42 = scmp.eq.s32.totalorder %s22, 0
      %p43 = por %p41, %p42
      %p44 = scmp.ne.s32.totalorder %s30, %s31
      %p45 = scmp.eq.s32.totalorder %s23, 1
      %p46 = por %p44, %p45
      %p48 = scmp.ne.s32.totalorder %s31, %s47
      %p49 = scmp.eq.s32.totalorder %s23, 0
      %p50 = por %p48, %p49
      %s52 = sadd.s32 %s51, 1
      %p55 = scmp.eq.s32.totalorder %s17, 1
      %p56 = scmp.ne.s32.totalorder %s51, %s53
      %p57 = scmp.eq.s32.totalorder %s17, 0
      %p58 = por %p56, %p57
      %p59 = scmp.ne.s32.totalorder %s51, %s53
      %p60 = scmp.eq.s32.totalorder %s22, 1
      %p61 = por %p59, %p60
      %p62 = scmp.ne.s32.totalorder %s53, %s54
      %p63 = scmp.eq.s32.totalorder %s22, 0
      %p64 = por %p62, %p63
      %p65 = scmp.ne.s32.totalorder %s53, %s54
      %p66 = scmp.eq.s32.totalorder %s23, 1
      %p67 = por %p65, %p66
      %p69 = scmp.ne.s32.totalorder %s54, %s68
      %p70 = scmp.eq.s32.totalorder %s23, 0
      %p71 = por %p69, %p70
      %s73 = sadd.s32 %s72, 1
      %p76 = scmp.eq.s32.totalorder %s17, 1
      %p77 = scmp.ne.s32.totalorder %s72, %s74
      %p78 = scmp.eq.s32.totalorder %s17, 0
      %p79 = por %p77, %p78
      %p80 = scmp.ne.s32.totalorder %s72, %s74
      %p81 = scmp.eq.s32.totalorder %s22, 1
      %p82 = por %p80, %p81
      %p83 = scmp.ne.s32.totalorder %s74, %s75
      %p84 = scmp.eq.s32.totalorder %s22, 0
      %p85 = por %p83, %p84
      %p86 = scmp.ne.s32.totalorder %s74, %s75
      %p87 = scmp.eq.s32.totalorder %s23, 1
      %p88 = por %p86, %p87
      %p90 = scmp.ne.s32.totalorder %s75, %s89
      %p91 = scmp.eq.s32.totalorder %s23, 0
      %p92 = por %p90, %p91
      %s94 = sadd.s32 %s93, 1
      %p97 = scmp.eq.s32.totalorder %s17, 1
      %p98 = scmp.ne.s32.totalorder %s93, %s95
      %p99 = scmp.eq.s32.totalorder %s17, 0
      %p100 = por %p98, %p99
      %p101 = scmp.ne.s32.totalorder %s93, %s95
      %p102 = scmp.eq.s32.totalorder %s22, 1
      %p103 = por %p101, %p102
      %p104 = scmp.ne.s32.totalorder %s95, %s96
      %p105 = scmp.eq.s32.totalorder %s22, 0
      %p106 = por %p104, %p105
      %p107 = scmp.ne.s32.totalorder %s95, %s96
      %p108 = scmp.eq.s32.totalorder %s23, 1
      %p109 = por %p107, %p108
      %p111 = scmp.ne.s32.totalorder %s96, %s110
      %p112 = scmp.eq.s32.totalorder %s23, 0
      %p113 = por %p111, %p112
      %s115 = sadd.s32 %s114, 1
      %p118 = scmp.eq.s32.totalorder %s17, 1
      %p119 = scmp.ne.s32.totalorder %s114, %s116
      %p120 = scmp.eq.s32.totalorder %s17, 0
      %p121 = por %p119, %p120
      %p122 = scmp.ne.s32.totalorder %s114, %s116
      %p123 = scmp.eq.s32.totalorder %s22, 1
      %p124 = por %p122, %p123
      %p125 = scmp.ne.s32.totalorder %s116, %s117
      %p126 = scmp.eq.s32.totalorder %s22, 0
      %p127 = por %p125, %p126
      %p128 = scmp.ne.s32.totalorder %s116, %s117
      %p129 = scmp.eq.s32.totalorder %s23, 1
      %p130 = por %p128, %p129
      %p132 = scmp.ne.s32.totalorder %s117, %s131
      %p133 = scmp.eq.s32.totalorder %s23, 0
      %p134 = por %p132, %p133
      %s136 = sadd.s32 %s135, 1
      %p139 = scmp.eq.s32.totalorder %s17, 1
      %p140 = scmp.ne.s32.totalorder %s135, %s137
      %p141 = scmp.eq.s32.totalorder %s17, 0
      %p142 = por %p140, %p141
      %p143 = scmp.ne.s32.totalorder %s135, %s137
      %p144 = scmp.eq.s32.totalorder %s22, 1
      %p145 = por %p143, %p144
      %p146 = scmp.ne.s32.totalorder %s137, %s138
      %p147 = scmp.eq.s32.totalorder %s22, 0
      %p148 = por %p146, %p147
      %p149 = scmp.ne.s32.totalorder %s137, %s138
      %p150 = scmp.eq.s32.totalorder %s23, 1
      %p151 = por %p149, %p150
      %p153 = scmp.ne.s32.totalorder %s138, %s152
      %p154 = scmp.eq.s32.totalorder %s23, 0
      %p155 = por %p153, %p154
      %s156 = ssub.s32 %s17, %s24
      %p157 = scmp.eq.s32.totalorder %s156, 0
      %s159 = sadd.s32 %s158, 1
      %s160 = scalar_select %p157, %s158, %s159
      %p163 = pneg %p157
      %p164 = scmp.eq.s32.totalorder %s17, 1
      %p165 = por %p163, %p164
      %p166 = scmp.ne.s32.totalorder %s158, %s161
      %p167 = scmp.eq.s32.totalorder %s17, 0
      %p168 = por %p166, %p167
      %p169 = scmp.ne.s32.totalorder %s158, %s161
      %p170 = scmp.eq.s32.totalorder %s22, 1
      %p171 = por %p169, %p170
      %p172 = scmp.ne.s32.totalorder %s161, %s162
      %p173 = scmp.eq.s32.totalorder %s22, 0
      %p174 = por %p172, %p173
      %p175 = scmp.ne.s32.totalorder %s161, %s162
      %p176 = scmp.eq.s32.totalorder %s23, 1
      %p177 = por %p175, %p176
      %p179 = scmp.ne.s32.totalorder %s162, %s178
      %p180 = scmp.eq.s32.totalorder %s23, 0
      %p181 = por %p179, %p180
      %p182 = scmp.le.s32.totalorder 1, %s17
      %p183 = scmp.lt.s32.totalorder %s17, 3
      %p184 = pnand %p182, %p183
      %p185 = pneg %p184
      // Predicated region
      $region9: #{tpu_custom_call.1} parent=5 // pred_check
        _
      $region10: #{tpu_custom_call.1} parent=5 // pred_check_branch
        %187 = sbr.rel (%p184) target = $region12
      $region11: #{tpu_custom_call.1} parent=5 // pred_region
        %s188 = ssub.s32 %s17, 1
        // Predicated region
        $region13: #{tpu_custom_call.1} parent=11 // pred_check
          %p189 = pneg %p64
        $region14: #{tpu_custom_call.1} parent=11 // pred_check_branch
          %191 = sbr.rel (%p189) target = $region16
        $region15: #{tpu_custom_call.1} parent=11 // pred_region
          _
        $region16: #{tpu_custom_call.1} parent=11 // pred_fallthru
          _
        // Predicated region
        $region17: #{tpu_custom_call.1} parent=11 // pred_check
          %p192 = pneg %p85
        $region18: #{tpu_custom_call.1} parent=11 // pred_check_branch
          %194 = sbr.rel (%p192) target = $region20
        $region19: #{tpu_custom_call.1} parent=11 // pred_region
          %s196 = ssub.s32 9216, 9216
          %197 = vsyncadd [#allocation6], %s196
          %s198 = sshll.u32 [#allocation5], 4
          %s199 = int_to_ptr.vmem [resolvable:$true] %s198
          %204 = dma.hbm_to_vmem [thread:$0]  %s2, 9216, %s199, [#allocation6], 64, 64, 4
        $region20: #{tpu_custom_call.1} parent=11 // pred_fallthru
          _
        // Predicated region
        $region21: #{tpu_custom_call.1} parent=11 // pred_check
          %p205 = pneg %p106
        $region22: #{tpu_custom_call.1} parent=11 // pred_check_branch
          %207 = sbr.rel (%p205) target = $region24
        $region23: #{tpu_custom_call.1} parent=11 // pred_region
          %s209 = ssub.s32 9216, 9216
          %210 = vsyncadd [#allocation9], %s209
          %s211 = sshll.u32 [#allocation8], 4
          %s212 = int_to_ptr.vmem [resolvable:$true] %s211
          %217 = dma.hbm_to_vmem [thread:$0]  %s3, 9216, %s212, [#allocation9], 64, 64, 4
        $region24: #{tpu_custom_call.1} parent=11 // pred_fallthru
          _
        // Predicated region
        $region25: #{tpu_custom_call.1} parent=11 // pred_check
          %p218 = pneg %p127
        $region26: #{tpu_custom_call.1} parent=11 // pred_check_branch
          %220 = sbr.rel (%p218) target = $region28
        $region27: #{tpu_custom_call.1} parent=11 // pred_region
          _
        $region28: #{tpu_custom_call.1} parent=11 // pred_fallthru
          _
        // Predicated region
        $region29: #{tpu_custom_call.1} parent=11 // pred_check
          %p221 = pneg %p148
        $region30: #{tpu_custom_call.1} parent=11 // pred_check_branch
          %223 = sbr.rel (%p221) target = $region32
        $region31: #{tpu_custom_call.1} parent=11 // pred_region
          _
        $region32: #{tpu_custom_call.1} parent=11 // pred_fallthru
          _
      $region12: #{tpu_custom_call.1} parent=5 // pred_fallthru
        _
      %p224 = scmp.lt.s32.totalorder %s17, 2
      // Predicated region
      $region33: #{tpu_custom_call.1} parent=5 // pred_check
        %p225 = pneg %p224
      $region34: #{tpu_custom_call.1} parent=5 // pred_check_branch
        %227 = sbr.rel (%p225) target = $region36
      $region35: #{tpu_custom_call.1} parent=5 // pred_region
        // Predicated region
        $region37: #{tpu_custom_call.1} parent=35 // pred_check
          %p228 = pneg %p37
        $region38: #{tpu_custom_call.1} parent=35 // pred_check_branch
          %230 = sbr.rel (%p228) target = $region40
        $region39: #{tpu_custom_call.1} parent=35 // pred_region
          %p231 = scmp.lt.s32.totalorder %s17, 1
          %s232 = scalar_select %p231, %s17, 1
          %s233 = smul.addr %s232, 32
          %s234 = smul.addr %s233, 8
          %s235 = scalar_lea.vmem %s0, %s234
        $region40: #{tpu_custom_call.1} parent=35 // pred_fallthru
          _
      $region36: #{tpu_custom_call.1} parent=5 // pred_fallthru
        _
      %p236 = scmp.le.s32.totalorder 1, %s17
      %p237 = scmp.lt.s32.totalorder %s17, 3
      %p238 = pnand %p236, %p237
      %p239 = pneg %p238
      // Predicated region
      $region41: #{tpu_custom_call.1} parent=5 // pred_check
        _
      $region42: #{tpu_custom_call.1} parent=5 // pred_check_branch
        %241 = sbr.rel (%p238) target = $region44
      $region43: #{tpu_custom_call.1} parent=5 // pred_region
        %s242 = ssub.s32 %s17, 1
        // Predicated region
        $region45: #{tpu_custom_call.1} parent=43 // pred_check
          %p243 = pneg %p85
        $region46: #{tpu_custom_call.1} parent=43 // pred_check_branch
          %245 = sbr.rel (%p243) target = $region48
        $region47: #{tpu_custom_call.1} parent=43 // pred_region
          %246 = dma.done [#allocation6], 9216
        $region48: #{tpu_custom_call.1} parent=43 // pred_fallthru
          _
        // Predicated region
        $region49: #{tpu_custom_call.1} parent=43 // pred_check
          %p247 = pneg %p106
        $region50: #{tpu_custom_call.1} parent=43 // pred_check_branch
          %249 = sbr.rel (%p247) target = $region52
        $region51: #{tpu_custom_call.1} parent=43 // pred_region
          %250 = dma.done [#allocation9], 9216
        $region52: #{tpu_custom_call.1} parent=43 // pred_fallthru
          _
        %p251 = scmp.lt.s32.totalorder %s22, 1
        %s252 = scalar_select %p251, %s22, 1
        %s253 = smul.addr %s252, 32
        %s254 = smul.addr %s253, 8
        %s255 = scalar_lea.vmem %s0, %s254
        %p256 = pneg %p43
        %p257 = pneg %p40
        %p258 = pneg %p64
        %p259 = pneg %p61
        %p260 = pneg %p85
        %p261 = pneg %p82
        %p262 = pneg %p106
        %p263 = pneg %p103
        %p264 = pneg %p127
        %p265 = pneg %p124
        %p266 = pneg %p148
        %p267 = pneg %p145
        %p268 = pneg %p174
        %p269 = pneg %p171
        %s270 = sand.u32 %s161, 1
        %s271 = scalar_lea.sflag [#allocation7], %s270
        %s272 = sand.u32 %s161, 1
        %s273 = smul.addr %s272, 64
        %s274 = scalar_lea.vmem [#allocation10], %s273
        %p275 = scmp.lt.s32.totalorder %s22, 1
        %s276 = scalar_select %p275, %s22, 1
        %s277 = smul.addr %s276, 32
        %s278 = smul.addr %s277, 8
        %s279 = scalar_lea.vmem %s0, %s278
        %281 = vst [vmem:[#allocation2] sm:$0xff] 0.0
        %282 = vst [vmem:[#allocation2 + $0x8] sm:$0xff] 0.0
        %283 = vst [vmem:[#allocation2 + $0x10] sm:$0x3] 0.0
        %284 = vst [vmem:[#allocation2 + $0x18] sm:$0xff] 0.0
        %285 = vst [vmem:[#allocation2 + $0x20] sm:$0xff] 0.0
        %286 = vst [vmem:[#allocation2 + $0x28] sm:$0x3] 0.0
        %287 = vst [vmem:[#allocation2 + $0x30] sm:$0xff] 0.0
        %288 = vst [vmem:[#allocation2 + $0x38] sm:$0xff] 0.0
        %289 = vst [vmem:[#allocation2 + $0x40] sm:$0x3] 0.0
        %290 = vst [vmem:[#allocation2 + $0x48] sm:$0xff] 0.0
        %291 = vst [vmem:[#allocation2 + $0x50] sm:$0xff] 0.0
        %292 = vst [vmem:[#allocation2 + $0x58] sm:$0x3] 0.0
        %293 = vst [vmem:[#allocation2 + $0x60] sm:$0xff] 0.0
        %294 = vst [vmem:[#allocation2 + $0x68] sm:$0xff] 0.0
        %295 = vst [vmem:[#allocation2 + $0x70] sm:$0x3] 0.0
        %296 = vst [vmem:[#allocation2 + $0x78] sm:$0xff] 0.0
        %297 = vst [vmem:[#allocation2 + $0x80] sm:$0xff] 0.0
        %298 = vst [vmem:[#allocation2 + $0x88] sm:$0x3] 0.0
        %299 = vst [vmem:[#allocation2 + $0x90] sm:$0xff] 0.0
        %300 = vst [vmem:[#allocation2 + $0x98] sm:$0xff] 0.0
        %301 = vst [vmem:[#allocation2 + $0xa0] sm:$0x3] 0.0
        %302 = vst [vmem:[#allocation2 + $0xa8] sm:$0xff] 0.0
        %303 = vst [vmem:[#allocation2 + $0xb0] sm:$0xff] 0.0
        %304 = vst [vmem:[#allocation2 + $0xb8] sm:$0x3] 0.0
        %305 = vst [vmem:[#allocation2 + $0xc0] sm:$0xff] 0.0
        %306 = vst [vmem:[#allocation2 + $0xc8] sm:$0xff] 0.0
        %307 = vst [vmem:[#allocation2 + $0xd0] sm:$0x3] 0.0
        %308 = vst [vmem:[#allocation2 + $0xd8] sm:$0xff] 0.0
        %309 = vst [vmem:[#allocation2 + $0xe0] sm:$0xff] 0.0
        %310 = vst [vmem:[#allocation2 + $0xe8] sm:$0x3] 0.0
        %311 = vst [vmem:[#allocation2 + $0xf0] sm:$0xff] 0.0
        %312 = vst [vmem:[#allocation2 + $0xf8] sm:$0xff] 0.0
        %313 = vst [vmem:[#allocation2 + $0x100] sm:$0x3] 0.0
        %314 = vst [vmem:[#allocation2 + $0x108] sm:$0xff] 0.0
        %315 = vst [vmem:[#allocation2 + $0x110] sm:$0xff] 0.0
        %316 = vst [vmem:[#allocation2 + $0x118] sm:$0x3] 0.0
        %317 = vst [vmem:[#allocation2 + $0x120] sm:$0xff] 0.0
        %318 = vst [vmem:[#allocation2 + $0x128] sm:$0xff] 0.0
        %319 = vst [vmem:[#allocation2 + $0x130] sm:$0x3] 0.0
        %320 = vst [vmem:[#allocation2 + $0x138] sm:$0xff] 0.0
        %321 = vst [vmem:[#allocation2 + $0x140] sm:$0xff] 0.0
        %322 = vst [vmem:[#allocation2 + $0x148] sm:$0x3] 0.0
        %323 = vst [vmem:[#allocation2 + $0x150] sm:$0xff] 0.0
        %324 = vst [vmem:[#allocation2 + $0x158] sm:$0xff] 0.0
        %325 = vst [vmem:[#allocation2 + $0x160] sm:$0x3] 0.0
        %326 = vst [vmem:[#allocation2 + $0x168] sm:$0xff] 0.0
        %327 = vst [vmem:[#allocation2 + $0x170] sm:$0xff] 0.0
        %328 = vst [vmem:[#allocation2 + $0x178] sm:$0x3] 0.0
        %329 = vst [vmem:[#allocation2 + $0x180] sm:$0xff] 0.0
        %330 = vst [vmem:[#allocation2 + $0x188] sm:$0xff] 0.0
        %331 = vst [vmem:[#allocation2 + $0x190] sm:$0x3] 0.0
        %332 = vst [vmem:[#allocation2 + $0x198] sm:$0xff] 0.0
        %333 = vst [vmem:[#allocation2 + $0x1a0] sm:$0xff] 0.0
        %334 = vst [vmem:[#allocation2 + $0x1a8] sm:$0x3] 0.0
        %335 = vst [vmem:[#allocation3] sm:$0xff] 0.0
        %336 = vst [vmem:[#allocation3 + $0x8] sm:$0x3] 0.0
        %337 = vst [vmem:[#allocation3 + $0x10] sm:$0xff] 0.0
        %338 = vst [vmem:[#allocation3 + $0x18] sm:$0x3] 0.0
        %339 = vst [vmem:[#allocation3 + $0x20] sm:$0xff] 0.0
        %340 = vst [vmem:[#allocation3 + $0x28] sm:$0x3] 0.0
        %341 = vst [vmem:[#allocation3 + $0x30] sm:$0xff] 0.0
        %342 = vst [vmem:[#allocation3 + $0x38] sm:$0x3] 0.0
        %343 = vst [vmem:[#allocation3 + $0x40] sm:$0xff] 0.0
        %344 = vst [vmem:[#allocation3 + $0x48] sm:$0x3] 0.0
        %345 = vst [vmem:[#allocation3 + $0x50] sm:$0xff] 0.0
        %346 = vst [vmem:[#allocation3 + $0x58] sm:$0x3] 0.0
        %347 = vst [vmem:[#allocation3 + $0x60] sm:$0xff] 0.0
        %348 = vst [vmem:[#allocation3 + $0x68] sm:$0x3] 0.0
        %349 = vst [vmem:[#allocation3 + $0x70] sm:$0xff] 0.0
        %350 = vst [vmem:[#allocation3 + $0x78] sm:$0x3] 0.0
        %351 = vst [vmem:[#allocation3 + $0x80] sm:$0xff] 0.0
        %352 = vst [vmem:[#allocation3 + $0x88] sm:$0x3] 0.0
        %353 = vst [vmem:[#allocation3 + $0x90] sm:$0xff] 0.0
        %354 = vst [vmem:[#allocation3 + $0x98] sm:$0x3] 0.0
        %v355 = vld [vmem:[%s279] sm:$0xff]
        %v356 = vld [vmem:[%s279 + $0x8] sm:$0xff]
        %v357 = vld [vmem:[%s279 + $0x10] sm:$0xff]
        %v358 = vld [vmem:[%s279 + $0x18] sm:$0xff]
        %v359 = vld [vmem:[%s279 + $0x20] sm:$0xff]
        %v360 = vld [vmem:[%s279 + $0x28] sm:$0xff]
        %v361 = vld [vmem:[%s279 + $0x30] sm:$0xff]
        %v362 = vld [vmem:[%s279 + $0x38] sm:$0xff]
        %v363 = vld [vmem:[%s279 + $0x40] sm:$0xff]
        %v364 = vld [vmem:[%s279 + $0x48] sm:$0xff]
        %v365 = vld [vmem:[%s279 + $0x50] sm:$0xff]
        %v366 = vld [vmem:[%s279 + $0x58] sm:$0xff]
        %v367 = vld [vmem:[%s279 + $0x60] sm:$0xff]
        %v368 = vld [vmem:[%s279 + $0x68] sm:$0xff]
        %v369 = vld [vmem:[%s279 + $0x70] sm:$0xff]
        %v370 = vld [vmem:[%s279 + $0x78] sm:$0xff]
        %v371 = vld [vmem:[%s279 + $0x80] sm:$0xff]
        %v372 = vld [vmem:[%s279 + $0x88] sm:$0xff]
        %v373 = vld [vmem:[%s279 + $0x90] sm:$0xff]
        %v374 = vld [vmem:[%s279 + $0x98] sm:$0xff]
        %v375 = vld [vmem:[%s279 + $0xa0] sm:$0xff]
        %v376 = vld [vmem:[%s279 + $0xa8] sm:$0xff]
        %v377 = vld [vmem:[%s279 + $0xb0] sm:$0xff]
        %v378 = vld [vmem:[%s279 + $0xb8] sm:$0xff]
        %v379 = vld [vmem:[%s279 + $0xc0] sm:$0xff]
        %v380 = vld [vmem:[%s279 + $0xc8] sm:$0xff]
        %v381 = vld [vmem:[%s279 + $0xd0] sm:$0xff]
        %v382 = vld [vmem:[%s279 + $0xd8] sm:$0xff]
        %v383 = vld [vmem:[%s279 + $0xe0] sm:$0xff]
        %v384 = vld [vmem:[%s279 + $0xe8] sm:$0xff]
        %v385 = vld [vmem:[%s279 + $0xf0] sm:$0xff]
        %v386 = vld [vmem:[%s279 + $0xf8] sm:$0xff]
        %s387 = scalar_lea.vmem [#allocation2], 24
        %vm388 = vcmask 31744
        %389 = vst.msk [vmem:[%s387 + $0x1] sm:$0xff] %vm388, %v355
        %390 = vst.msk [vmem:[%s387 + $0x9] sm:$0xff] %vm388, %v356
        %391 = vst.msk [vmem:[%s387 + $0x19] sm:$0xff] %vm388, %v357
        %392 = vst.msk [vmem:[%s387 + $0x21] sm:$0xff] %vm388, %v358
        %393 = vst.msk [vmem:[%s387 + $0x31] sm:$0xff] %vm388, %v359
        %394 = vst.msk [vmem:[%s387 + $0x39] sm:$0xff] %vm388, %v360
        %395 = vst.msk [vmem:[%s387 + $0x49] sm:$0xff] %vm388, %v361
        %396 = vst.msk [vmem:[%s387 + $0x51] sm:$0xff] %vm388, %v362
        %397 = vst.msk [vmem:[%s387 + $0x61] sm:$0xff] %vm388, %v363
        %398 = vst.msk [vmem:[%s387 + $0x69] sm:$0xff] %vm388, %v364
        %399 = vst.msk [vmem:[%s387 + $0x79] sm:$0xff] %vm388, %v365
        %400 = vst.msk [vmem:[%s387 + $0x81] sm:$0xff] %vm388, %v366
        %401 = vst.msk [vmem:[%s387 + $0x91] sm:$0xff] %vm388, %v367
        %402 = vst.msk [vmem:[%s387 + $0x99] sm:$0xff] %vm388, %v368
        %403 = vst.msk [vmem:[%s387 + $0xa9] sm:$0xff] %vm388, %v369
        %404 = vst.msk [vmem:[%s387 + $0xb1] sm:$0xff] %vm388, %v370
        %405 = vst.msk [vmem:[%s387 + $0xc1] sm:$0xff] %vm388, %v371
        %406 = vst.msk [vmem:[%s387 + $0xc9] sm:$0xff] %vm388, %v372
        %407 = vst.msk [vmem:[%s387 + $0xd9] sm:$0xff] %vm388, %v373
        %408 = vst.msk [vmem:[%s387 + $0xe1] sm:$0xff] %vm388, %v374
        %409 = vst.msk [vmem:[%s387 + $0xf1] sm:$0xff] %vm388, %v375
        %410 = vst.msk [vmem:[%s387 + $0xf9] sm:$0xff] %vm388, %v376
        %411 = vst.msk [vmem:[%s387 + $0x109] sm:$0xff] %vm388, %v377
        %412 = vst.msk [vmem:[%s387 + $0x111] sm:$0xff] %vm388, %v378
        %413 = vst.msk [vmem:[%s387 + $0x121] sm:$0xff] %vm388, %v379
        %414 = vst.msk [vmem:[%s387 + $0x129] sm:$0xff] %vm388, %v380
        %415 = vst.msk [vmem:[%s387 + $0x139] sm:$0xff] %vm388, %v381
        %416 = vst.msk [vmem:[%s387 + $0x141] sm:$0xff] %vm388, %v382
        %417 = vst.msk [vmem:[%s387 + $0x151] sm:$0xff] %vm388, %v383
        %418 = vst.msk [vmem:[%s387 + $0x159] sm:$0xff] %vm388, %v384
        %419 = vst.msk [vmem:[%s387 + $0x169] sm:$0xff] %vm388, %v385
        %420 = vst.msk [vmem:[%s387 + $0x171] sm:$0xff] %vm388, %v386
        %v421 = vld [vmem:[#allocation2] sm:$0xff]
        %v422 = vld [vmem:[#allocation2 + $0x8] sm:$0xff]
        %v423 = vld [vmem:[#allocation2 + $0x18] sm:$0xff]
        %v424 = vld [vmem:[#allocation2 + $0x20] sm:$0xff]
        %v425 = vld [vmem:[#allocation2 + $0x30] sm:$0xff]
        %v426 = vld [vmem:[#allocation2 + $0x38] sm:$0xff]
        %v427 = vld [vmem:[#allocation2 + $0x48] sm:$0xff]
        %v428 = vld [vmem:[#allocation2 + $0x50] sm:$0xff]
        %v429 = vld [vmem:[#allocation2 + $0x60] sm:$0xff]
        %v430 = vld [vmem:[#allocation2 + $0x68] sm:$0xff]
        %v431 = vld [vmem:[#allocation2 + $0x78] sm:$0xff]
        %v432 = vld [vmem:[#allocation2 + $0x80] sm:$0xff]
        %v433 = vld [vmem:[#allocation2 + $0x90] sm:$0xff]
        %v434 = vld [vmem:[#allocation2 + $0x98] sm:$0xff]
        %v435 = vld [vmem:[#allocation2 + $0xa8] sm:$0xff]
        %v436 = vld [vmem:[#allocation2 + $0xb0] sm:$0xff]
        %v437 = vld [vmem:[#allocation2 + $0xc0] sm:$0xff]
        %v438 = vld [vmem:[#allocation2 + $0xc8] sm:$0xff]
        %v439 = vld [vmem:[#allocation2 + $0xd8] sm:$0xff]
        %v440 = vld [vmem:[#allocation2 + $0xe0] sm:$0xff]
        %v441 = vld [vmem:[#allocation2 + $0xf0] sm:$0xff]
        %v442 = vld [vmem:[#allocation2 + $0xf8] sm:$0xff]
        %v443 = vld [vmem:[#allocation2 + $0x108] sm:$0xff]
        %v444 = vld [vmem:[#allocation2 + $0x110] sm:$0xff]
        %v445 = vld [vmem:[#allocation2 + $0x120] sm:$0xff]
        %v446 = vld [vmem:[#allocation2 + $0x128] sm:$0xff]
        %v447 = vld [vmem:[#allocation2 + $0x138] sm:$0xff]
        %v448 = vld [vmem:[#allocation2 + $0x140] sm:$0xff]
        %v449 = vld [vmem:[#allocation2 + $0x150] sm:$0xff]
        %v450 = vld [vmem:[#allocation2 + $0x158] sm:$0xff]
        %v451 = vld [vmem:[#allocation2 + $0x168] sm:$0xff]
        %v452 = vld [vmem:[#allocation2 + $0x170] sm:$0xff]
        %v453 = vld [vmem:[#allocation2 + $0x1] sm:$0xff]
        %v454 = vld [vmem:[#allocation2 + $0x9] sm:$0xff]
        %v455 = vld [vmem:[#allocation2 + $0x19] sm:$0xff]
        %v456 = vld [vmem:[#allocation2 + $0x21] sm:$0xff]
        %v457 = vld [vmem:[#allocation2 + $0x31] sm:$0xff]
        %v458 = vld [vmem:[#allocation2 + $0x39] sm:$0xff]
        %v459 = vld [vmem:[#allocation2 + $0x49] sm:$0xff]
        %v460 = vld [vmem:[#allocation2 + $0x51] sm:$0xff]
        %v461 = vld [vmem:[#allocation2 + $0x61] sm:$0xff]
        %v462 = vld [vmem:[#allocation2 + $0x69] sm:$0xff]
        %v463 = vld [vmem:[#allocation2 + $0x79] sm:$0xff]
        %v464 = vld [vmem:[#allocation2 + $0x81] sm:$0xff]
        %v465 = vld [vmem:[#allocation2 + $0x91] sm:$0xff]
        %v466 = vld [vmem:[#allocation2 + $0x99] sm:$0xff]
        %v467 = vld [vmem:[#allocation2 + $0xa9] sm:$0xff]
        %v468 = vld [vmem:[#allocation2 + $0xb1] sm:$0xff]
        %v469 = vld [vmem:[#allocation2 + $0xc1] sm:$0xff]
        %v470 = vld [vmem:[#allocation2 + $0xc9] sm:$0xff]
        %v471 = vld [vmem:[#allocation2 + $0xd9] sm:$0xff]
        %v472 = vld [vmem:[#allocation2 + $0xe1] sm:$0xff]
        %v473 = vld [vmem:[#allocation2 + $0xf1] sm:$0xff]
        %v474 = vld [vmem:[#allocation2 + $0xf9] sm:$0xff]
        %v475 = vld [vmem:[#allocation2 + $0x109] sm:$0xff]
        %v476 = vld [vmem:[#allocation2 + $0x111] sm:$0xff]
        %v477 = vld [vmem:[#allocation2 + $0x121] sm:$0xff]
        %v478 = vld [vmem:[#allocation2 + $0x129] sm:$0xff]
        %v479 = vld [vmem:[#allocation2 + $0x139] sm:$0xff]
        %v480 = vld [vmem:[#allocation2 + $0x141] sm:$0xff]
        %v481 = vld [vmem:[#allocation2 + $0x151] sm:$0xff]
        %v482 = vld [vmem:[#allocation2 + $0x159] sm:$0xff]
        %v483 = vld [vmem:[#allocation2 + $0x169] sm:$0xff]
        %v484 = vld [vmem:[#allocation2 + $0x171] sm:$0xff]
        %v485 = vld [vmem:[#allocation2 + $0x2] sm:$0xff]
        %v486 = vld [vmem:[#allocation2 + $0xa] sm:$0xff]
        %v487 = vld [vmem:[#allocation2 + $0x1a] sm:$0xff]
        %v488 = vld [vmem:[#allocation2 + $0x22] sm:$0xff]
        %v489 = vld [vmem:[#allocation2 + $0x32] sm:$0xff]
        %v490 = vld [vmem:[#allocation2 + $0x3a] sm:$0xff]
        %v491 = vld [vmem:[#allocation2 + $0x4a] sm:$0xff]
        %v492 = vld [vmem:[#allocation2 + $0x52] sm:$0xff]
        %v493 = vld [vmem:[#allocation2 + $0x62] sm:$0xff]
        %v494 = vld [vmem:[#allocation2 + $0x6a] sm:$0xff]
        %v495 = vld [vmem:[#allocation2 + $0x7a] sm:$0xff]
        %v496 = vld [vmem:[#allocation2 + $0x82] sm:$0xff]
        %v497 = vld [vmem:[#allocation2 + $0x92] sm:$0xff]
        %v498 = vld [vmem:[#allocation2 + $0x9a] sm:$0xff]
        %v499 = vld [vmem:[#allocation2 + $0xaa] sm:$0xff]
        %v500 = vld [vmem:[#allocation2 + $0xb2] sm:$0xff]
        %v501 = vld [vmem:[#allocation2 + $0xc2] sm:$0xff]
        %v502 = vld [vmem:[#allocation2 + $0xca] sm:$0xff]
        %v503 = vld [vmem:[#allocation2 + $0xda] sm:$0xff]
        %v504 = vld [vmem:[#allocation2 + $0xe2] sm:$0xff]
        %v505 = vld [vmem:[#allocation2 + $0xf2] sm:$0xff]
        %v506 = vld [vmem:[#allocation2 + $0xfa] sm:$0xff]
        %v507 = vld [vmem:[#allocation2 + $0x10a] sm:$0xff]
        %v508 = vld [vmem:[#allocation2 + $0x112] sm:$0xff]
        %v509 = vld [vmem:[#allocation2 + $0x122] sm:$0xff]
        %v510 = vld [vmem:[#allocation2 + $0x12a] sm:$0xff]
        %v511 = vld [vmem:[#allocation2 + $0x13a] sm:$0xff]
        %v512 = vld [vmem:[#allocation2 + $0x142] sm:$0xff]
        %v513 = vld [vmem:[#allocation2 + $0x152] sm:$0xff]
        %v514 = vld [vmem:[#allocation2 + $0x15a] sm:$0xff]
        %v515 = vld [vmem:[#allocation2 + $0x16a] sm:$0xff]
        %v516 = vld [vmem:[#allocation2 + $0x172] sm:$0xff]
        %v517 = vld [vmem:[%s387] sm:$0xff]
        %v518 = vld [vmem:[%s387 + $0x8] sm:$0xff]
        %v519 = vld [vmem:[%s387 + $0x18] sm:$0xff]
        %v520 = vld [vmem:[%s387 + $0x20] sm:$0xff]
        %v521 = vld [vmem:[%s387 + $0x30] sm:$0xff]
        %v522 = vld [vmem:[%s387 + $0x38] sm:$0xff]
        %v523 = vld [vmem:[%s387 + $0x48] sm:$0xff]
        %v524 = vld [vmem:[%s387 + $0x50] sm:$0xff]
        %v525 = vld [vmem:[%s387 + $0x60] sm:$0xff]
        %v526 = vld [vmem:[%s387 + $0x68] sm:$0xff]
        %v527 = vld [vmem:[%s387 + $0x78] sm:$0xff]
        %v528 = vld [vmem:[%s387 + $0x80] sm:$0xff]
        %v529 = vld [vmem:[%s387 + $0x90] sm:$0xff]
        %v530 = vld [vmem:[%s387 + $0x98] sm:$0xff]
        %v531 = vld [vmem:[%s387 + $0xa8] sm:$0xff]
        %v532 = vld [vmem:[%s387 + $0xb0] sm:$0xff]
        %v533 = vld [vmem:[%s387 + $0xc0] sm:$0xff]
        %v534 = vld [vmem:[%s387 + $0xc8] sm:$0xff]
        %v535 = vld [vmem:[%s387 + $0xd8] sm:$0xff]
        %v536 = vld [vmem:[%s387 + $0xe0] sm:$0xff]
        %v537 = vld [vmem:[%s387 + $0xf0] sm:$0xff]
        %v538 = vld [vmem:[%s387 + $0xf8] sm:$0xff]
        %v539 = vld [vmem:[%s387 + $0x108] sm:$0xff]
        %v540 = vld [vmem:[%s387 + $0x110] sm:$0xff]
        %v541 = vld [vmem:[%s387 + $0x120] sm:$0xff]
        %v542 = vld [vmem:[%s387 + $0x128] sm:$0xff]
        %v543 = vld [vmem:[%s387 + $0x138] sm:$0xff]
        %v544 = vld [vmem:[%s387 + $0x140] sm:$0xff]
        %v545 = vld [vmem:[%s387 + $0x150] sm:$0xff]
        %v546 = vld [vmem:[%s387 + $0x158] sm:$0xff]
        %v547 = vld [vmem:[%s387 + $0x168] sm:$0xff]
        %v548 = vld [vmem:[%s387 + $0x170] sm:$0xff]
        %v549 = vld [vmem:[%s387 + $0x1] sm:$0xff]
        %v550 = vld [vmem:[%s387 + $0x9] sm:$0xff]
        %v551 = vld [vmem:[%s387 + $0x19] sm:$0xff]
        %v552 = vld [vmem:[%s387 + $0x21] sm:$0xff]
        %v553 = vld [vmem:[%s387 + $0x31] sm:$0xff]
        %v554 = vld [vmem:[%s387 + $0x39] sm:$0xff]
        %v555 = vld [vmem:[%s387 + $0x49] sm:$0xff]
        %v556 = vld [vmem:[%s387 + $0x51] sm:$0xff]
        %v557 = vld [vmem:[%s387 + $0x61] sm:$0xff]
        %v558 = vld [vmem:[%s387 + $0x69] sm:$0xff]
        %v559 = vld [vmem:[%s387 + $0x79] sm:$0xff]
        %v560 = vld [vmem:[%s387 + $0x81] sm:$0xff]
        %v561 = vld [vmem:[%s387 + $0x91] sm:$0xff]
        %v562 = vld [vmem:[%s387 + $0x99] sm:$0xff]
        %v563 = vld [vmem:[%s387 + $0xa9] sm:$0xff]
        %v564 = vld [vmem:[%s387 + $0xb1] sm:$0xff]
        %v565 = vld [vmem:[%s387 + $0xc1] sm:$0xff]
        %v566 = vld [vmem:[%s387 + $0xc9] sm:$0xff]
        %v567 = vld [vmem:[%s387 + $0xd9] sm:$0xff]
        %v568 = vld [vmem:[%s387 + $0xe1] sm:$0xff]
        %v569 = vld [vmem:[%s387 + $0xf1] sm:$0xff]
        %v570 = vld [vmem:[%s387 + $0xf9] sm:$0xff]
        %v571 = vld [vmem:[%s387 + $0x109] sm:$0xff]
        %v572 = vld [vmem:[%s387 + $0x111] sm:$0xff]
        %v573 = vld [vmem:[%s387 + $0x121] sm:$0xff]
        %v574 = vld [vmem:[%s387 + $0x129] sm:$0xff]
        %v575 = vld [vmem:[%s387 + $0x139] sm:$0xff]
        %v576 = vld [vmem:[%s387 + $0x141] sm:$0xff]
        %v577 = vld [vmem:[%s387 + $0x151] sm:$0xff]
        %v578 = vld [vmem:[%s387 + $0x159] sm:$0xff]
        %v579 = vld [vmem:[%s387 + $0x169] sm:$0xff]
        %v580 = vld [vmem:[%s387 + $0x171] sm:$0xff]
        %v581 = vld [vmem:[%s387 + $0x2] sm:$0xff]
        %v582 = vld [vmem:[%s387 + $0xa] sm:$0xff]
        %v583 = vld [vmem:[%s387 + $0x1a] sm:$0xff]
        %v584 = vld [vmem:[%s387 + $0x22] sm:$0xff]
        %v585 = vld [vmem:[%s387 + $0x32] sm:$0xff]
        %v586 = vld [vmem:[%s387 + $0x3a] sm:$0xff]
        %v587 = vld [vmem:[%s387 + $0x4a] sm:$0xff]
        %v588 = vld [vmem:[%s387 + $0x52] sm:$0xff]
        %v589 = vld [vmem:[%s387 + $0x62] sm:$0xff]
        %v590 = vld [vmem:[%s387 + $0x6a] sm:$0xff]
        %v591 = vld [vmem:[%s387 + $0x7a] sm:$0xff]
        %v592 = vld [vmem:[%s387 + $0x82] sm:$0xff]
        %v593 = vld [vmem:[%s387 + $0x92] sm:$0xff]
        %v594 = vld [vmem:[%s387 + $0x9a] sm:$0xff]
        %v595 = vld [vmem:[%s387 + $0xaa] sm:$0xff]
        %v596 = vld [vmem:[%s387 + $0xb2] sm:$0xff]
        %v597 = vld [vmem:[%s387 + $0xc2] sm:$0xff]
        %v598 = vld [vmem:[%s387 + $0xca] sm:$0xff]
        %v599 = vld [vmem:[%s387 + $0xda] sm:$0xff]
        %v600 = vld [vmem:[%s387 + $0xe2] sm:$0xff]
        %v601 = vld [vmem:[%s387 + $0xf2] sm:$0xff]
        %v602 = vld [vmem:[%s387 + $0xfa] sm:$0xff]
        %v603 = vld [vmem:[%s387 + $0x10a] sm:$0xff]
        %v604 = vld [vmem:[%s387 + $0x112] sm:$0xff]
        %v605 = vld [vmem:[%s387 + $0x122] sm:$0xff]
        %v606 = vld [vmem:[%s387 + $0x12a] sm:$0xff]
        %v607 = vld [vmem:[%s387 + $0x13a] sm:$0xff]
        %v608 = vld [vmem:[%s387 + $0x142] sm:$0xff]
        %v609 = vld [vmem:[%s387 + $0x152] sm:$0xff]
        %v610 = vld [vmem:[%s387 + $0x15a] sm:$0xff]
        %v611 = vld [vmem:[%s387 + $0x16a] sm:$0xff]
        %v612 = vld [vmem:[%s387 + $0x172] sm:$0xff]
        %s613 = scalar_lea.vmem [#allocation2], 48
        %v614 = vld [vmem:[%s613] sm:$0xff]
        %v615 = vld [vmem:[%s613 + $0x8] sm:$0xff]
        %v616 = vld [vmem:[%s613 + $0x18] sm:$0xff]
        %v617 = vld [vmem:[%s613 + $0x20] sm:$0xff]
        %v618 = vld [vmem:[%s613 + $0x30] sm:$0xff]
        %v619 = vld [vmem:[%s613 + $0x38] sm:$0xff]
        %v620 = vld [vmem:[%s613 + $0x48] sm:$0xff]
        %v621 = vld [vmem:[%s613 + $0x50] sm:$0xff]
        %v622 = vld [vmem:[%s613 + $0x60] sm:$0xff]
        %v623 = vld [vmem:[%s613 + $0x68] sm:$0xff]
        %v624 = vld [vmem:[%s613 + $0x78] sm:$0xff]
        %v625 = vld [vmem:[%s613 + $0x80] sm:$0xff]
        %v626 = vld [vmem:[%s613 + $0x90] sm:$0xff]
        %v627 = vld [vmem:[%s613 + $0x98] sm:$0xff]
        %v628 = vld [vmem:[%s613 + $0xa8] sm:$0xff]
        %v629 = vld [vmem:[%s613 + $0xb0] sm:$0xff]
        %v630 = vld [vmem:[%s613 + $0xc0] sm:$0xff]
        %v631 = vld [vmem:[%s613 + $0xc8] sm:$0xff]
        %v632 = vld [vmem:[%s613 + $0xd8] sm:$0xff]
        %v633 = vld [vmem:[%s613 + $0xe0] sm:$0xff]
        %v634 = vld [vmem:[%s613 + $0xf0] sm:$0xff]
        %v635 = vld [vmem:[%s613 + $0xf8] sm:$0xff]
        %v636 = vld [vmem:[%s613 + $0x108] sm:$0xff]
        %v637 = vld [vmem:[%s613 + $0x110] sm:$0xff]
        %v638 = vld [vmem:[%s613 + $0x120] sm:$0xff]
        %v639 = vld [vmem:[%s613 + $0x128] sm:$0xff]
        %v640 = vld [vmem:[%s613 + $0x138] sm:$0xff]
        %v641 = vld [vmem:[%s613 + $0x140] sm:$0xff]
        %v642 = vld [vmem:[%s613 + $0x150] sm:$0xff]
        %v643 = vld [vmem:[%s613 + $0x158] sm:$0xff]
        %v644 = vld [vmem:[%s613 + $0x168] sm:$0xff]
        %v645 = vld [vmem:[%s613 + $0x170] sm:$0xff]
        %v646 = vld [vmem:[%s613 + $0x1] sm:$0xff]
        %v647 = vld [vmem:[%s613 + $0x9] sm:$0xff]
        %v648 = vld [vmem:[%s613 + $0x19] sm:$0xff]
        %v649 = vld [vmem:[%s613 + $0x21] sm:$0xff]
        %v650 = vld [vmem:[%s613 + $0x31] sm:$0xff]
        %v651 = vld [vmem:[%s613 + $0x39] sm:$0xff]
        %v652 = vld [vmem:[%s613 + $0x49] sm:$0xff]
        %v653 = vld [vmem:[%s613 + $0x51] sm:$0xff]
        %v654 = vld [vmem:[%s613 + $0x61] sm:$0xff]
        %v655 = vld [vmem:[%s613 + $0x69] sm:$0xff]
        %v656 = vld [vmem:[%s613 + $0x79] sm:$0xff]
        %v657 = vld [vmem:[%s613 + $0x81] sm:$0xff]
        %v658 = vld [vmem:[%s613 + $0x91] sm:$0xff]
        %v659 = vld [vmem:[%s613 + $0x99] sm:$0xff]
        %v660 = vld [vmem:[%s613 + $0xa9] sm:$0xff]
        %v661 = vld [vmem:[%s613 + $0xb1] sm:$0xff]
        %v662 = vld [vmem:[%s613 + $0xc1] sm:$0xff]
        %v663 = vld [vmem:[%s613 + $0xc9] sm:$0xff]
        %v664 = vld [vmem:[%s613 + $0xd9] sm:$0xff]
        %v665 = vld [vmem:[%s613 + $0xe1] sm:$0xff]
        %v666 = vld [vmem:[%s613 + $0xf1] sm:$0xff]
        %v667 = vld [vmem:[%s613 + $0xf9] sm:$0xff]
        %v668 = vld [vmem:[%s613 + $0x109] sm:$0xff]
        %v669 = vld [vmem:[%s613 + $0x111] sm:$0xff]
        %v670 = vld [vmem:[%s613 + $0x121] sm:$0xff]
        %v671 = vld [vmem:[%s613 + $0x129] sm:$0xff]
        %v672 = vld [vmem:[%s613 + $0x139] sm:$0xff]
        %v673 = vld [vmem:[%s613 + $0x141] sm:$0xff]
        %v674 = vld [vmem:[%s613 + $0x151] sm:$0xff]
        %v675 = vld [vmem:[%s613 + $0x159] sm:$0xff]
        %v676 = vld [vmem:[%s613 + $0x169] sm:$0xff]
        %v677 = vld [vmem:[%s613 + $0x171] sm:$0xff]
        %v678 = vld [vmem:[%s613 + $0x2] sm:$0xff]
        %v679 = vld [vmem:[%s613 + $0xa] sm:$0xff]
        %v680 = vld [vmem:[%s613 + $0x1a] sm:$0xff]
        %v681 = vld [vmem:[%s613 + $0x22] sm:$0xff]
        %v682 = vld [vmem:[%s613 + $0x32] sm:$0xff]
        %v683 = vld [vmem:[%s613 + $0x3a] sm:$0xff]
        %v684 = vld [vmem:[%s613 + $0x4a] sm:$0xff]
        %v685 = vld [vmem:[%s613 + $0x52] sm:$0xff]
        %v686 = vld [vmem:[%s613 + $0x62] sm:$0xff]
        %v687 = vld [vmem:[%s613 + $0x6a] sm:$0xff]
        %v688 = vld [vmem:[%s613 + $0x7a] sm:$0xff]
        %v689 = vld [vmem:[%s613 + $0x82] sm:$0xff]
        %v690 = vld [vmem:[%s613 + $0x92] sm:$0xff]
        %v691 = vld [vmem:[%s613 + $0x9a] sm:$0xff]
        %v692 = vld [vmem:[%s613 + $0xaa] sm:$0xff]
        %v693 = vld [vmem:[%s613 + $0xb2] sm:$0xff]
        %v694 = vld [vmem:[%s613 + $0xc2] sm:$0xff]
        %v695 = vld [vmem:[%s613 + $0xca] sm:$0xff]
        %v696 = vld [vmem:[%s613 + $0xda] sm:$0xff]
        %v697 = vld [vmem:[%s613 + $0xe2] sm:$0xff]
        %v698 = vld [vmem:[%s613 + $0xf2] sm:$0xff]
        %v699 = vld [vmem:[%s613 + $0xfa] sm:$0xff]
        %v700 = vld [vmem:[%s613 + $0x10a] sm:$0xff]
        %v701 = vld [vmem:[%s613 + $0x112] sm:$0xff]
        %v702 = vld [vmem:[%s613 + $0x122] sm:$0xff]
        %v703 = vld [vmem:[%s613 + $0x12a] sm:$0xff]
        %v704 = vld [vmem:[%s613 + $0x13a] sm:$0xff]
        %v705 = vld [vmem:[%s613 + $0x142] sm:$0xff]
        %v706 = vld [vmem:[%s613 + $0x152] sm:$0xff]
        %v707 = vld [vmem:[%s613 + $0x15a] sm:$0xff]
        %v708 = vld [vmem:[%s613 + $0x16a] sm:$0xff]
        %v709 = vld [vmem:[%s613 + $0x172] sm:$0xff]
        %v710 = vpack.c.bf16 %v422, %v421
        %v711 = vpack.c.bf16 %v454, %v453
        %v712 = vpack.c.bf16 %v486, %v485
        %v713 = vpack.c.bf16 %v518, %v517
        %v714 = vpack.c.bf16 %v550, %v549
        %v715 = vpack.c.bf16 %v582, %v581
        %v716 = vpack.c.bf16 %v615, %v614
        %v717 = vpack.c.bf16 %v647, %v646
        %v718 = vpack.c.bf16 %v679, %v678
        %v719 = vpack.c.bf16 %v424, %v423
        %v720 = vpack.c.bf16 %v456, %v455
        %v721 = vpack.c.bf16 %v488, %v487
        %v722 = vpack.c.bf16 %v520, %v519
        %v723 = vpack.c.bf16 %v552, %v551
        %v724 = vpack.c.bf16 %v584, %v583
        %v725 = vpack.c.bf16 %v617, %v616
        %v726 = vpack.c.bf16 %v649, %v648
        %v727 = vpack.c.bf16 %v681, %v680
        %v728 = vpack.c.bf16 %v426, %v425
        %v729 = vpack.c.bf16 %v458, %v457
        %v730 = vpack.c.bf16 %v490, %v489
        %v731 = vpack.c.bf16 %v522, %v521
        %v732 = vpack.c.bf16 %v554, %v553
        %v733 = vpack.c.bf16 %v586, %v585
        %v734 = vpack.c.bf16 %v619, %v618
        %v735 = vpack.c.bf16 %v651, %v650
        %v736 = vpack.c.bf16 %v683, %v682
        %v737 = vpack.c.bf16 %v428, %v427
        %v738 = vpack.c.bf16 %v460, %v459
        %v739 = vpack.c.bf16 %v492, %v491
        %v740 = vpack.c.bf16 %v524, %v523
        %v741 = vpack.c.bf16 %v556, %v555
        %v742 = vpack.c.bf16 %v588, %v587
        %v743 = vpack.c.bf16 %v621, %v620
        %v744 = vpack.c.bf16 %v653, %v652
        %v745 = vpack.c.bf16 %v685, %v684
        %v746 = vpack.c.bf16 %v430, %v429
        %v747 = vpack.c.bf16 %v462, %v461
        %v748 = vpack.c.bf16 %v494, %v493
        %v749 = vpack.c.bf16 %v526, %v525
        %v750 = vpack.c.bf16 %v558, %v557
        %v751 = vpack.c.bf16 %v590, %v589
        %v752 = vpack.c.bf16 %v623, %v622
        %v753 = vpack.c.bf16 %v655, %v654
        %v754 = vpack.c.bf16 %v687, %v686
        %v755 = vpack.c.bf16 %v432, %v431
        %v756 = vpack.c.bf16 %v464, %v463
        %v757 = vpack.c.bf16 %v496, %v495
        %v758 = vpack.c.bf16 %v528, %v527
        %v759 = vpack.c.bf16 %v560, %v559
        %v760 = vpack.c.bf16 %v592, %v591
        %v761 = vpack.c.bf16 %v625, %v624
        %v762 = vpack.c.bf16 %v657, %v656
        %v763 = vpack.c.bf16 %v689, %v688
        %v764 = vpack.c.bf16 %v434, %v433
        %v765 = vpack.c.bf16 %v466, %v465
        %v766 = vpack.c.bf16 %v498, %v497
        %v767 = vpack.c.bf16 %v530, %v529
        %v768 = vpack.c.bf16 %v562, %v561
        %v769 = vpack.c.bf16 %v594, %v593
        %v770 = vpack.c.bf16 %v627, %v626
        %v771 = vpack.c.bf16 %v659, %v658
        %v772 = vpack.c.bf16 %v691, %v690
        %v773 = vpack.c.bf16 %v436, %v435
        %v774 = vpack.c.bf16 %v468, %v467
        %v775 = vpack.c.bf16 %v500, %v499
        %v776 = vpack.c.bf16 %v532, %v531
        %v777 = vpack.c.bf16 %v564, %v563
        %v778 = vpack.c.bf16 %v596, %v595
        %v779 = vpack.c.bf16 %v629, %v628
        %v780 = vpack.c.bf16 %v661, %v660
        %v781 = vpack.c.bf16 %v693, %v692
        %v782 = vpack.c.bf16 %v438, %v437
        %v783 = vpack.c.bf16 %v470, %v469
        %v784 = vpack.c.bf16 %v502, %v501
        %v785 = vpack.c.bf16 %v534, %v533
        %v786 = vpack.c.bf16 %v566, %v565
        %v787 = vpack.c.bf16 %v598, %v597
        %v788 = vpack.c.bf16 %v631, %v630
        %v789 = vpack.c.bf16 %v663, %v662
        %v790 = vpack.c.bf16 %v695, %v694
        %v791 = vpack.c.bf16 %v440, %v439
        %v792 = vpack.c.bf16 %v472, %v471
        %v793 = vpack.c.bf16 %v504, %v503
        %v794 = vpack.c.bf16 %v536, %v535
        %v795 = vpack.c.bf16 %v568, %v567
        %v796 = vpack.c.bf16 %v600, %v599
        %v797 = vpack.c.bf16 %v633, %v632
        %v798 = vpack.c.bf16 %v665, %v664
        %v799 = vpack.c.bf16 %v697, %v696
        %v800 = vpack.c.bf16 %v442, %v441
        %v801 = vpack.c.bf16 %v474, %v473
        %v802 = vpack.c.bf16 %v506, %v505
        %v803 = vpack.c.bf16 %v538, %v537
        %v804 = vpack.c.bf16 %v570, %v569
        %v805 = vpack.c.bf16 %v602, %v601
        %v806 = vpack.c.bf16 %v635, %v634
        %v807 = vpack.c.bf16 %v667, %v666
        %v808 = vpack.c.bf16 %v699, %v698
        %v809 = vpack.c.bf16 %v444, %v443
        %v810 = vpack.c.bf16 %v476, %v475
        %v811 = vpack.c.bf16 %v508, %v507
        %v812 = vpack.c.bf16 %v540, %v539
        %v813 = vpack.c.bf16 %v572, %v571
        %v814 = vpack.c.bf16 %v604, %v603
        %v815 = vpack.c.bf16 %v637, %v636
        %v816 = vpack.c.bf16 %v669, %v668
        %v817 = vpack.c.bf16 %v701, %v700
        %v818 = vpack.c.bf16 %v446, %v445
        %v819 = vpack.c.bf16 %v478, %v477
        %v820 = vpack.c.bf16 %v510, %v509
        %v821 = vpack.c.bf16 %v542, %v541
        %v822 = vpack.c.bf16 %v574, %v573
        %v823 = vpack.c.bf16 %v606, %v605
        %v824 = vpack.c.bf16 %v639, %v638
        %v825 = vpack.c.bf16 %v671, %v670
        %v826 = vpack.c.bf16 %v703, %v702
        %v827 = vpack.c.bf16 %v448, %v447
        %v828 = vpack.c.bf16 %v480, %v479
        %v829 = vpack.c.bf16 %v512, %v511
        %v830 = vpack.c.bf16 %v544, %v543
        %v831 = vpack.c.bf16 %v576, %v575
        %v832 = vpack.c.bf16 %v608, %v607
        %v833 = vpack.c.bf16 %v641, %v640
        %v834 = vpack.c.bf16 %v673, %v672
        %v835 = vpack.c.bf16 %v705, %v704
        %v836 = vpack.c.bf16 %v450, %v449
        %v837 = vpack.c.bf16 %v482, %v481
        %v838 = vpack.c.bf16 %v514, %v513
        %v839 = vpack.c.bf16 %v546, %v545
        %v840 = vpack.c.bf16 %v578, %v577
        %v841 = vpack.c.bf16 %v610, %v609
        %v842 = vpack.c.bf16 %v643, %v642
        %v843 = vpack.c.bf16 %v675, %v674
        %v844 = vpack.c.bf16 %v707, %v706
        %v845 = vpack.c.bf16 %v452, %v451
        %v846 = vpack.c.bf16 %v484, %v483
        %v847 = vpack.c.bf16 %v516, %v515
        %v848 = vpack.c.bf16 %v548, %v547
        %v849 = vpack.c.bf16 %v580, %v579
        %v850 = vpack.c.bf16 %v612, %v611
        %v851 = vpack.c.bf16 %v645, %v644
        %v852 = vpack.c.bf16 %v677, %v676
        %v853 = vpack.c.bf16 %v709, %v708
        %v854 = vld [vmem:[%s1] sm:$0xf]
        %v855 = vld [vmem:[%s1 + $0x4] sm:$0xf]
        %v856 = vld [vmem:[%s1 + $0x8] sm:$0xf]
        %v857 = vld [vmem:[%s1 + $0xc] sm:$0xf]
        %v858 = vld [vmem:[%s1 + $0x10] sm:$0xf]
        %v859 = vld [vmem:[%s1 + $0x14] sm:$0xf]
        %v860 = vld [vmem:[%s1 + $0x18] sm:$0xf]
        %v861 = vld [vmem:[%s1 + $0x1c] sm:$0xf]
        %v862 = vld [vmem:[%s1 + $0x20] sm:$0xf]
        %v863 = vld [vmem:[%s1 + $0x24] sm:$0xf]
        %v864 = vld [vmem:[%s1 + $0x28] sm:$0xf]
        %v865 = vld [vmem:[%s1 + $0x2c] sm:$0xf]
        %v866 = vld [vmem:[%s1 + $0x30] sm:$0xf]
        %v867 = vld [vmem:[%s1 + $0x34] sm:$0xf]
        %v868 = vld [vmem:[%s1 + $0x38] sm:$0xf]
        %v869 = vld [vmem:[%s1 + $0x3c] sm:$0xf]
        %v870 = vld [vmem:[%s1 + $0x40] sm:$0xf]
        %v871 = vld [vmem:[%s1 + $0x44] sm:$0xf]
        %v872 = vld [vmem:[%s1 + $0x48] sm:$0xf]
        %v873 = vld [vmem:[%s1 + $0x4c] sm:$0xf]
        %v874 = vld [vmem:[%s1 + $0x50] sm:$0xf]
        %v875 = vld [vmem:[%s1 + $0x54] sm:$0xf]
        %v876 = vld [vmem:[%s1 + $0x58] sm:$0xf]
        %v877 = vld [vmem:[%s1 + $0x5c] sm:$0xf]
        %v878 = vld [vmem:[%s1 + $0x60] sm:$0xf]
        %v879 = vld [vmem:[%s1 + $0x64] sm:$0xf]
        %v880 = vld [vmem:[%s1 + $0x68] sm:$0xf]
        %v881 = vld [vmem:[%s1 + $0x6c] sm:$0xf]
        %v882 = vld [vmem:[%s1 + $0x70] sm:$0xf]
        %v883 = vld [vmem:[%s1 + $0x74] sm:$0xf]
        %v884 = vld [vmem:[%s1 + $0x78] sm:$0xf]
        %v885 = vld [vmem:[%s1 + $0x7c] sm:$0xf]
        %v886 = vld [vmem:[%s1 + $0x80] sm:$0xf]
        %v887 = vld [vmem:[%s1 + $0x84] sm:$0xf]
        %v888 = vld [vmem:[%s1 + $0x88] sm:$0xf]
        %v889 = vld [vmem:[%s1 + $0x8c] sm:$0xf]
        %v890 = vld [vmem:[%s1 + $0x90] sm:$0xf]
        %v891 = vld [vmem:[%s1 + $0x94] sm:$0xf]
        %v892 = vld [vmem:[%s1 + $0x98] sm:$0xf]
        %v893 = vld [vmem:[%s1 + $0x9c] sm:$0xf]
        %v894 = vld [vmem:[%s1 + $0xa0] sm:$0xf]
        %v895 = vld [vmem:[%s1 + $0xa4] sm:$0xf]
        %v896 = vld [vmem:[%s1 + $0xa8] sm:$0xf]
        %v897 = vld [vmem:[%s1 + $0xac] sm:$0xf]
        %v898 = vld [vmem:[%s1 + $0xb0] sm:$0xf]
        %v899 = vld [vmem:[%s1 + $0xb4] sm:$0xf]
        %v900 = vld [vmem:[%s1 + $0xb8] sm:$0xf]
        %v901 = vld [vmem:[%s1 + $0xbc] sm:$0xf]
        %v902 = vld [vmem:[%s1 + $0xc0] sm:$0xf]
        %v903 = vld [vmem:[%s1 + $0xc4] sm:$0xf]
        %v904 = vld [vmem:[%s1 + $0xc8] sm:$0xf]
        %v905 = vld [vmem:[%s1 + $0xcc] sm:$0xf]
        %v906 = vld [vmem:[%s1 + $0xd0] sm:$0xf]
        %v907 = vld [vmem:[%s1 + $0xd4] sm:$0xf]
        %v908 = vld [vmem:[%s1 + $0xd8] sm:$0xf]
        %v909 = vld [vmem:[%s1 + $0xdc] sm:$0xf]
        %v910 = vld [vmem:[%s1 + $0xe0] sm:$0xf]
        %v911 = vld [vmem:[%s1 + $0xe4] sm:$0xf]
        %v912 = vld [vmem:[%s1 + $0xe8] sm:$0xf]
        %v913 = vld [vmem:[%s1 + $0xec] sm:$0xf]
        %v914 = vld [vmem:[%s1 + $0xf0] sm:$0xf]
        %v915 = vld [vmem:[%s1 + $0xf4] sm:$0xf]
        %v916 = vld [vmem:[%s1 + $0xf8] sm:$0xf]
        %v917 = vld [vmem:[%s1 + $0xfc] sm:$0xf]
        %v918 = vld [vmem:[%s1 + $0x100] sm:$0xf]
        %v919 = vld [vmem:[%s1 + $0x104] sm:$0xf]
        %v920 = vld [vmem:[%s1 + $0x108] sm:$0xf]
        %v921 = vld [vmem:[%s1 + $0x10c] sm:$0xf]
        %v922 = vld [vmem:[%s1 + $0x110] sm:$0xf]
        %v923 = vld [vmem:[%s1 + $0x114] sm:$0xf]
        %v924 = vld [vmem:[%s1 + $0x118] sm:$0xf]
        %v925 = vld [vmem:[%s1 + $0x11c] sm:$0xf]
        %v926 = vld [vmem:[%s1 + $0x120] sm:$0xf]
        %v927 = vld [vmem:[%s1 + $0x124] sm:$0xf]
        %v928 = vld [vmem:[%s1 + $0x128] sm:$0xf]
        %v929 = vld [vmem:[%s1 + $0x12c] sm:$0xf]
        %v930 = vld [vmem:[%s1 + $0x130] sm:$0xf]
        %v931 = vld [vmem:[%s1 + $0x134] sm:$0xf]
        %v932 = vld [vmem:[%s1 + $0x138] sm:$0xf]
        %v933 = vld [vmem:[%s1 + $0x13c] sm:$0xf]
        %v934 = vld [vmem:[%s1 + $0x140] sm:$0xf]
        %v935 = vld [vmem:[%s1 + $0x144] sm:$0xf]
        %v936 = vld [vmem:[%s1 + $0x148] sm:$0xf]
        %v937 = vld [vmem:[%s1 + $0x14c] sm:$0xf]
        %v938 = vld [vmem:[%s1 + $0x150] sm:$0xf]
        %v939 = vld [vmem:[%s1 + $0x154] sm:$0xf]
        %v940 = vld [vmem:[%s1 + $0x158] sm:$0xf]
        %v941 = vld [vmem:[%s1 + $0x15c] sm:$0xf]
        %v942 = vld [vmem:[%s1 + $0x160] sm:$0xf]
        %v943 = vld [vmem:[%s1 + $0x164] sm:$0xf]
        %v944 = vld [vmem:[%s1 + $0x168] sm:$0xf]
        %v945 = vld [vmem:[%s1 + $0x16c] sm:$0xf]
        %v946 = vld [vmem:[%s1 + $0x170] sm:$0xf]
        %v947 = vld [vmem:[%s1 + $0x174] sm:$0xf]
        %v948 = vld [vmem:[%s1 + $0x178] sm:$0xf]
        %v949 = vld [vmem:[%s1 + $0x17c] sm:$0xf]
        %v950 = vld [vmem:[%s1 + $0x180] sm:$0xf]
        %v951 = vld [vmem:[%s1 + $0x184] sm:$0xf]
        %v952 = vld [vmem:[%s1 + $0x188] sm:$0xf]
        %v953 = vld [vmem:[%s1 + $0x18c] sm:$0xf]
        %v954 = vld [vmem:[%s1 + $0x190] sm:$0xf]
        %v955 = vld [vmem:[%s1 + $0x194] sm:$0xf]
        %v956 = vld [vmem:[%s1 + $0x198] sm:$0xf]
        %v957 = vld [vmem:[%s1 + $0x19c] sm:$0xf]
        %v958 = vld [vmem:[%s1 + $0x1a0] sm:$0xf]
        %v959 = vld [vmem:[%s1 + $0x1a4] sm:$0xf]
        %v960 = vld [vmem:[%s1 + $0x1a8] sm:$0xf]
        %v961 = vld [vmem:[%s1 + $0x1ac] sm:$0xf]
        %v962 = vld [vmem:[%s1 + $0x1b0] sm:$0xf]
        %v963 = vld [vmem:[%s1 + $0x1b4] sm:$0xf]
        %v964 = vld [vmem:[%s1 + $0x1b8] sm:$0xf]
        %v965 = vld [vmem:[%s1 + $0x1bc] sm:$0xf]
        %v966 = vld [vmem:[%s1 + $0x1c0] sm:$0xf]
        %v967 = vld [vmem:[%s1 + $0x1c4] sm:$0xf]
        %v968 = vld [vmem:[%s1 + $0x1c8] sm:$0xf]
        %v969 = vld [vmem:[%s1 + $0x1cc] sm:$0xf]
        %v970 = vld [vmem:[%s1 + $0x1d0] sm:$0xf]
        %v971 = vld [vmem:[%s1 + $0x1d4] sm:$0xf]
        %v972 = vld [vmem:[%s1 + $0x1d8] sm:$0xf]
        %v973 = vld [vmem:[%s1 + $0x1dc] sm:$0xf]
        %v974 = vld [vmem:[%s1 + $0x1e0] sm:$0xf]
        %v975 = vld [vmem:[%s1 + $0x1e4] sm:$0xf]
        %v976 = vld [vmem:[%s1 + $0x1e8] sm:$0xf]
        %v977 = vld [vmem:[%s1 + $0x1ec] sm:$0xf]
        %v978 = vld [vmem:[%s1 + $0x1f0] sm:$0xf]
        %v979 = vld [vmem:[%s1 + $0x1f4] sm:$0xf]
        %v980 = vld [vmem:[%s1 + $0x1f8] sm:$0xf]
        %v981 = vld [vmem:[%s1 + $0x1fc] sm:$0xf]
        %v982 = vld [vmem:[%s1 + $0x200] sm:$0xf]
        %v983 = vld [vmem:[%s1 + $0x204] sm:$0xf]
        %v984 = vld [vmem:[%s1 + $0x208] sm:$0xf]
        %v985 = vld [vmem:[%s1 + $0x20c] sm:$0xf]
        %v986 = vld [vmem:[%s1 + $0x210] sm:$0xf]
        %v987 = vld [vmem:[%s1 + $0x214] sm:$0xf]
        %v988 = vld [vmem:[%s1 + $0x218] sm:$0xf]
        %v989 = vld [vmem:[%s1 + $0x21c] sm:$0xf]
        %v990 = vld [vmem:[%s1 + $0x220] sm:$0xf]
        %v991 = vld [vmem:[%s1 + $0x224] sm:$0xf]
        %v992 = vld [vmem:[%s1 + $0x228] sm:$0xf]
        %v993 = vld [vmem:[%s1 + $0x22c] sm:$0xf]
        %v994 = vld [vmem:[%s1 + $0x230] sm:$0xf]
        %v995 = vld [vmem:[%s1 + $0x234] sm:$0xf]
        %v996 = vld [vmem:[%s1 + $0x238] sm:$0xf]
        %v997 = vld [vmem:[%s1 + $0x23c] sm:$0xf]
        %v1142 = vunpack.c.l.b16 %v854
        %v1143 = vunpack.c.l.b16 %v855
        %v1144 = vunpack.c.l.b16 %v856
        %v1145 = vunpack.c.l.b16 %v857
        %v1146 = vunpack.c.l.b16 %v858
        %v1147 = vunpack.c.l.b16 %v859
        %v1148 = vunpack.c.l.b16 %v860
        %v1149 = vunpack.c.l.b16 %v861
        %v1150 = vunpack.c.l.b16 %v862
        %v1151 = vunpack.c.l.b16 %v863
        %v1152 = vunpack.c.l.b16 %v864
        %v1153 = vunpack.c.l.b16 %v865
        %v1154 = vunpack.c.l.b16 %v866
        %v1155 = vunpack.c.l.b16 %v867
        %v1156 = vunpack.c.l.b16 %v868
        %v1157 = vunpack.c.l.b16 %v869
        %v1158 = vunpack.c.l.b16 %v870
        %v1159 = vunpack.c.l.b16 %v871
        %v1160 = vunpack.c.l.b16 %v872
        %v1161 = vunpack.c.l.b16 %v873
        %v1162 = vunpack.c.l.b16 %v874
        %v1163 = vunpack.c.l.b16 %v875
        %v1164 = vunpack.c.l.b16 %v876
        %v1165 = vunpack.c.l.b16 %v877
        %v1166 = vunpack.c.l.b16 %v878
        %v1167 = vunpack.c.l.b16 %v879
        %v1168 = vunpack.c.l.b16 %v880
        %v1169 = vunpack.c.l.b16 %v881
        %v1170 = vunpack.c.l.b16 %v882
        %v1171 = vunpack.c.l.b16 %v883
        %v1172 = vunpack.c.l.b16 %v884
        %v1173 = vunpack.c.l.b16 %v885
        %v1174 = vunpack.c.l.b16 %v886
        %v1175 = vunpack.c.l.b16 %v887
        %v1176 = vunpack.c.l.b16 %v888
        %v1177 = vunpack.c.l.b16 %v889
        %v1178 = vunpack.c.l.b16 %v890
        %v1179 = vunpack.c.l.b16 %v891
        %v1180 = vunpack.c.l.b16 %v892
        %v1181 = vunpack.c.l.b16 %v893
        %v1182 = vunpack.c.l.b16 %v894
        %v1183 = vunpack.c.l.b16 %v895
        %v1184 = vunpack.c.l.b16 %v896
        %v1185 = vunpack.c.l.b16 %v897
        %v1186 = vunpack.c.l.b16 %v898
        %v1187 = vunpack.c.l.b16 %v899
        %v1188 = vunpack.c.l.b16 %v900
        %v1189 = vunpack.c.l.b16 %v901
        %v1190 = vunpack.c.l.b16 %v902
        %v1191 = vunpack.c.l.b16 %v903
        %v1192 = vunpack.c.l.b16 %v904
        %v1193 = vunpack.c.l.b16 %v905
        %v1194 = vunpack.c.l.b16 %v906
        %v1195 = vunpack.c.l.b16 %v907
        %v1196 = vunpack.c.l.b16 %v908
        %v1197 = vunpack.c.l.b16 %v909
        %v1198 = vunpack.c.l.b16 %v910
        %v1199 = vunpack.c.l.b16 %v911
        %v1200 = vunpack.c.l.b16 %v912
        %v1201 = vunpack.c.l.b16 %v913
        %v1202 = vunpack.c.l.b16 %v914
        %v1203 = vunpack.c.l.b16 %v915
        %v1204 = vunpack.c.l.b16 %v916
        %v1205 = vunpack.c.l.b16 %v917
        %v1206 = vunpack.c.l.b16 %v918
        %v1207 = vunpack.c.l.b16 %v919
        %v1208 = vunpack.c.l.b16 %v920
        %v1209 = vunpack.c.l.b16 %v921
        %v1210 = vunpack.c.l.b16 %v922
        %v1211 = vunpack.c.l.b16 %v923
        %v1212 = vunpack.c.l.b16 %v924
        %v1213 = vunpack.c.l.b16 %v925
        %v1214 = vunpack.c.l.b16 %v926
        %v1215 = vunpack.c.l.b16 %v927
        %v1216 = vunpack.c.l.b16 %v928
        %v1217 = vunpack.c.l.b16 %v929
        %v1218 = vunpack.c.l.b16 %v930
        %v1219 = vunpack.c.l.b16 %v931
        %v1220 = vunpack.c.l.b16 %v932
        %v1221 = vunpack.c.l.b16 %v933
        %v1222 = vunpack.c.l.b16 %v934
        %v1223 = vunpack.c.l.b16 %v935
        %v1224 = vunpack.c.l.b16 %v936
        %v1225 = vunpack.c.l.b16 %v937
        %v1226 = vunpack.c.l.b16 %v938
        %v1227 = vunpack.c.l.b16 %v939
        %v1228 = vunpack.c.l.b16 %v940
        %v1229 = vunpack.c.l.b16 %v941
        %v1230 = vunpack.c.l.b16 %v942
        %v1231 = vunpack.c.l.b16 %v943
        %v1232 = vunpack.c.l.b16 %v944
        %v1233 = vunpack.c.l.b16 %v945
        %v1234 = vunpack.c.l.b16 %v946
        %v1235 = vunpack.c.l.b16 %v947
        %v1236 = vunpack.c.l.b16 %v948
        %v1237 = vunpack.c.l.b16 %v949
        %v1238 = vunpack.c.l.b16 %v950
        %v1239 = vunpack.c.l.b16 %v951
        %v1240 = vunpack.c.l.b16 %v952
        %v1241 = vunpack.c.l.b16 %v953
        %v1242 = vunpack.c.l.b16 %v954
        %v1243 = vunpack.c.l.b16 %v955
        %v1244 = vunpack.c.l.b16 %v956
        %v1245 = vunpack.c.l.b16 %v957
        %v1246 = vunpack.c.l.b16 %v958
        %v1247 = vunpack.c.l.b16 %v959
        %v1248 = vunpack.c.l.b16 %v960
        %v1249 = vunpack.c.l.b16 %v961
        %v1250 = vunpack.c.l.b16 %v962
        %v1251 = vunpack.c.l.b16 %v963
        %v1252 = vunpack.c.l.b16 %v964
        %v1253 = vunpack.c.l.b16 %v965
        %v1254 = vunpack.c.l.b16 %v966
        %v1255 = vunpack.c.l.b16 %v967
        %v1256 = vunpack.c.l.b16 %v968
        %v1257 = vunpack.c.l.b16 %v969
        %v1258 = vunpack.c.l.b16 %v970
        %v1259 = vunpack.c.l.b16 %v971
        %v1260 = vunpack.c.l.b16 %v972
        %v1261 = vunpack.c.l.b16 %v973
        %v1262 = vunpack.c.l.b16 %v974
        %v1263 = vunpack.c.l.b16 %v975
        %v1264 = vunpack.c.l.b16 %v976
        %v1265 = vunpack.c.l.b16 %v977
        %v1266 = vunpack.c.l.b16 %v978
        %v1267 = vunpack.c.l.b16 %v979
        %v1268 = vunpack.c.l.b16 %v980
        %v1269 = vunpack.c.l.b16 %v981
        %v1270 = vunpack.c.l.b16 %v982
        %v1271 = vunpack.c.l.b16 %v983
        %v1272 = vunpack.c.l.b16 %v984
        %v1273 = vunpack.c.l.b16 %v985
        %v1274 = vunpack.c.l.b16 %v986
        %v1275 = vunpack.c.l.b16 %v987
        %v1276 = vunpack.c.l.b16 %v988
        %v1277 = vunpack.c.l.b16 %v989
        %v1278 = vunpack.c.l.b16 %v990
        %v1279 = vunpack.c.l.b16 %v991
        %v1280 = vunpack.c.l.b16 %v992
        %v1281 = vunpack.c.l.b16 %v993
        %v1282 = vunpack.c.l.b16 %v994
        %v1283 = vunpack.c.l.b16 %v995
        %v1284 = vunpack.c.l.b16 %v996
        %v1285 = vunpack.c.l.b16 %v997
        %v1286 = vpack.c.b16 %v1143, %v1142
        %v1287 = vpack.c.b16 %v1145, %v1144
        %v1288 = vpack.c.b16 %v1147, %v1146
        %v1289 = vpack.c.b16 %v1149, %v1148
        %v1290 = vpack.c.b16 %v1151, %v1150
        %v1291 = vpack.c.b16 %v1153, %v1152
        %v1292 = vpack.c.b16 %v1155, %v1154
        %v1293 = vpack.c.b16 %v1157, %v1156
        %v1294 = vpack.c.b16 %v1159, %v1158
        %v1295 = vpack.c.b16 %v1161, %v1160
        %v1296 = vpack.c.b16 %v1163, %v1162
        %v1297 = vpack.c.b16 %v1165, %v1164
        %v1298 = vpack.c.b16 %v1167, %v1166
        %v1299 = vpack.c.b16 %v1169, %v1168
        %v1300 = vpack.c.b16 %v1171, %v1170
        %v1301 = vpack.c.b16 %v1173, %v1172
        %v1302 = vpack.c.b16 %v1175, %v1174
        %v1303 = vpack.c.b16 %v1177, %v1176
        %v1304 = vpack.c.b16 %v1179, %v1178
        %v1305 = vpack.c.b16 %v1181, %v1180
        %v1306 = vpack.c.b16 %v1183, %v1182
        %v1307 = vpack.c.b16 %v1185, %v1184
        %v1308 = vpack.c.b16 %v1187, %v1186
        %v1309 = vpack.c.b16 %v1189, %v1188
        %v1310 = vpack.c.b16 %v1191, %v1190
        %v1311 = vpack.c.b16 %v1193, %v1192
        %v1312 = vpack.c.b16 %v1195, %v1194
        %v1313 = vpack.c.b16 %v1197, %v1196
        %v1314 = vpack.c.b16 %v1199, %v1198
        %v1315 = vpack.c.b16 %v1201, %v1200
        %v1316 = vpack.c.b16 %v1203, %v1202
        %v1317 = vpack.c.b16 %v1205, %v1204
        %v1318 = vpack.c.b16 %v1207, %v1206
        %v1319 = vpack.c.b16 %v1209, %v1208
        %v1320 = vpack.c.b16 %v1211, %v1210
        %v1321 = vpack.c.b16 %v1213, %v1212
        %v1322 = vpack.c.b16 %v1215, %v1214
        %v1323 = vpack.c.b16 %v1217, %v1216
        %v1324 = vpack.c.b16 %v1219, %v1218
        %v1325 = vpack.c.b16 %v1221, %v1220
        %v1326 = vpack.c.b16 %v1223, %v1222
        %v1327 = vpack.c.b16 %v1225, %v1224
        %v1328 = vpack.c.b16 %v1227, %v1226
        %v1329 = vpack.c.b16 %v1229, %v1228
        %v1330 = vpack.c.b16 %v1231, %v1230
        %v1331 = vpack.c.b16 %v1233, %v1232
        %v1332 = vpack.c.b16 %v1235, %v1234
        %v1333 = vpack.c.b16 %v1237, %v1236
        %v1334 = vpack.c.b16 %v1239, %v1238
        %v1335 = vpack.c.b16 %v1241, %v1240
        %v1336 = vpack.c.b16 %v1243, %v1242
        %v1337 = vpack.c.b16 %v1245, %v1244
        %v1338 = vpack.c.b16 %v1247, %v1246
        %v1339 = vpack.c.b16 %v1249, %v1248
        %v1340 = vpack.c.b16 %v1251, %v1250
        %v1341 = vpack.c.b16 %v1253, %v1252
        %v1342 = vpack.c.b16 %v1255, %v1254
        %v1343 = vpack.c.b16 %v1257, %v1256
        %v1344 = vpack.c.b16 %v1259, %v1258
        %v1345 = vpack.c.b16 %v1261, %v1260
        %v1346 = vpack.c.b16 %v1263, %v1262
        %v1347 = vpack.c.b16 %v1265, %v1264
        %v1348 = vpack.c.b16 %v1267, %v1266
        %v1349 = vpack.c.b16 %v1269, %v1268
        %v1350 = vpack.c.b16 %v1271, %v1270
        %v1351 = vpack.c.b16 %v1273, %v1272
        %v1352 = vpack.c.b16 %v1275, %v1274
        %v1353 = vpack.c.b16 %v1277, %v1276
        %v1354 = vpack.c.b16 %v1279, %v1278
        %v1355 = vpack.c.b16 %v1281, %v1280
        %v1356 = vpack.c.b16 %v1283, %v1282
        %v1357 = vpack.c.b16 %v1285, %v1284
        %1430 = vmatprep.subr.bf16.mxu0 0
        %1431 = vmatpush1.bf16.msra.mxu0 %v1286
        %1432 = vmatprep.subr.bf16.mxu0 0
        %1433 = vmatpush1.bf16.msra.mxu0 %v1287
        %1434 = vmatprep.subr.bf16.mxu0 0
        %1435 = vmatpush1.bf16.msra.mxu0 %v1288
        %1436 = vmatprep.subr.bf16.mxu0 0
        %1437 = vmatpush1.bf16.msra.mxu0 %v1289
        %1438 = vmatprep.subr.bf16.mxu0 0
        %1439 = vmatpush1.bf16.msra.mxu0 %v1290
        %1440 = vmatprep.subr.bf16.mxu0 0
        %1441 = vmatpush1.bf16.msra.mxu0 %v1291
        %1442 = vmatprep.subr.bf16.mxu0 0
        %1443 = vmatpush1.bf16.msra.mxu0 %v1292
        %1444 = vmatprep.subr.bf16.mxu0 0
        %1445 = vmatpush1.bf16.msra.mxu0 %v1293
        %1446 = vmatprep.subr.bf16.mxu0 0
        %1447 = vmatpush1.bf16.msra.mxu0 %v1294
        %1448 = vmatprep.subr.bf16.mxu0 0
        %1449 = vmatpush1.bf16.msra.mxu0 %v1295
        %1450 = vmatprep.subr.bf16.mxu0 0
        %1451 = vmatpush1.bf16.msra.mxu0 %v1296
        %1452 = vmatprep.subr.bf16.mxu0 0
        %1453 = vmatpush1.bf16.msra.mxu0 %v1297
        %1454 = vmatprep.subr.bf16.mxu0 0
        %1455 = vmatpush1.bf16.msra.mxu0 %v1298
        %1456 = vmatprep.subr.bf16.mxu0 0
        %1457 = vmatpush1.bf16.msra.mxu0 %v1299
        %1458 = vmatprep.subr.bf16.mxu0 0
        %1459 = vmatpush1.bf16.msra.mxu0 %v1300
        %1460 = vmatprep.subr.bf16.mxu0 0
        %1461 = vmatpush1.bf16.msra.mxu0 %v1301
        %1462 = vmatprep.mubr.bf16.mxu0 %v711
        %1463 = vmatmul.mubr.bf16.gmra.mrb[0].mxu0 %v710
        %v1464 = vpop.f32.mrb[0].mxu0
        %v1465 = vadd.f32 0.0, %v1464
        %v1466 = vpop.f32.mrb[0].mxu0
        %v1467 = vpop.f32.mrb[0].mxu0
        %v1468 = vadd.f32 0.0, %v1467
        %v1469 = vpop.f32.mrb[0].mxu0
        %1470 = vmatprep.mubr.bf16.mxu0 %v720
        %1471 = vmatmul.mubr.bf16.gmra.mrb[0].mxu0 %v719
        %v1472 = vpop.f32.mrb[0].mxu0
        %v1473 = vadd.f32 0.0, %v1472
        %v1474 = vpop.f32.mrb[0].mxu0
        %v1475 = vpop.f32.mrb[0].mxu0
        %v1476 = vadd.f32 0.0, %v1475
        %v1477 = vpop.f32.mrb[0].mxu0
        %1478 = vmatprep.mubr.bf16.mxu0 %v729
        %1479 = vmatmul.mubr.bf16.gmra.mrb[0].mxu0 %v728
        %v1480 = vpop.f32.mrb[0].mxu0
        %v1481 = vadd.f32 0.0, %v1480
        %v1482 = vpop.f32.mrb[0].mxu0
        %v1483 = vpop.f32.mrb[0].mxu0
        %v1484 = vadd.f32 0.0, %v1483
        %v1485 = vpop.f32.mrb[0].mxu0
        %1486 = vmatprep.mubr.bf16.mxu0 %v738
        %1487 = vmatmul.mubr.bf16.gmra.mrb[0].mxu0 %v737
        %v1488 = vpop.f32.mrb[0].mxu0
        %v1489 = vadd.f32 0.0, %v1488
        %v1490 = vpop.f32.mrb[0].mxu0
        %v1491 = vpop.f32.mrb[0].mxu0
        %v1492 = vadd.f32 0.0, %v1491
        %v1493 = vpop.f32.mrb[0].mxu0
        %1494 = vmatprep.mubr.bf16.mxu0 %v747
        %1495 = vmatmul.mubr.bf16.gmra.mrb[0].mxu0 %v746
        %v1496 = vpop.f32.mrb[0].mxu0
        %v1497 = vadd.f32 0.0, %v1496
        %v1498 = vpop.f32.mrb[0].mxu0
        %v1499 = vpop.f32.mrb[0].mxu0
        %v1500 = vadd.f32 0.0, %v1499
        %v1501 = vpop.f32.mrb[0].mxu0
        %1502 = vmatprep.mubr.bf16.mxu0 %v756
        %1503 = vmatmul.mubr.bf16.gmra.mrb[0].mxu0 %v755
        %v1504 = vpop.f32.mrb[0].mxu0
        %v1505 = vadd.f32 0.0, %v1504
        %v1506 = vpop.f32.mrb[0].mxu0
        %v1507 = vpop.f32.mrb[0].mxu0
        %v1508 = vadd.f32 0.0, %v1507
        %v1509 = vpop.f32.mrb[0].mxu0
        %1510 = vmatprep.mubr.bf16.mxu0 %v765
        %1511 = vmatmul.mubr.bf16.gmra.mrb[0].mxu0 %v764
        %v1512 = vpop.f32.mrb[0].mxu0
        %v1513 = vadd.f32 0.0, %v1512
        %v1514 = vpop.f32.mrb[0].mxu0
        %v1515 = vpop.f32.mrb[0].mxu0
        %v1516 = vadd.f32 0.0, %v1515
        %v1517 = vpop.f32.mrb[0].mxu0
        %1518 = vmatprep.mubr.bf16.mxu0 %v774
        %1519 = vmatmul.mubr.bf16.gmra.mrb[0].mxu0 %v773
        %v1520 = vpop.f32.mrb[0].mxu0
        %v1521 = vadd.f32 0.0, %v1520
        %v1522 = vpop.f32.mrb[0].mxu0
        %v1523 = vpop.f32.mrb[0].mxu0
        %v1524 = vadd.f32 0.0, %v1523
        %v1525 = vpop.f32.mrb[0].mxu0
        %1526 = vmatprep.mubr.bf16.mxu0 %v783
        %1527 = vmatmul.mubr.bf16.gmra.mrb[0].mxu0 %v782
        %v1528 = vpop.f32.mrb[0].mxu0
        %v1529 = vadd.f32 0.0, %v1528
        %v1530 = vpop.f32.mrb[0].mxu0
        %v1531 = vpop.f32.mrb[0].mxu0
        %v1532 = vadd.f32 0.0, %v1531
        %v1533 = vpop.f32.mrb[0].mxu0
        %1534 = vmatprep.mubr.bf16.mxu0 %v792
        %1535 = vmatmul.mubr.bf16.gmra.mrb[0].mxu0 %v791
        %v1536 = vpop.f32.mrb[0].mxu0
        %v1537 = vadd.f32 0.0, %v1536
        %v1538 = vpop.f32.mrb[0].mxu0
        %v1539 = vpop.f32.mrb[0].mxu0
        %v1540 = vadd.f32 0.0, %v1539
        %v1541 = vpop.f32.mrb[0].mxu0
        %1542 = vmatprep.mubr.bf16.mxu0 %v801
        %1543 = vmatmul.mubr.bf16.gmra.mrb[0].mxu0 %v800
        %v1544 = vpop.f32.mrb[0].mxu0
        %v1545 = vadd.f32 0.0, %v1544
        %v1546 = vpop.f32.mrb[0].mxu0
        %v1547 = vpop.f32.mrb[0].mxu0
        %v1548 = vadd.f32 0.0, %v1547
        %v1549 = vpop.f32.mrb[0].mxu0
        %1550 = vmatprep.mubr.bf16.mxu0 %v810
        %1551 = vmatmul.mubr.bf16.gmra.mrb[0].mxu0 %v809
        %v1552 = vpop.f32.mrb[0].mxu0
        %v1553 = vadd.f32 0.0, %v1552
        %v1554 = vpop.f32.mrb[0].mxu0
        %v1555 = vpop.f32.mrb[0].mxu0
        %v1556 = vadd.f32 0.0, %v1555
        %v1557 = vpop.f32.mrb[0].mxu0
        %1558 = vmatprep.mubr.bf16.mxu0 %v819
        %1559 = vmatmul.mubr.bf16.gmra.mrb[0].mxu0 %v818
        %v1560 = vpop.f32.mrb[0].mxu0
        %v1561 = vadd.f32 0.0, %v1560
        %v1562 = vpop.f32.mrb[0].mxu0
        %v1563 = vpop.f32.mrb[0].mxu0
        %v1564 = vadd.f32 0.0, %v1563
        %v1565 = vpop.f32.mrb[0].mxu0
        %1566 = vmatprep.mubr.bf16.mxu0 %v828
        %1567 = vmatmul.mubr.bf16.gmra.mrb[0].mxu0 %v827
        %v1568 = vpop.f32.mrb[0].mxu0
        %v1569 = vadd.f32 0.0, %v1568
        %v1570 = vpop.f32.mrb[0].mxu0
        %v1571 = vpop.f32.mrb[0].mxu0
        %v1572 = vadd.f32 0.0, %v1571
        %v1573 = vpop.f32.mrb[0].mxu0
        %1574 = vmatprep.mubr.bf16.mxu0 %v837
        %1575 = vmatmul.mubr.bf16.gmra.mrb[0].mxu0 %v836
        %v1576 = vpop.f32.mrb[0].mxu0
        %v1577 = vadd.f32 0.0, %v1576
        %v1578 = vpop.f32.mrb[0].mxu0
        %v1579 = vpop.f32.mrb[0].mxu0
        %v1580 = vadd.f32 0.0, %v1579
        %v1581 = vpop.f32.mrb[0].mxu0
        %1582 = vmatprep.mubr.bf16.mxu0 %v846
        %1583 = vmatmul.mubr.bf16.gmra.mrb[0].mxu0 %v845
        %v1584 = vpop.f32.mrb[0].mxu0
        %v1585 = vadd.f32 0.0, %v1584
        %v1586 = vpop.f32.mrb[0].mxu0
        %v1587 = vpop.f32.mrb[0].mxu0
        %v1588 = vadd.f32 0.0, %v1587
        %v1589 = vpop.f32.mrb[0].mxu0
        %1590 = vdwg.mxu0
        %1591 = vmatprep.subr.bf16.mxu0 0
        %1592 = vmatpush1.bf16.msra.mxu0 %v1302
        %1593 = vmatprep.subr.bf16.mxu0 0
        %1594 = vmatpush1.bf16.msra.mxu0 %v1303
        %1595 = vmatprep.subr.bf16.mxu0 0
        %1596 = vmatpush1.bf16.msra.mxu0 %v1304
        %1597 = vmatprep.subr.bf16.mxu0 0
        %1598 = vmatpush1.bf16.msra.mxu0 %v1305
        %1599 = vmatprep.subr.bf16.mxu0 0
        %1600 = vmatpush1.bf16.msra.mxu0 %v1306
        %1601 = vmatprep.subr.bf16.mxu0 0
        %1602 = vmatpush1.bf16.msra.mxu0 %v1307
        %1603 = vmatprep.subr.bf16.mxu0 0
        %1604 = vmatpush1.bf16.msra.mxu0 %v1308
        %1605 = vmatprep.subr.bf16.mxu0 0
        %1606 = vmatpush1.bf16.msra.mxu0 %v1309
        %1607 = vmatprep.subr.bf16.mxu0 0
        %1608 = vmatpush1.bf16.msra.mxu0 %v1310
        %1609 = vmatprep.subr.bf16.mxu0 0
        %1610 = vmatpush1.bf16.msra.mxu0 %v1311
        %1611 = vmatprep.subr.bf16.mxu0 0
        %1612 = vmatpush1.bf16.msra.mxu0 %v1312
        %1613 = vmatprep.subr.bf16.mxu0 0
        %1614 = vmatpush1.bf16.msra.mxu0 %v1313
        %1615 = vmatprep.subr.bf16.mxu0 0
        %1616 = vmatpush1.bf16.msra.mxu0 %v1314
        %1617 = vmatprep.subr.bf16.mxu0 0
        %1618 = vmatpush1.bf16.msra.mxu0 %v1315
        %1619 = vmatprep.subr.bf16.mxu0 0
        %1620 = vmatpush1.bf16.msra.mxu0 %v1316
        %1621 = vmatprep.subr.bf16.mxu0 0
        %1622 = vmatpush1.bf16.msra.mxu0 %v1317
        %1623 = vmatprep.mubr.bf16.mxu0 %v713
        %1624 = vmatmul.mubr.bf16.gmra.mrb[0].mxu0 %v712
        %v1625 = vpop.f32.mrb[0].mxu0
        %v1626 = vadd.f32 %v1465, %v1625
        %v1627 = vpop.f32.mrb[0].mxu0
        %v1628 = vpop.f32.mrb[0].mxu0
        %v1629 = vadd.f32 %v1468, %v1628
        %v1630 = vpop.f32.mrb[0].mxu0
        %1631 = vmatprep.mubr.bf16.mxu0 %v722
        %1632 = vmatmul.mubr.bf16.gmra.mrb[0].mxu0 %v721
        %v1633 = vpop.f32.mrb[0].mxu0
        %v1634 = vadd.f32 %v1473, %v1633
        %v1635 = vpop.f32.mrb[0].mxu0
        %v1636 = vpop.f32.mrb[0].mxu0
        %v1637 = vadd.f32 %v1476, %v1636
        %v1638 = vpop.f32.mrb[0].mxu0
        %1639 = vmatprep.mubr.bf16.mxu0 %v731
        %1640 = vmatmul.mubr.bf16.gmra.mrb[0].mxu0 %v730
        %v1641 = vpop.f32.mrb[0].mxu0
        %v1642 = vadd.f32 %v1481, %v1641
        %v1643 = vpop.f32.mrb[0].mxu0
        %v1644 = vpop.f32.mrb[0].mxu0
        %v1645 = vadd.f32 %v1484, %v1644
        %v1646 = vpop.f32.mrb[0].mxu0
        %1647 = vmatprep.mubr.bf16.mxu0 %v740
        %1648 = vmatmul.mubr.bf16.gmra.mrb[0].mxu0 %v739
        %v1649 = vpop.f32.mrb[0].mxu0
        %v1650 = vadd.f32 %v1489, %v1649
        %v1651 = vpop.f32.mrb[0].mxu0
        %v1652 = vpop.f32.mrb[0].mxu0
        %v1653 = vadd.f32 %v1492, %v1652
        %v1654 = vpop.f32.mrb[0].mxu0
        %1655 = vmatprep.mubr.bf16.mxu0 %v749
        %1656 = vmatmul.mubr.bf16.gmra.mrb[0].mxu0 %v748
        %v1657 = vpop.f32.mrb[0].mxu0
        %v1658 = vadd.f32 %v1497, %v1657
        %v1659 = vpop.f32.mrb[0].mxu0
        %v1660 = vpop.f32.mrb[0].mxu0
        %v1661 = vadd.f32 %v1500, %v1660
        %v1662 = vpop.f32.mrb[0].mxu0
        %1663 = vmatprep.mubr.bf16.mxu0 %v758
        %1664 = vmatmul.mubr.bf16.gmra.mrb[0].mxu0 %v757
        %v1665 = vpop.f32.mrb[0].mxu0
        %v1666 = vadd.f32 %v1505, %v1665
        %v1667 = vpop.f32.mrb[0].mxu0
        %v1668 = vpop.f32.mrb[0].mxu0
        %v1669 = vadd.f32 %v1508, %v1668
        %v1670 = vpop.f32.mrb[0].mxu0
        %1671 = vmatprep.mubr.bf16.mxu0 %v767
        %1672 = vmatmul.mubr.bf16.gmra.mrb[0].mxu0 %v766
        %v1673 = vpop.f32.mrb[0].mxu0
        %v1674 = vadd.f32 %v1513, %v1673
        %v1675 = vpop.f32.mrb[0].mxu0
        %v1676 = vpop.f32.mrb[0].mxu0
        %v1677 = vadd.f32 %v1516, %v1676
        %v1678 = vpop.f32.mrb[0].mxu0
        %1679 = vmatprep.mubr.bf16.mxu0 %v776
        %1680 = vmatmul.mubr.bf16.gmra.mrb[0].mxu0 %v775
        %v1681 = vpop.f32.mrb[0].mxu0
        %v1682 = vadd.f32 %v1521, %v1681
        %v1683 = vpop.f32.mrb[0].mxu0
        %v1684 = vpop.f32.mrb[0].mxu0
        %v1685 = vadd.f32 %v1524, %v1684
        %v1686 = vpop.f32.mrb[0].mxu0
        %1687 = vmatprep.mubr.bf16.mxu0 %v785
        %1688 = vmatmul.mubr.bf16.gmra.mrb[0].mxu0 %v784
        %v1689 = vpop.f32.mrb[0].mxu0
        %v1690 = vadd.f32 %v1529, %v1689
        %v1691 = vpop.f32.mrb[0].mxu0
        %v1692 = vpop.f32.mrb[0].mxu0
        %v1693 = vadd.f32 %v1532, %v1692
        %v1694 = vpop.f32.mrb[0].mxu0
        %1695 = vmatprep.mubr.bf16.mxu0 %v794
        %1696 = vmatmul.mubr.bf16.gmra.mrb[0].mxu0 %v793
        %v1697 = vpop.f32.mrb[0].mxu0
        %v1698 = vadd.f32 %v1537, %v1697
        %v1699 = vpop.f32.mrb[0].mxu0
        %v1700 = vpop.f32.mrb[0].mxu0
        %v1701 = vadd.f32 %v1540, %v1700
        %v1702 = vpop.f32.mrb[0].mxu0
        %1703 = vmatprep.mubr.bf16.mxu0 %v803
        %1704 = vmatmul.mubr.bf16.gmra.mrb[0].mxu0 %v802
        %v1705 = vpop.f32.mrb[0].mxu0
        %v1706 = vadd.f32 %v1545, %v1705
        %v1707 = vpop.f32.mrb[0].mxu0
        %v1708 = vpop.f32.mrb[0].mxu0
        %v1709 = vadd.f32 %v1548, %v1708
        %v1710 = vpop.f32.mrb[0].mxu0
        %1711 = vmatprep.mubr.bf16.mxu0 %v812
        %1712 = vmatmul.mubr.bf16.gmra.mrb[0].mxu0 %v811
        %v1713 = vpop.f32.mrb[0].mxu0
        %v1714 = vadd.f32 %v1553, %v1713
        %v1715 = vpop.f32.mrb[0].mxu0
        %v1716 = vpop.f32.mrb[0].mxu0
        %v1717 = vadd.f32 %v1556, %v1716
        %v1718 = vpop.f32.mrb[0].mxu0
        %1719 = vmatprep.mubr.bf16.mxu0 %v821
        %1720 = vmatmul.mubr.bf16.gmra.mrb[0].mxu0 %v820
        %v1721 = vpop.f32.mrb[0].mxu0
        %v1722 = vadd.f32 %v1561, %v1721
        %v1723 = vpop.f32.mrb[0].mxu0
        %v1724 = vpop.f32.mrb[0].mxu0
        %v1725 = vadd.f32 %v1564, %v1724
        %v1726 = vpop.f32.mrb[0].mxu0
        %1727 = vmatprep.mubr.bf16.mxu0 %v830
        %1728 = vmatmul.mubr.bf16.gmra.mrb[0].mxu0 %v829
        %v1729 = vpop.f32.mrb[0].mxu0
        %v1730 = vadd.f32 %v1569, %v1729
        %v1731 = vpop.f32.mrb[0].mxu0
        %v1732 = vpop.f32.mrb[0].mxu0
        %v1733 = vadd.f32 %v1572, %v1732
        %v1734 = vpop.f32.mrb[0].mxu0
        %1735 = vmatprep.mubr.bf16.mxu0 %v839
        %1736 = vmatmul.mubr.bf16.gmra.mrb[0].mxu0 %v838
        %v1737 = vpop.f32.mrb[0].mxu0
        %v1738 = vadd.f32 %v1577, %v1737
        %v1739 = vpop.f32.mrb[0].mxu0
        %v1740 = vpop.f32.mrb[0].mxu0
        %v1741 = vadd.f32 %v1580, %v1740
        %v1742 = vpop.f32.mrb[0].mxu0
        %1743 = vmatprep.mubr.bf16.mxu0 %v848
        %1744 = vmatmul.mubr.bf16.gmra.mrb[0].mxu0 %v847
        %v1745 = vpop.f32.mrb[0].mxu0
        %v1746 = vadd.f32 %v1585, %v1745
        %v1747 = vpop.f32.mrb[0].mxu0
        %v1748 = vpop.f32.mrb[0].mxu0
        %v1749 = vadd.f32 %v1588, %v1748
        %v1750 = vpop.f32.mrb[0].mxu0
        %1751 = vdwg.mxu0
        %1752 = vmatprep.subr.bf16.mxu0 0
        %1753 = vmatpush1.bf16.msra.mxu0 %v1318
        %1754 = vmatprep.subr.bf16.mxu0 0
        %1755 = vmatpush1.bf16.msra.mxu0 %v1319
        %1756 = vmatprep.subr.bf16.mxu0 0
        %1757 = vmatpush1.bf16.msra.mxu0 %v1320
        %1758 = vmatprep.subr.bf16.mxu0 0
        %1759 = vmatpush1.bf16.msra.mxu0 %v1321
        %1760 = vmatprep.subr.bf16.mxu0 0
        %1761 = vmatpush1.bf16.msra.mxu0 %v1322
        %1762 = vmatprep.subr.bf16.mxu0 0
        %1763 = vmatpush1.bf16.msra.mxu0 %v1323
        %1764 = vmatprep.subr.bf16.mxu0 0
        %1765 = vmatpush1.bf16.msra.mxu0 %v1324
        %1766 = vmatprep.subr.bf16.mxu0 0
        %1767 = vmatpush1.bf16.msra.mxu0 %v1325
        %1768 = vmatprep.subr.bf16.mxu0 0
        %1769 = vmatpush1.bf16.msra.mxu0 %v1326
        %1770 = vmatprep.subr.bf16.mxu0 0
        %1771 = vmatpush1.bf16.msra.mxu0 %v1327
        %1772 = vmatprep.subr.bf16.mxu0 0
        %1773 = vmatpush1.bf16.msra.mxu0 %v1328
        %1774 = vmatprep.subr.bf16.mxu0 0
        %1775 = vmatpush1.bf16.msra.mxu0 %v1329
        %1776 = vmatprep.subr.bf16.mxu0 0
        %1777 = vmatpush1.bf16.msra.mxu0 %v1330
        %1778 = vmatprep.subr.bf16.mxu0 0
        %1779 = vmatpush1.bf16.msra.mxu0 %v1331
        %1780 = vmatprep.subr.bf16.mxu0 0
        %1781 = vmatpush1.bf16.msra.mxu0 %v1332
        %1782 = vmatprep.subr.bf16.mxu0 0
        %1783 = vmatpush1.bf16.msra.mxu0 %v1333
        %1784 = vmatprep.mubr.bf16.mxu0 %v715
        %1785 = vmatmul.mubr.bf16.gmra.mrb[0].mxu0 %v714
        %v1786 = vpop.f32.mrb[0].mxu0
        %v1787 = vadd.f32 %v1626, %v1786
        %v1788 = vpop.f32.mrb[0].mxu0
        %v1789 = vpop.f32.mrb[0].mxu0
        %v1790 = vadd.f32 %v1629, %v1789
        %v1791 = vpop.f32.mrb[0].mxu0
        %1792 = vmatprep.mubr.bf16.mxu0 %v724
        %1793 = vmatmul.mubr.bf16.gmra.mrb[0].mxu0 %v723
        %v1794 = vpop.f32.mrb[0].mxu0
        %v1795 = vadd.f32 %v1634, %v1794
        %v1796 = vpop.f32.mrb[0].mxu0
        %v1797 = vpop.f32.mrb[0].mxu0
        %v1798 = vadd.f32 %v1637, %v1797
        %v1799 = vpop.f32.mrb[0].mxu0
        %1800 = vmatprep.mubr.bf16.mxu0 %v733
        %1801 = vmatmul.mubr.bf16.gmra.mrb[0].mxu0 %v732
        %v1802 = vpop.f32.mrb[0].mxu0
        %v1803 = vadd.f32 %v1642, %v1802
        %v1804 = vpop.f32.mrb[0].mxu0
        %v1805 = vpop.f32.mrb[0].mxu0
        %v1806 = vadd.f32 %v1645, %v1805
        %v1807 = vpop.f32.mrb[0].mxu0
        %1808 = vmatprep.mubr.bf16.mxu0 %v742
        %1809 = vmatmul.mubr.bf16.gmra.mrb[0].mxu0 %v741
        %v1810 = vpop.f32.mrb[0].mxu0
        %v1811 = vadd.f32 %v1650, %v1810
        %v1812 = vpop.f32.mrb[0].mxu0
        %v1813 = vpop.f32.mrb[0].mxu0
        %v1814 = vadd.f32 %v1653, %v1813
        %v1815 = vpop.f32.mrb[0].mxu0
        %1816 = vmatprep.mubr.bf16.mxu0 %v751
        %1817 = vmatmul.mubr.bf16.gmra.mrb[0].mxu0 %v750
        %v1818 = vpop.f32.mrb[0].mxu0
        %v1819 = vadd.f32 %v1658, %v1818
        %v1820 = vpop.f32.mrb[0].mxu0
        %v1821 = vpop.f32.mrb[0].mxu0
        %v1822 = vadd.f32 %v1661, %v1821
        %v1823 = vpop.f32.mrb[0].mxu0
        %1824 = vmatprep.mubr.bf16.mxu0 %v760
        %1825 = vmatmul.mubr.bf16.gmra.mrb[0].mxu0 %v759
        %v1826 = vpop.f32.mrb[0].mxu0
        %v1827 = vadd.f32 %v1666, %v1826
        %v1828 = vpop.f32.mrb[0].mxu0
        %v1829 = vpop.f32.mrb[0].mxu0
        %v1830 = vadd.f32 %v1669, %v1829
        %v1831 = vpop.f32.mrb[0].mxu0
        %1832 = vmatprep.mubr.bf16.mxu0 %v769
        %1833 = vmatmul.mubr.bf16.gmra.mrb[0].mxu0 %v768
        %v1834 = vpop.f32.mrb[0].mxu0
        %v1835 = vadd.f32 %v1674, %v1834
        %v1836 = vpop.f32.mrb[0].mxu0
        %v1837 = vpop.f32.mrb[0].mxu0
        %v1838 = vadd.f32 %v1677, %v1837
        %v1839 = vpop.f32.mrb[0].mxu0
        %1840 = vmatprep.mubr.bf16.mxu0 %v778
        %1841 = vmatmul.mubr.bf16.gmra.mrb[0].mxu0 %v777
        %v1842 = vpop.f32.mrb[0].mxu0
        %v1843 = vadd.f32 %v1682, %v1842
        %v1844 = vpop.f32.mrb[0].mxu0
        %v1845 = vpop.f32.mrb[0].mxu0
        %v1846 = vadd.f32 %v1685, %v1845
        %v1847 = vpop.f32.mrb[0].mxu0
        %1848 = vmatprep.mubr.bf16.mxu0 %v787
        %1849 = vmatmul.mubr.bf16.gmra.mrb[0].mxu0 %v786
        %v1850 = vpop.f32.mrb[0].mxu0
        %v1851 = vadd.f32 %v1690, %v1850
        %v1852 = vpop.f32.mrb[0].mxu0
        %v1853 = vpop.f32.mrb[0].mxu0
        %v1854 = vadd.f32 %v1693, %v1853
        %v1855 = vpop.f32.mrb[0].mxu0
        %1856 = vmatprep.mubr.bf16.mxu0 %v796
        %1857 = vmatmul.mubr.bf16.gmra.mrb[0].mxu0 %v795
        %v1858 = vpop.f32.mrb[0].mxu0
        %v1859 = vadd.f32 %v1698, %v1858
        %v1860 = vpop.f32.mrb[0].mxu0
        %v1861 = vpop.f32.mrb[0].mxu0
        %v1862 = vadd.f32 %v1701, %v1861
        %v1863 = vpop.f32.mrb[0].mxu0
        %1864 = vmatprep.mubr.bf16.mxu0 %v805
        %1865 = vmatmul.mubr.bf16.gmra.mrb[0].mxu0 %v804
        %v1866 = vpop.f32.mrb[0].mxu0
        %v1867 = vadd.f32 %v1706, %v1866
        %v1868 = vpop.f32.mrb[0].mxu0
        %v1869 = vpop.f32.mrb[0].mxu0
        %v1870 = vadd.f32 %v1709, %v1869
        %v1871 = vpop.f32.mrb[0].mxu0
        %1872 = vmatprep.mubr.bf16.mxu0 %v814
        %1873 = vmatmul.mubr.bf16.gmra.mrb[0].mxu0 %v813
        %v1874 = vpop.f32.mrb[0].mxu0
        %v1875 = vadd.f32 %v1714, %v1874
        %v1876 = vpop.f32.mrb[0].mxu0
        %v1877 = vpop.f32.mrb[0].mxu0
        %v1878 = vadd.f32 %v1717, %v1877
        %v1879 = vpop.f32.mrb[0].mxu0
        %1880 = vmatprep.mubr.bf16.mxu0 %v823
        %1881 = vmatmul.mubr.bf16.gmra.mrb[0].mxu0 %v822
        %v1882 = vpop.f32.mrb[0].mxu0
        %v1883 = vadd.f32 %v1722, %v1882
        %v1884 = vpop.f32.mrb[0].mxu0
        %v1885 = vpop.f32.mrb[0].mxu0
        %v1886 = vadd.f32 %v1725, %v1885
        %v1887 = vpop.f32.mrb[0].mxu0
        %1888 = vmatprep.mubr.bf16.mxu0 %v832
        %1889 = vmatmul.mubr.bf16.gmra.mrb[0].mxu0 %v831
        %v1890 = vpop.f32.mrb[0].mxu0
        %v1891 = vadd.f32 %v1730, %v1890
        %v1892 = vpop.f32.mrb[0].mxu0
        %v1893 = vpop.f32.mrb[0].mxu0
        %v1894 = vadd.f32 %v1733, %v1893
        %v1895 = vpop.f32.mrb[0].mxu0
        %1896 = vmatprep.mubr.bf16.mxu0 %v841
        %1897 = vmatmul.mubr.bf16.gmra.mrb[0].mxu0 %v840
        %v1898 = vpop.f32.mrb[0].mxu0
        %v1899 = vadd.f32 %v1738, %v1898
        %v1900 = vpop.f32.mrb[0].mxu0
        %v1901 = vpop.f32.mrb[0].mxu0
        %v1902 = vadd.f32 %v1741, %v1901
        %v1903 = vpop.f32.mrb[0].mxu0
        %1904 = vmatprep.mubr.bf16.mxu0 %v850
        %1905 = vmatmul.mubr.bf16.gmra.mrb[0].mxu0 %v849
        %v1906 = vpop.f32.mrb[0].mxu0
        %v1907 = vadd.f32 %v1746, %v1906
        %v1908 = vpop.f32.mrb[0].mxu0
        %v1909 = vpop.f32.mrb[0].mxu0
        %v1910 = vadd.f32 %v1749, %v1909
        %v1911 = vpop.f32.mrb[0].mxu0
        %1912 = vdwg.mxu0
        %1913 = vmatprep.subr.bf16.mxu0 0
        %1914 = vmatpush1.bf16.msra.mxu0 %v1334
        %1915 = vmatprep.subr.bf16.mxu0 0
        %1916 = vmatpush1.bf16.msra.mxu0 %v1335
        %1917 = vmatprep.subr.bf16.mxu0 0
        %1918 = vmatpush1.bf16.msra.mxu0 %v1336
        %1919 = vmatprep.subr.bf16.mxu0 0
        %1920 = vmatpush1.bf16.msra.mxu0 %v1337
        %1921 = vmatprep.subr.bf16.mxu0 0
        %1922 = vmatpush1.bf16.msra.mxu0 %v1338
        %1923 = vmatprep.subr.bf16.mxu0 0
        %1924 = vmatpush1.bf16.msra.mxu0 %v1339
        %1925 = vmatprep.subr.bf16.mxu0 0
        %1926 = vmatpush1.bf16.msra.mxu0 %v1340
        %1927 = vmatprep.subr.bf16.mxu0 0
        %1928 = vmatpush1.bf16.msra.mxu0 %v1341
        %1929 = vmatprep.subr.bf16.mxu0 0
        %1930 = vmatpush1.bf16.msra.mxu0 %v1342
        %1931 = vmatprep.subr.bf16.mxu0 0
        %1932 = vmatpush1.bf16.msra.mxu0 %v1343
        %1933 = vmatprep.subr.bf16.mxu0 0
        %1934 = vmatpush1.bf16.msra.mxu0 %v1344
        %1935 = vmatprep.subr.bf16.mxu0 0
        %1936 = vmatpush1.bf16.msra.mxu0 %v1345
        %1937 = vmatprep.subr.bf16.mxu0 0
        %1938 = vmatpush1.bf16.msra.mxu0 %v1346
        %1939 = vmatprep.subr.bf16.mxu0 0
        %1940 = vmatpush1.bf16.msra.mxu0 %v1347
        %1941 = vmatprep.subr.bf16.mxu0 0
        %1942 = vmatpush1.bf16.msra.mxu0 %v1348
        %1943 = vmatprep.subr.bf16.mxu0 0
        %1944 = vmatpush1.bf16.msra.mxu0 %v1349
        %1945 = vmatprep.mubr.bf16.mxu0 %v717
        %1946 = vmatmul.mubr.bf16.gmra.mrb[0].mxu0 %v716
        %v1947 = vpop.f32.mrb[0].mxu0
        %v1948 = vadd.f32 %v1787, %v1947
        %v1949 = vpop.f32.mrb[0].mxu0
        %v1950 = vpop.f32.mrb[0].mxu0
        %v1951 = vadd.f32 %v1790, %v1950
        %v1952 = vpop.f32.mrb[0].mxu0
        %1953 = vmatprep.mubr.bf16.mxu0 %v726
        %1954 = vmatmul.mubr.bf16.gmra.mrb[0].mxu0 %v725
        %v1955 = vpop.f32.mrb[0].mxu0
        %v1956 = vadd.f32 %v1795, %v1955
        %v1957 = vpop.f32.mrb[0].mxu0
        %v1958 = vpop.f32.mrb[0].mxu0
        %v1959 = vadd.f32 %v1798, %v1958
        %v1960 = vpop.f32.mrb[0].mxu0
        %1961 = vmatprep.mubr.bf16.mxu0 %v735
        %1962 = vmatmul.mubr.bf16.gmra.mrb[0].mxu0 %v734
        %v1963 = vpop.f32.mrb[0].mxu0
        %v1964 = vadd.f32 %v1803, %v1963
        %v1965 = vpop.f32.mrb[0].mxu0
        %v1966 = vpop.f32.mrb[0].mxu0
        %v1967 = vadd.f32 %v1806, %v1966
        %v1968 = vpop.f32.mrb[0].mxu0
        %1969 = vmatprep.mubr.bf16.mxu0 %v744
        %1970 = vmatmul.mubr.bf16.gmra.mrb[0].mxu0 %v743
        %v1971 = vpop.f32.mrb[0].mxu0
        %v1972 = vadd.f32 %v1811, %v1971
        %v1973 = vpop.f32.mrb[0].mxu0
        %v1974 = vpop.f32.mrb[0].mxu0
        %v1975 = vadd.f32 %v1814, %v1974
        %v1976 = vpop.f32.mrb[0].mxu0
        %1977 = vmatprep.mubr.bf16.mxu0 %v753
        %1978 = vmatmul.mubr.bf16.gmra.mrb[0].mxu0 %v752
        %v1979 = vpop.f32.mrb[0].mxu0
        %v1980 = vadd.f32 %v1819, %v1979
        %v1981 = vpop.f32.mrb[0].mxu0
        %v1982 = vpop.f32.mrb[0].mxu0
        %v1983 = vadd.f32 %v1822, %v1982
        %v1984 = vpop.f32.mrb[0].mxu0
        %1985 = vmatprep.mubr.bf16.mxu0 %v762
        %1986 = vmatmul.mubr.bf16.gmra.mrb[0].mxu0 %v761
        %v1987 = vpop.f32.mrb[0].mxu0
        %v1988 = vadd.f32 %v1827, %v1987
        %v1989 = vpop.f32.mrb[0].mxu0
        %v1990 = vpop.f32.mrb[0].mxu0
        %v1991 = vadd.f32 %v1830, %v1990
        %v1992 = vpop.f32.mrb[0].mxu0
        %1993 = vmatprep.mubr.bf16.mxu0 %v771
        %1994 = vmatmul.mubr.bf16.gmra.mrb[0].mxu0 %v770
        %v1995 = vpop.f32.mrb[0].mxu0
        %v1996 = vadd.f32 %v1835, %v1995
        %v1997 = vpop.f32.mrb[0].mxu0
        %v1998 = vpop.f32.mrb[0].mxu0
        %v1999 = vadd.f32 %v1838, %v1998
        %v2000 = vpop.f32.mrb[0].mxu0
        %2001 = vmatprep.mubr.bf16.mxu0 %v780
        %2002 = vmatmul.mubr.bf16.gmra.mrb[0].mxu0 %v779
        %v2003 = vpop.f32.mrb[0].mxu0
        %v2004 = vadd.f32 %v1843, %v2003
        %v2005 = vpop.f32.mrb[0].mxu0
        %v2006 = vpop.f32.mrb[0].mxu0
        %v2007 = vadd.f32 %v1846, %v2006
        %v2008 = vpop.f32.mrb[0].mxu0
        %2009 = vmatprep.mubr.bf16.mxu0 %v789
        %2010 = vmatmul.mubr.bf16.gmra.mrb[0].mxu0 %v788
        %v2011 = vpop.f32.mrb[0].mxu0
        %v2012 = vadd.f32 %v1851, %v2011
        %v2013 = vpop.f32.mrb[0].mxu0
        %v2014 = vpop.f32.mrb[0].mxu0
        %v2015 = vadd.f32 %v1854, %v2014
        %v2016 = vpop.f32.mrb[0].mxu0
        %2017 = vmatprep.mubr.bf16.mxu0 %v798
        %2018 = vmatmul.mubr.bf16.gmra.mrb[0].mxu0 %v797
        %v2019 = vpop.f32.mrb[0].mxu0
        %v2020 = vadd.f32 %v1859, %v2019
        %v2021 = vpop.f32.mrb[0].mxu0
        %v2022 = vpop.f32.mrb[0].mxu0
        %v2023 = vadd.f32 %v1862, %v2022
        %v2024 = vpop.f32.mrb[0].mxu0
        %2025 = vmatprep.mubr.bf16.mxu0 %v807
        %2026 = vmatmul.mubr.bf16.gmra.mrb[0].mxu0 %v806
        %v2027 = vpop.f32.mrb[0].mxu0
        %v2028 = vadd.f32 %v1867, %v2027
        %v2029 = vpop.f32.mrb[0].mxu0
        %v2030 = vpop.f32.mrb[0].mxu0
        %v2031 = vadd.f32 %v1870, %v2030
        %v2032 = vpop.f32.mrb[0].mxu0
        %2033 = vmatprep.mubr.bf16.mxu0 %v816
        %2034 = vmatmul.mubr.bf16.gmra.mrb[0].mxu0 %v815
        %v2035 = vpop.f32.mrb[0].mxu0
        %v2036 = vadd.f32 %v1875, %v2035
        %v2037 = vpop.f32.mrb[0].mxu0
        %v2038 = vpop.f32.mrb[0].mxu0
        %v2039 = vadd.f32 %v1878, %v2038
        %v2040 = vpop.f32.mrb[0].mxu0
        %2041 = vmatprep.mubr.bf16.mxu0 %v825
        %2042 = vmatmul.mubr.bf16.gmra.mrb[0].mxu0 %v824
        %v2043 = vpop.f32.mrb[0].mxu0
        %v2044 = vadd.f32 %v1883, %v2043
        %v2045 = vpop.f32.mrb[0].mxu0
        %v2046 = vpop.f32.mrb[0].mxu0
        %v2047 = vadd.f32 %v1886, %v2046
        %v2048 = vpop.f32.mrb[0].mxu0
        %2049 = vmatprep.mubr.bf16.mxu0 %v834
        %2050 = vmatmul.mubr.bf16.gmra.mrb[0].mxu0 %v833
        %v2051 = vpop.f32.mrb[0].mxu0
        %v2052 = vadd.f32 %v1891, %v2051
        %v2053 = vpop.f32.mrb[0].mxu0
        %v2054 = vpop.f32.mrb[0].mxu0
        %v2055 = vadd.f32 %v1894, %v2054
        %v2056 = vpop.f32.mrb[0].mxu0
        %2057 = vmatprep.mubr.bf16.mxu0 %v843
        %2058 = vmatmul.mubr.bf16.gmra.mrb[0].mxu0 %v842
        %v2059 = vpop.f32.mrb[0].mxu0
        %v2060 = vadd.f32 %v1899, %v2059
        %v2061 = vpop.f32.mrb[0].mxu0
        %v2062 = vpop.f32.mrb[0].mxu0
        %v2063 = vadd.f32 %v1902, %v2062
        %v2064 = vpop.f32.mrb[0].mxu0
        %2065 = vmatprep.mubr.bf16.mxu0 %v852
        %2066 = vmatmul.mubr.bf16.gmra.mrb[0].mxu0 %v851
        %v2067 = vpop.f32.mrb[0].mxu0
        %v2068 = vadd.f32 %v1907, %v2067
        %v2069 = vpop.f32.mrb[0].mxu0
        %v2070 = vpop.f32.mrb[0].mxu0
        %v2071 = vadd.f32 %v1910, %v2070
        %v2072 = vpop.f32.mrb[0].mxu0
        %2073 = vdwg.mxu0
        %2074 = vmatprep.subr.bf16.mxu0 0
        %2075 = vmatpush1.bf16.msra.mxu0 %v1350
        %2076 = vmatprep.subr.bf16.mxu0 0
        %2077 = vmatpush1.bf16.msra.mxu0 %v1351
        %2078 = vmatprep.subr.bf16.mxu0 0
        %2079 = vmatpush1.bf16.msra.mxu0 %v1352
        %2080 = vmatprep.subr.bf16.mxu0 0
        %2081 = vmatpush1.bf16.msra.mxu0 %v1353
        %2082 = vmatprep.subr.bf16.mxu0 0
        %2083 = vmatpush1.bf16.msra.mxu0 %v1354
        %2084 = vmatprep.subr.bf16.mxu0 0
        %2085 = vmatpush1.bf16.msra.mxu0 %v1355
        %2086 = vmatprep.subr.bf16.mxu0 0
        %2087 = vmatpush1.bf16.msra.mxu0 %v1356
        %2088 = vmatprep.subr.bf16.mxu0 0
        %2089 = vmatpush1.bf16.msra.mxu0 %v1357
        %2090 = vmatprep.subr.bf16.mxu0 0
        %2091 = vmatpush1.bf16.msra.mxu0 0
        %2092 = vmatprep.subr.bf16.mxu0 0
        %2093 = vmatpush1.bf16.msra.mxu0 0
        %2094 = vmatprep.subr.bf16.mxu0 0
        %2095 = vmatpush1.bf16.msra.mxu0 0
        %2096 = vmatprep.subr.bf16.mxu0 0
        %2097 = vmatpush1.bf16.msra.mxu0 0
        %2098 = vmatprep.subr.bf16.mxu0 0
        %2099 = vmatpush1.bf16.msra.mxu0 0
        %2100 = vmatprep.subr.bf16.mxu0 0
        %2101 = vmatpush1.bf16.msra.mxu0 0
        %2102 = vmatprep.subr.bf16.mxu0 0
        %2103 = vmatpush1.bf16.msra.mxu0 0
        %2104 = vmatprep.subr.bf16.mxu0 0
        %2105 = vmatpush1.bf16.msra.mxu0 0
        %2106 = vmatprep.mubr.bf16.mxu0 0
        %2107 = vmatmul.mubr.bf16.gmra.mrb[0].mxu0 %v718
        %v2108 = vpop.f32.mrb[0].mxu0
        %v2109 = vadd.f32 %v1948, %v2108
        %v2110 = vpop.f32.mrb[0].mxu0
        %v2111 = vpop.f32.mrb[0].mxu0
        %v2112 = vadd.f32 %v1951, %v2111
        %v2113 = vpop.f32.mrb[0].mxu0
        %2114 = vmatprep.mubr.bf16.mxu0 0
        %2115 = vmatmul.mubr.bf16.gmra.mrb[0].mxu0 %v727
        %v2116 = vpop.f32.mrb[0].mxu0
        %v2117 = vadd.f32 %v1956, %v2116
        %v2118 = vpop.f32.mrb[0].mxu0
        %v2119 = vpop.f32.mrb[0].mxu0
        %v2120 = vadd.f32 %v1959, %v2119
        %v2121 = vpop.f32.mrb[0].mxu0
        %2122 = vmatprep.mubr.bf16.mxu0 0
        %2123 = vmatmul.mubr.bf16.gmra.mrb[0].mxu0 %v736
        %v2124 = vpop.f32.mrb[0].mxu0
        %v2125 = vadd.f32 %v1964, %v2124
        %v2126 = vpop.f32.mrb[0].mxu0
        %v2127 = vpop.f32.mrb[0].mxu0
        %v2128 = vadd.f32 %v1967, %v2127
        %v2129 = vpop.f32.mrb[0].mxu0
        %2130 = vmatprep.mubr.bf16.mxu0 0
        %2131 = vmatmul.mubr.bf16.gmra.mrb[0].mxu0 %v745
        %v2132 = vpop.f32.mrb[0].mxu0
        %v2133 = vadd.f32 %v1972, %v2132
        %v2134 = vpop.f32.mrb[0].mxu0
        %v2135 = vpop.f32.mrb[0].mxu0
        %v2136 = vadd.f32 %v1975, %v2135
        %v2137 = vpop.f32.mrb[0].mxu0
        %2138 = vmatprep.mubr.bf16.mxu0 0
        %2139 = vmatmul.mubr.bf16.gmra.mrb[0].mxu0 %v754
        %v2140 = vpop.f32.mrb[0].mxu0
        %v2141 = vadd.f32 %v1980, %v2140
        %v2142 = vpop.f32.mrb[0].mxu0
        %v2143 = vpop.f32.mrb[0].mxu0
        %v2144 = vadd.f32 %v1983, %v2143
        %v2145 = vpop.f32.mrb[0].mxu0
        %2146 = vmatprep.mubr.bf16.mxu0 0
        %2147 = vmatmul.mubr.bf16.gmra.mrb[0].mxu0 %v763
        %v2148 = vpop.f32.mrb[0].mxu0
        %v2149 = vadd.f32 %v1988, %v2148
        %v2150 = vpop.f32.mrb[0].mxu0
        %v2151 = vpop.f32.mrb[0].mxu0
        %v2152 = vadd.f32 %v1991, %v2151
        %v2153 = vpop.f32.mrb[0].mxu0
        %2154 = vmatprep.mubr.bf16.mxu0 0
        %2155 = vmatmul.mubr.bf16.gmra.mrb[0].mxu0 %v772
        %v2156 = vpop.f32.mrb[0].mxu0
        %v2157 = vadd.f32 %v1996, %v2156
        %v2158 = vpop.f32.mrb[0].mxu0
        %v2159 = vpop.f32.mrb[0].mxu0
        %v2160 = vadd.f32 %v1999, %v2159
        %v2161 = vpop.f32.mrb[0].mxu0
        %2162 = vmatprep.mubr.bf16.mxu0 0
        %2163 = vmatmul.mubr.bf16.gmra.mrb[0].mxu0 %v781
        %v2164 = vpop.f32.mrb[0].mxu0
        %v2165 = vadd.f32 %v2004, %v2164
        %v2166 = vpop.f32.mrb[0].mxu0
        %v2167 = vpop.f32.mrb[0].mxu0
        %v2168 = vadd.f32 %v2007, %v2167
        %v2169 = vpop.f32.mrb[0].mxu0
        %2170 = vmatprep.mubr.bf16.mxu0 0
        %2171 = vmatmul.mubr.bf16.gmra.mrb[0].mxu0 %v790
        %v2172 = vpop.f32.mrb[0].mxu0
        %v2173 = vadd.f32 %v2012, %v2172
        %v2174 = vpop.f32.mrb[0].mxu0
        %v2175 = vpop.f32.mrb[0].mxu0
        %v2176 = vadd.f32 %v2015, %v2175
        %v2177 = vpop.f32.mrb[0].mxu0
        %2178 = vmatprep.mubr.bf16.mxu0 0
        %2179 = vmatmul.mubr.bf16.gmra.mrb[0].mxu0 %v799
        %v2180 = vpop.f32.mrb[0].mxu0
        %v2181 = vadd.f32 %v2020, %v2180
        %v2182 = vpop.f32.mrb[0].mxu0
        %v2183 = vpop.f32.mrb[0].mxu0
        %v2184 = vadd.f32 %v2023, %v2183
        %v2185 = vpop.f32.mrb[0].mxu0
        %2186 = vmatprep.mubr.bf16.mxu0 0
        %2187 = vmatmul.mubr.bf16.gmra.mrb[0].mxu0 %v808
        %v2188 = vpop.f32.mrb[0].mxu0
        %v2189 = vadd.f32 %v2028, %v2188
        %v2190 = vpop.f32.mrb[0].mxu0
        %v2191 = vpop.f32.mrb[0].mxu0
        %v2192 = vadd.f32 %v2031, %v2191
        %v2193 = vpop.f32.mrb[0].mxu0
        %2194 = vmatprep.mubr.bf16.mxu0 0
        %2195 = vmatmul.mubr.bf16.gmra.mrb[0].mxu0 %v817
        %v2196 = vpop.f32.mrb[0].mxu0
        %v2197 = vadd.f32 %v2036, %v2196
        %v2198 = vpop.f32.mrb[0].mxu0
        %v2199 = vpop.f32.mrb[0].mxu0
        %v2200 = vadd.f32 %v2039, %v2199
        %v2201 = vpop.f32.mrb[0].mxu0
        %2202 = vmatprep.mubr.bf16.mxu0 0
        %2203 = vmatmul.mubr.bf16.gmra.mrb[0].mxu0 %v826
        %v2204 = vpop.f32.mrb[0].mxu0
        %v2205 = vadd.f32 %v2044, %v2204
        %v2206 = vpop.f32.mrb[0].mxu0
        %v2207 = vpop.f32.mrb[0].mxu0
        %v2208 = vadd.f32 %v2047, %v2207
        %v2209 = vpop.f32.mrb[0].mxu0
        %2210 = vmatprep.mubr.bf16.mxu0 0
        %2211 = vmatmul.mubr.bf16.gmra.mrb[0].mxu0 %v835
        %v2212 = vpop.f32.mrb[0].mxu0
        %v2213 = vadd.f32 %v2052, %v2212
        %v2214 = vpop.f32.mrb[0].mxu0
        %v2215 = vpop.f32.mrb[0].mxu0
        %v2216 = vadd.f32 %v2055, %v2215
        %v2217 = vpop.f32.mrb[0].mxu0
        %2218 = vmatprep.mubr.bf16.mxu0 0
        %2219 = vmatmul.mubr.bf16.gmra.mrb[0].mxu0 %v844
        %v2220 = vpop.f32.mrb[0].mxu0
        %v2221 = vadd.f32 %v2060, %v2220
        %v2222 = vpop.f32.mrb[0].mxu0
        %v2223 = vpop.f32.mrb[0].mxu0
        %v2224 = vadd.f32 %v2063, %v2223
        %v2225 = vpop.f32.mrb[0].mxu0
        %2226 = vmatprep.mubr.bf16.mxu0 0
        %2227 = vmatmul.mubr.bf16.gmra.mrb[0].mxu0 %v853
        %v2228 = vpop.f32.mrb[0].mxu0
        %v2229 = vadd.f32 %v2068, %v2228
        %v2230 = vpop.f32.mrb[0].mxu0
        %v2231 = vpop.f32.mrb[0].mxu0
        %v2232 = vadd.f32 %v2071, %v2231
        %v2233 = vpop.f32.mrb[0].mxu0
        %2234 = vdwg.mxu0
        %2235 = vst [vmem:[#allocation4] sm:$0xff] %v2109
        %2236 = vst [vmem:[#allocation4 + $0x8] sm:$0xff] %v2112
        %2237 = vst [vmem:[#allocation4 + $0x10] sm:$0xff] %v2117
        %2238 = vst [vmem:[#allocation4 + $0x18] sm:$0xff] %v2120
        %2239 = vst [vmem:[#allocation4 + $0x20] sm:$0xff] %v2125
        %2240 = vst [vmem:[#allocation4 + $0x28] sm:$0xff] %v2128
        %2241 = vst [vmem:[#allocation4 + $0x30] sm:$0xff] %v2133
        %2242 = vst [vmem:[#allocation4 + $0x38] sm:$0xff] %v2136
        %2243 = vst [vmem:[#allocation4 + $0x40] sm:$0xff] %v2141
        %2244 = vst [vmem:[#allocation4 + $0x48] sm:$0xff] %v2144
        %2245 = vst [vmem:[#allocation4 + $0x50] sm:$0xff] %v2149
        %2246 = vst [vmem:[#allocation4 + $0x58] sm:$0xff] %v2152
        %2247 = vst [vmem:[#allocation4 + $0x60] sm:$0xff] %v2157
        %2248 = vst [vmem:[#allocation4 + $0x68] sm:$0xff] %v2160
        %2249 = vst [vmem:[#allocation4 + $0x70] sm:$0xff] %v2165
        %2250 = vst [vmem:[#allocation4 + $0x78] sm:$0xff] %v2168
        %2251 = vst [vmem:[#allocation4 + $0x80] sm:$0xff] %v2173
        %2252 = vst [vmem:[#allocation4 + $0x88] sm:$0xff] %v2176
        %2253 = vst [vmem:[#allocation4 + $0x90] sm:$0xff] %v2181
        %2254 = vst [vmem:[#allocation4 + $0x98] sm:$0xff] %v2184
        %2255 = vst [vmem:[#allocation4 + $0xa0] sm:$0xff] %v2189
        %2256 = vst [vmem:[#allocation4 + $0xa8] sm:$0xff] %v2192
        %2257 = vst [vmem:[#allocation4 + $0xb0] sm:$0xff] %v2197
        %2258 = vst [vmem:[#allocation4 + $0xb8] sm:$0xff] %v2200
        %2259 = vst [vmem:[#allocation4 + $0xc0] sm:$0xff] %v2205
        %2260 = vst [vmem:[#allocation4 + $0xc8] sm:$0xff] %v2208
        %2261 = vst [vmem:[#allocation4 + $0xd0] sm:$0xff] %v2213
        %2262 = vst [vmem:[#allocation4 + $0xd8] sm:$0xff] %v2216
        %2263 = vst [vmem:[#allocation4 + $0xe0] sm:$0xff] %v2221
        %2264 = vst [vmem:[#allocation4 + $0xe8] sm:$0xff] %v2224
        %2265 = vst [vmem:[#allocation4 + $0xf0] sm:$0xff] %v2229
        %2266 = vst [vmem:[#allocation4 + $0xf8] sm:$0xff] %v2232
        %v2267 = vld [vmem:[#allocation4] ss:$2 sm:$0xff]
        %s2268 = scalar_lea.vmem [#allocation4], 16
        %v2269 = vld [vmem:[%s2268] ss:$2 sm:$0xff]
        %s2270 = scalar_lea.vmem [#allocation4], 32
        %v2271 = vld [vmem:[%s2270] ss:$2 sm:$0xff]
        %s2272 = scalar_lea.vmem [#allocation4], 48
        %v2273 = vld [vmem:[%s2272] ss:$2 sm:$0xff]
        %s2274 = scalar_lea.vmem [#allocation4], 64
        %v2275 = vld [vmem:[%s2274] ss:$2 sm:$0xff]
        %s2276 = scalar_lea.vmem [#allocation4], 80
        %v2277 = vld [vmem:[%s2276] ss:$2 sm:$0xff]
        %s2278 = scalar_lea.vmem [#allocation4], 96
        %v2279 = vld [vmem:[%s2278] ss:$2 sm:$0xff]
        %s2280 = scalar_lea.vmem [#allocation4], 112
        %v2281 = vld [vmem:[%s2280] ss:$2 sm:$0xff]
        %s2282 = scalar_lea.vmem [#allocation4], 128
        %v2283 = vld [vmem:[%s2282] ss:$2 sm:$0xff]
        %s2284 = scalar_lea.vmem [#allocation4], 144
        %v2285 = vld [vmem:[%s2284] ss:$2 sm:$0xff]
        %s2286 = scalar_lea.vmem [#allocation4], 160
        %v2287 = vld [vmem:[%s2286] ss:$2 sm:$0xff]
        %s2288 = scalar_lea.vmem [#allocation4], 176
        %v2289 = vld [vmem:[%s2288] ss:$2 sm:$0xff]
        %s2290 = scalar_lea.vmem [#allocation4], 192
        %v2291 = vld [vmem:[%s2290] ss:$2 sm:$0xff]
        %s2292 = scalar_lea.vmem [#allocation4], 208
        %v2293 = vld [vmem:[%s2292] ss:$2 sm:$0xff]
        %s2294 = scalar_lea.vmem [#allocation4], 224
        %v2295 = vld [vmem:[%s2294] ss:$2 sm:$0xff]
        %s2296 = scalar_lea.vmem [#allocation4], 240
        %v2297 = vld [vmem:[%s2296] ss:$2 sm:$0xff]
        %s2298 = scalar_lea.vmem [#allocation4], 1
        %v2299 = vld [vmem:[%s2298] ss:$2 sm:$0xff]
        %s2300 = scalar_lea.vmem [#allocation4], 17
        %v2301 = vld [vmem:[%s2300] ss:$2 sm:$0xff]
        %s2302 = scalar_lea.vmem [#allocation4], 33
        %v2303 = vld [vmem:[%s2302] ss:$2 sm:$0xff]
        %s2304 = scalar_lea.vmem [#allocation4], 49
        %v2305 = vld [vmem:[%s2304] ss:$2 sm:$0xff]
        %s2306 = scalar_lea.vmem [#allocation4], 65
        %v2307 = vld [vmem:[%s2306] ss:$2 sm:$0xff]
        %s2308 = scalar_lea.vmem [#allocation4], 81
        %v2309 = vld [vmem:[%s2308] ss:$2 sm:$0xff]
        %s2310 = scalar_lea.vmem [#allocation4], 97
        %v2311 = vld [vmem:[%s2310] ss:$2 sm:$0xff]
        %s2312 = scalar_lea.vmem [#allocation4], 113
        %v2313 = vld [vmem:[%s2312] ss:$2 sm:$0xff]
        %s2314 = scalar_lea.vmem [#allocation4], 129
        %v2315 = vld [vmem:[%s2314] ss:$2 sm:$0xff]
        %s2316 = scalar_lea.vmem [#allocation4], 145
        %v2317 = vld [vmem:[%s2316] ss:$2 sm:$0xff]
        %s2318 = scalar_lea.vmem [#allocation4], 161
        %v2319 = vld [vmem:[%s2318] ss:$2 sm:$0xff]
        %s2320 = scalar_lea.vmem [#allocation4], 177
        %v2321 = vld [vmem:[%s2320] ss:$2 sm:$0xff]
        %s2322 = scalar_lea.vmem [#allocation4], 193
        %v2323 = vld [vmem:[%s2322] ss:$2 sm:$0xff]
        %s2324 = scalar_lea.vmem [#allocation4], 209
        %v2325 = vld [vmem:[%s2324] ss:$2 sm:$0xff]
        %s2326 = scalar_lea.vmem [#allocation4], 225
        %v2327 = vld [vmem:[%s2326] ss:$2 sm:$0xff]
        %s2328 = scalar_lea.vmem [#allocation4], 241
        %v2329 = vld [vmem:[%s2328] ss:$2 sm:$0xff]
        %v2330 = vmax.f32 %v2267, %v2299
        %v2331 = vmax.f32 %v2269, %v2301
        %v2332 = vmax.f32 %v2271, %v2303
        %v2333 = vmax.f32 %v2273, %v2305
        %v2334 = vmax.f32 %v2275, %v2307
        %v2335 = vmax.f32 %v2277, %v2309
        %v2336 = vmax.f32 %v2279, %v2311
        %v2337 = vmax.f32 %v2281, %v2313
        %v2338 = vmax.f32 %v2283, %v2315
        %v2339 = vmax.f32 %v2285, %v2317
        %v2340 = vmax.f32 %v2287, %v2319
        %v2341 = vmax.f32 %v2289, %v2321
        %v2342 = vmax.f32 %v2291, %v2323
        %v2343 = vmax.f32 %v2293, %v2325
        %v2344 = vmax.f32 %v2295, %v2327
        %v2345 = vmax.f32 %v2297, %v2329
        %v2346 = vmax.f32 %v2330, %v2331
        %v2347 = vmax.f32 %v2332, %v2333
        %v2348 = vmax.f32 %v2334, %v2335
        %v2349 = vmax.f32 %v2336, %v2337
        %v2350 = vmax.f32 %v2338, %v2339
        %v2351 = vmax.f32 %v2340, %v2341
        %v2352 = vmax.f32 %v2342, %v2343
        %v2353 = vmax.f32 %v2344, %v2345
        %v2354 = vld [vmem:[%s4] sm:$0x1]
        %v2355 = vld [vmem:[%s5] sm:$0x1]
        %v2356 = vlaneseq
        %v2357 = vshrl.u32 %v2356, 7
        %v2358 = vsub.s32 0, %v2357
        %v2359 = vrot.slane %v2354, %v2358
        %v2360 = vmul.f32 %v2346, %v2359
        %v2361 = vmul.f32 %v2347, %v2359
        %v2362 = vmul.f32 %v2348, %v2359
        %v2363 = vmul.f32 %v2349, %v2359
        %v2364 = vmul.f32 %v2350, %v2359
        %v2365 = vmul.f32 %v2351, %v2359
        %v2366 = vmul.f32 %v2352, %v2359
        %v2367 = vmul.f32 %v2353, %v2359
        %v2368 = vlaneseq
        %v2369 = vshrl.u32 %v2368, 7
        %v2370 = vsub.s32 0, %v2369
        %v2371 = vrot.slane %v2355, %v2370
        %v2372 = vadd.f32 %v2360, %v2371
        %v2373 = vadd.f32 %v2361, %v2371
        %v2374 = vadd.f32 %v2362, %v2371
        %v2375 = vadd.f32 %v2363, %v2371
        %v2376 = vadd.f32 %v2364, %v2371
        %v2377 = vadd.f32 %v2365, %v2371
        %v2378 = vadd.f32 %v2366, %v2371
        %v2379 = vadd.f32 %v2367, %v2371
        %v2380 = vmax.f32 %v2372, 0.0
        %v2381 = vmax.f32 %v2373, 0.0
        %v2382 = vmax.f32 %v2374, 0.0
        %v2383 = vmax.f32 %v2375, 0.0
        %v2384 = vmax.f32 %v2376, 0.0
        %v2385 = vmax.f32 %v2377, 0.0
        %v2386 = vmax.f32 %v2378, 0.0
        %v2387 = vmax.f32 %v2379, 0.0
        %s2388 = scalar_lea.vmem [#allocation3], 16
        %2389 = vst [vmem:[%s2388 + $0x1] sm:$0xff] %v2380
        %2390 = vst [vmem:[%s2388 + $0x11] sm:$0xff] %v2381
        %2391 = vst [vmem:[%s2388 + $0x21] sm:$0xff] %v2382
        %2392 = vst [vmem:[%s2388 + $0x31] sm:$0xff] %v2383
        %2393 = vst [vmem:[%s2388 + $0x41] sm:$0xff] %v2384
        %2394 = vst [vmem:[%s2388 + $0x51] sm:$0xff] %v2385
        %2395 = vst [vmem:[%s2388 + $0x61] sm:$0xff] %v2386
        %2396 = vst [vmem:[%s2388 + $0x71] sm:$0xff] %v2387
        %v2397 = vld [vmem:[#allocation3] sm:$0xff]
        %v2398 = vld [vmem:[#allocation3 + $0x10] sm:$0xff]
        %v2399 = vld [vmem:[#allocation3 + $0x20] sm:$0xff]
        %v2400 = vld [vmem:[#allocation3 + $0x30] sm:$0xff]
        %v2401 = vld [vmem:[#allocation3 + $0x40] sm:$0xff]
        %v2402 = vld [vmem:[#allocation3 + $0x50] sm:$0xff]
        %v2403 = vld [vmem:[#allocation3 + $0x60] sm:$0xff]
        %v2404 = vld [vmem:[#allocation3 + $0x70] sm:$0xff]
        %v2405 = vld [vmem:[#allocation3 + $0x1] sm:$0xff]
        %v2406 = vld [vmem:[#allocation3 + $0x11] sm:$0xff]
        %v2407 = vld [vmem:[#allocation3 + $0x21] sm:$0xff]
        %v2408 = vld [vmem:[#allocation3 + $0x31] sm:$0xff]
        %v2409 = vld [vmem:[#allocation3 + $0x41] sm:$0xff]
        %v2410 = vld [vmem:[#allocation3 + $0x51] sm:$0xff]
        %v2411 = vld [vmem:[#allocation3 + $0x61] sm:$0xff]
        %v2412 = vld [vmem:[#allocation3 + $0x71] sm:$0xff]
        %v2413 = vld [vmem:[#allocation3 + $0x2] sm:$0xff]
        %v2414 = vld [vmem:[#allocation3 + $0x12] sm:$0xff]
        %v2415 = vld [vmem:[#allocation3 + $0x22] sm:$0xff]
        %v2416 = vld [vmem:[#allocation3 + $0x32] sm:$0xff]
        %v2417 = vld [vmem:[#allocation3 + $0x42] sm:$0xff]
        %v2418 = vld [vmem:[#allocation3 + $0x52] sm:$0xff]
        %v2419 = vld [vmem:[#allocation3 + $0x62] sm:$0xff]
        %v2420 = vld [vmem:[#allocation3 + $0x72] sm:$0xff]
        %v2421 = vld [vmem:[%s2388] sm:$0xff]
        %v2422 = vld [vmem:[%s2388 + $0x10] sm:$0xff]
        %v2423 = vld [vmem:[%s2388 + $0x20] sm:$0xff]
        %v2424 = vld [vmem:[%s2388 + $0x30] sm:$0xff]
        %v2425 = vld [vmem:[%s2388 + $0x40] sm:$0xff]
        %v2426 = vld [vmem:[%s2388 + $0x50] sm:$0xff]
        %v2427 = vld [vmem:[%s2388 + $0x60] sm:$0xff]
        %v2428 = vld [vmem:[%s2388 + $0x70] sm:$0xff]
        %v2429 = vld [vmem:[%s2388 + $0x1] sm:$0xff]
        %v2430 = vld [vmem:[%s2388 + $0x11] sm:$0xff]
        %v2431 = vld [vmem:[%s2388 + $0x21] sm:$0xff]
        %v2432 = vld [vmem:[%s2388 + $0x31] sm:$0xff]
        %v2433 = vld [vmem:[%s2388 + $0x41] sm:$0xff]
        %v2434 = vld [vmem:[%s2388 + $0x51] sm:$0xff]
        %v2435 = vld [vmem:[%s2388 + $0x61] sm:$0xff]
        %v2436 = vld [vmem:[%s2388 + $0x71] sm:$0xff]
        %v2437 = vld [vmem:[%s2388 + $0x2] sm:$0xff]
        %v2438 = vld [vmem:[%s2388 + $0x12] sm:$0xff]
        %v2439 = vld [vmem:[%s2388 + $0x22] sm:$0xff]
        %v2440 = vld [vmem:[%s2388 + $0x32] sm:$0xff]
        %v2441 = vld [vmem:[%s2388 + $0x42] sm:$0xff]
        %v2442 = vld [vmem:[%s2388 + $0x52] sm:$0xff]
        %v2443 = vld [vmem:[%s2388 + $0x62] sm:$0xff]
        %v2444 = vld [vmem:[%s2388 + $0x72] sm:$0xff]
        %s2445 = scalar_lea.vmem [#allocation3], 32
        %v2446 = vld [vmem:[%s2445] sm:$0xff]
        %v2447 = vld [vmem:[%s2445 + $0x10] sm:$0xff]
        %v2448 = vld [vmem:[%s2445 + $0x20] sm:$0xff]
        %v2449 = vld [vmem:[%s2445 + $0x30] sm:$0xff]
        %v2450 = vld [vmem:[%s2445 + $0x40] sm:$0xff]
        %v2451 = vld [vmem:[%s2445 + $0x50] sm:$0xff]
        %v2452 = vld [vmem:[%s2445 + $0x60] sm:$0xff]
        %v2453 = vld [vmem:[%s2445 + $0x70] sm:$0xff]
        %v2454 = vld [vmem:[%s2445 + $0x1] sm:$0xff]
        %v2455 = vld [vmem:[%s2445 + $0x11] sm:$0xff]
        %v2456 = vld [vmem:[%s2445 + $0x21] sm:$0xff]
        %v2457 = vld [vmem:[%s2445 + $0x31] sm:$0xff]
        %v2458 = vld [vmem:[%s2445 + $0x41] sm:$0xff]
        %v2459 = vld [vmem:[%s2445 + $0x51] sm:$0xff]
        %v2460 = vld [vmem:[%s2445 + $0x61] sm:$0xff]
        %v2461 = vld [vmem:[%s2445 + $0x71] sm:$0xff]
        %v2462 = vld [vmem:[%s2445 + $0x2] sm:$0xff]
        %v2463 = vld [vmem:[%s2445 + $0x12] sm:$0xff]
        %v2464 = vld [vmem:[%s2445 + $0x22] sm:$0xff]
        %v2465 = vld [vmem:[%s2445 + $0x32] sm:$0xff]
        %v2466 = vld [vmem:[%s2445 + $0x42] sm:$0xff]
        %v2467 = vld [vmem:[%s2445 + $0x52] sm:$0xff]
        %v2468 = vld [vmem:[%s2445 + $0x62] sm:$0xff]
        %v2469 = vld [vmem:[%s2445 + $0x72] sm:$0xff]
        %v2470 = vpack.c.bf16 %v2398, %v2397
        %v2471 = vpack.c.bf16 %v2406, %v2405
        %v2472 = vpack.c.bf16 %v2414, %v2413
        %v2473 = vpack.c.bf16 %v2422, %v2421
        %v2474 = vpack.c.bf16 %v2430, %v2429
        %v2475 = vpack.c.bf16 %v2438, %v2437
        %v2476 = vpack.c.bf16 %v2447, %v2446
        %v2477 = vpack.c.bf16 %v2455, %v2454
        %v2478 = vpack.c.bf16 %v2463, %v2462
        %v2479 = vpack.c.bf16 %v2400, %v2399
        %v2480 = vpack.c.bf16 %v2408, %v2407
        %v2481 = vpack.c.bf16 %v2416, %v2415
        %v2482 = vpack.c.bf16 %v2424, %v2423
        %v2483 = vpack.c.bf16 %v2432, %v2431
        %v2484 = vpack.c.bf16 %v2440, %v2439
        %v2485 = vpack.c.bf16 %v2449, %v2448
        %v2486 = vpack.c.bf16 %v2457, %v2456
        %v2487 = vpack.c.bf16 %v2465, %v2464
        %v2488 = vpack.c.bf16 %v2402, %v2401
        %v2489 = vpack.c.bf16 %v2410, %v2409
        %v2490 = vpack.c.bf16 %v2418, %v2417
        %v2491 = vpack.c.bf16 %v2426, %v2425
        %v2492 = vpack.c.bf16 %v2434, %v2433
        %v2493 = vpack.c.bf16 %v2442, %v2441
        %v2494 = vpack.c.bf16 %v2451, %v2450
        %v2495 = vpack.c.bf16 %v2459, %v2458
        %v2496 = vpack.c.bf16 %v2467, %v2466
        %v2497 = vpack.c.bf16 %v2404, %v2403
        %v2498 = vpack.c.bf16 %v2412, %v2411
        %v2499 = vpack.c.bf16 %v2420, %v2419
        %v2500 = vpack.c.bf16 %v2428, %v2427
        %v2501 = vpack.c.bf16 %v2436, %v2435
        %v2502 = vpack.c.bf16 %v2444, %v2443
        %v2503 = vpack.c.bf16 %v2453, %v2452
        %v2504 = vpack.c.bf16 %v2461, %v2460
        %v2505 = vpack.c.bf16 %v2469, %v2468
        %v2506 = vld [vmem:[#allocation5] sm:$0xf]
        %v2507 = vld [vmem:[#allocation5 + $0x4] sm:$0xf]
        %v2508 = vld [vmem:[#allocation5 + $0x8] sm:$0xf]
        %v2509 = vld [vmem:[#allocation5 + $0xc] sm:$0xf]
        %v2510 = vld [vmem:[#allocation5 + $0x10] sm:$0xf]
        %v2511 = vld [vmem:[#allocation5 + $0x14] sm:$0xf]
        %v2512 = vld [vmem:[#allocation5 + $0x18] sm:$0xf]
        %v2513 = vld [vmem:[#allocation5 + $0x1c] sm:$0xf]
        %v2514 = vld [vmem:[#allocation5 + $0x20] sm:$0xf]
        %v2515 = vld [vmem:[#allocation5 + $0x24] sm:$0xf]
        %v2516 = vld [vmem:[#allocation5 + $0x28] sm:$0xf]
        %v2517 = vld [vmem:[#allocation5 + $0x2c] sm:$0xf]
        %v2518 = vld [vmem:[#allocation5 + $0x30] sm:$0xf]
        %v2519 = vld [vmem:[#allocation5 + $0x34] sm:$0xf]
        %v2520 = vld [vmem:[#allocation5 + $0x38] sm:$0xf]
        %v2521 = vld [vmem:[#allocation5 + $0x3c] sm:$0xf]
        %v2522 = vld [vmem:[#allocation5 + $0x40] sm:$0xf]
        %v2523 = vld [vmem:[#allocation5 + $0x44] sm:$0xf]
        %v2524 = vld [vmem:[#allocation5 + $0x48] sm:$0xf]
        %v2525 = vld [vmem:[#allocation5 + $0x4c] sm:$0xf]
        %v2526 = vld [vmem:[#allocation5 + $0x50] sm:$0xf]
        %v2527 = vld [vmem:[#allocation5 + $0x54] sm:$0xf]
        %v2528 = vld [vmem:[#allocation5 + $0x58] sm:$0xf]
        %v2529 = vld [vmem:[#allocation5 + $0x5c] sm:$0xf]
        %v2530 = vld [vmem:[#allocation5 + $0x60] sm:$0xf]
        %v2531 = vld [vmem:[#allocation5 + $0x64] sm:$0xf]
        %v2532 = vld [vmem:[#allocation5 + $0x68] sm:$0xf]
        %v2533 = vld [vmem:[#allocation5 + $0x6c] sm:$0xf]
        %v2534 = vld [vmem:[#allocation5 + $0x70] sm:$0xf]
        %v2535 = vld [vmem:[#allocation5 + $0x74] sm:$0xf]
        %v2536 = vld [vmem:[#allocation5 + $0x78] sm:$0xf]
        %v2537 = vld [vmem:[#allocation5 + $0x7c] sm:$0xf]
        %v2538 = vld [vmem:[#allocation5 + $0x80] sm:$0xf]
        %v2539 = vld [vmem:[#allocation5 + $0x84] sm:$0xf]
        %v2540 = vld [vmem:[#allocation5 + $0x88] sm:$0xf]
        %v2541 = vld [vmem:[#allocation5 + $0x8c] sm:$0xf]
        %v2542 = vld [vmem:[#allocation5 + $0x90] sm:$0xf]
        %v2543 = vld [vmem:[#allocation5 + $0x94] sm:$0xf]
        %v2544 = vld [vmem:[#allocation5 + $0x98] sm:$0xf]
        %v2545 = vld [vmem:[#allocation5 + $0x9c] sm:$0xf]
        %v2546 = vld [vmem:[#allocation5 + $0xa0] sm:$0xf]
        %v2547 = vld [vmem:[#allocation5 + $0xa4] sm:$0xf]
        %v2548 = vld [vmem:[#allocation5 + $0xa8] sm:$0xf]
        %v2549 = vld [vmem:[#allocation5 + $0xac] sm:$0xf]
        %v2550 = vld [vmem:[#allocation5 + $0xb0] sm:$0xf]
        %v2551 = vld [vmem:[#allocation5 + $0xb4] sm:$0xf]
        %v2552 = vld [vmem:[#allocation5 + $0xb8] sm:$0xf]
        %v2553 = vld [vmem:[#allocation5 + $0xbc] sm:$0xf]
        %v2554 = vld [vmem:[#allocation5 + $0xc0] sm:$0xf]
        %v2555 = vld [vmem:[#allocation5 + $0xc4] sm:$0xf]
        %v2556 = vld [vmem:[#allocation5 + $0xc8] sm:$0xf]
        %v2557 = vld [vmem:[#allocation5 + $0xcc] sm:$0xf]
        %v2558 = vld [vmem:[#allocation5 + $0xd0] sm:$0xf]
        %v2559 = vld [vmem:[#allocation5 + $0xd4] sm:$0xf]
        %v2560 = vld [vmem:[#allocation5 + $0xd8] sm:$0xf]
        %v2561 = vld [vmem:[#allocation5 + $0xdc] sm:$0xf]
        %v2562 = vld [vmem:[#allocation5 + $0xe0] sm:$0xf]
        %v2563 = vld [vmem:[#allocation5 + $0xe4] sm:$0xf]
        %v2564 = vld [vmem:[#allocation5 + $0xe8] sm:$0xf]
        %v2565 = vld [vmem:[#allocation5 + $0xec] sm:$0xf]
        %v2566 = vld [vmem:[#allocation5 + $0xf0] sm:$0xf]
        %v2567 = vld [vmem:[#allocation5 + $0xf4] sm:$0xf]
        %v2568 = vld [vmem:[#allocation5 + $0xf8] sm:$0xf]
        %v2569 = vld [vmem:[#allocation5 + $0xfc] sm:$0xf]
        %v2570 = vld [vmem:[#allocation5 + $0x100] sm:$0xf]
        %v2571 = vld [vmem:[#allocation5 + $0x104] sm:$0xf]
        %v2572 = vld [vmem:[#allocation5 + $0x108] sm:$0xf]
        %v2573 = vld [vmem:[#allocation5 + $0x10c] sm:$0xf]
        %v2574 = vld [vmem:[#allocation5 + $0x110] sm:$0xf]
        %v2575 = vld [vmem:[#allocation5 + $0x114] sm:$0xf]
        %v2576 = vld [vmem:[#allocation5 + $0x118] sm:$0xf]
        %v2577 = vld [vmem:[#allocation5 + $0x11c] sm:$0xf]
        %v2578 = vld [vmem:[#allocation5 + $0x120] sm:$0xf]
        %v2579 = vld [vmem:[#allocation5 + $0x124] sm:$0xf]
        %v2580 = vld [vmem:[#allocation5 + $0x128] sm:$0xf]
        %v2581 = vld [vmem:[#allocation5 + $0x12c] sm:$0xf]
        %v2582 = vld [vmem:[#allocation5 + $0x130] sm:$0xf]
        %v2583 = vld [vmem:[#allocation5 + $0x134] sm:$0xf]
        %v2584 = vld [vmem:[#allocation5 + $0x138] sm:$0xf]
        %v2585 = vld [vmem:[#allocation5 + $0x13c] sm:$0xf]
        %v2586 = vld [vmem:[#allocation5 + $0x140] sm:$0xf]
        %v2587 = vld [vmem:[#allocation5 + $0x144] sm:$0xf]
        %v2588 = vld [vmem:[#allocation5 + $0x148] sm:$0xf]
        %v2589 = vld [vmem:[#allocation5 + $0x14c] sm:$0xf]
        %v2590 = vld [vmem:[#allocation5 + $0x150] sm:$0xf]
        %v2591 = vld [vmem:[#allocation5 + $0x154] sm:$0xf]
        %v2592 = vld [vmem:[#allocation5 + $0x158] sm:$0xf]
        %v2593 = vld [vmem:[#allocation5 + $0x15c] sm:$0xf]
        %v2594 = vld [vmem:[#allocation5 + $0x160] sm:$0xf]
        %v2595 = vld [vmem:[#allocation5 + $0x164] sm:$0xf]
        %v2596 = vld [vmem:[#allocation5 + $0x168] sm:$0xf]
        %v2597 = vld [vmem:[#allocation5 + $0x16c] sm:$0xf]
        %v2598 = vld [vmem:[#allocation5 + $0x170] sm:$0xf]
        %v2599 = vld [vmem:[#allocation5 + $0x174] sm:$0xf]
        %v2600 = vld [vmem:[#allocation5 + $0x178] sm:$0xf]
        %v2601 = vld [vmem:[#allocation5 + $0x17c] sm:$0xf]
        %v2602 = vld [vmem:[#allocation5 + $0x180] sm:$0xf]
        %v2603 = vld [vmem:[#allocation5 + $0x184] sm:$0xf]
        %v2604 = vld [vmem:[#allocation5 + $0x188] sm:$0xf]
        %v2605 = vld [vmem:[#allocation5 + $0x18c] sm:$0xf]
        %v2606 = vld [vmem:[#allocation5 + $0x190] sm:$0xf]
        %v2607 = vld [vmem:[#allocation5 + $0x194] sm:$0xf]
        %v2608 = vld [vmem:[#allocation5 + $0x198] sm:$0xf]
        %v2609 = vld [vmem:[#allocation5 + $0x19c] sm:$0xf]
        %v2610 = vld [vmem:[#allocation5 + $0x1a0] sm:$0xf]
        %v2611 = vld [vmem:[#allocation5 + $0x1a4] sm:$0xf]
        %v2612 = vld [vmem:[#allocation5 + $0x1a8] sm:$0xf]
        %v2613 = vld [vmem:[#allocation5 + $0x1ac] sm:$0xf]
        %v2614 = vld [vmem:[#allocation5 + $0x1b0] sm:$0xf]
        %v2615 = vld [vmem:[#allocation5 + $0x1b4] sm:$0xf]
        %v2616 = vld [vmem:[#allocation5 + $0x1b8] sm:$0xf]
        %v2617 = vld [vmem:[#allocation5 + $0x1bc] sm:$0xf]
        %v2618 = vld [vmem:[#allocation5 + $0x1c0] sm:$0xf]
        %v2619 = vld [vmem:[#allocation5 + $0x1c4] sm:$0xf]
        %v2620 = vld [vmem:[#allocation5 + $0x1c8] sm:$0xf]
        %v2621 = vld [vmem:[#allocation5 + $0x1cc] sm:$0xf]
        %v2622 = vld [vmem:[#allocation5 + $0x1d0] sm:$0xf]
        %v2623 = vld [vmem:[#allocation5 + $0x1d4] sm:$0xf]
        %v2624 = vld [vmem:[#allocation5 + $0x1d8] sm:$0xf]
        %v2625 = vld [vmem:[#allocation5 + $0x1dc] sm:$0xf]
        %v2626 = vld [vmem:[#allocation5 + $0x1e0] sm:$0xf]
        %v2627 = vld [vmem:[#allocation5 + $0x1e4] sm:$0xf]
        %v2628 = vld [vmem:[#allocation5 + $0x1e8] sm:$0xf]
        %v2629 = vld [vmem:[#allocation5 + $0x1ec] sm:$0xf]
        %v2630 = vld [vmem:[#allocation5 + $0x1f0] sm:$0xf]
        %v2631 = vld [vmem:[#allocation5 + $0x1f4] sm:$0xf]
        %v2632 = vld [vmem:[#allocation5 + $0x1f8] sm:$0xf]
        %v2633 = vld [vmem:[#allocation5 + $0x1fc] sm:$0xf]
        %v2634 = vld [vmem:[#allocation5 + $0x200] sm:$0xf]
        %v2635 = vld [vmem:[#allocation5 + $0x204] sm:$0xf]
        %v2636 = vld [vmem:[#allocation5 + $0x208] sm:$0xf]
        %v2637 = vld [vmem:[#allocation5 + $0x20c] sm:$0xf]
        %v2638 = vld [vmem:[#allocation5 + $0x210] sm:$0xf]
        %v2639 = vld [vmem:[#allocation5 + $0x214] sm:$0xf]
        %v2640 = vld [vmem:[#allocation5 + $0x218] sm:$0xf]
        %v2641 = vld [vmem:[#allocation5 + $0x21c] sm:$0xf]
        %v2642 = vld [vmem:[#allocation5 + $0x220] sm:$0xf]
        %v2643 = vld [vmem:[#allocation5 + $0x224] sm:$0xf]
        %v2644 = vld [vmem:[#allocation5 + $0x228] sm:$0xf]
        %v2645 = vld [vmem:[#allocation5 + $0x22c] sm:$0xf]
        %v2646 = vld [vmem:[#allocation5 + $0x230] sm:$0xf]
        %v2647 = vld [vmem:[#allocation5 + $0x234] sm:$0xf]
        %v2648 = vld [vmem:[#allocation5 + $0x238] sm:$0xf]
        %v2649 = vld [vmem:[#allocation5 + $0x23c] sm:$0xf]
        %v2794 = vunpack.c.l.b16 %v2506
        %v2795 = vunpack.c.l.b16 %v2507
        %v2796 = vunpack.c.l.b16 %v2508
        %v2797 = vunpack.c.l.b16 %v2509
        %v2798 = vunpack.c.l.b16 %v2510
        %v2799 = vunpack.c.l.b16 %v2511
        %v2800 = vunpack.c.l.b16 %v2512
        %v2801 = vunpack.c.l.b16 %v2513
        %v2802 = vunpack.c.l.b16 %v2514
        %v2803 = vunpack.c.l.b16 %v2515
        %v2804 = vunpack.c.l.b16 %v2516
        %v2805 = vunpack.c.l.b16 %v2517
        %v2806 = vunpack.c.l.b16 %v2518
        %v2807 = vunpack.c.l.b16 %v2519
        %v2808 = vunpack.c.l.b16 %v2520
        %v2809 = vunpack.c.l.b16 %v2521
        %v2810 = vunpack.c.l.b16 %v2522
        %v2811 = vunpack.c.l.b16 %v2523
        %v2812 = vunpack.c.l.b16 %v2524
        %v2813 = vunpack.c.l.b16 %v2525
        %v2814 = vunpack.c.l.b16 %v2526
        %v2815 = vunpack.c.l.b16 %v2527
        %v2816 = vunpack.c.l.b16 %v2528
        %v2817 = vunpack.c.l.b16 %v2529
        %v2818 = vunpack.c.l.b16 %v2530
        %v2819 = vunpack.c.l.b16 %v2531
        %v2820 = vunpack.c.l.b16 %v2532
        %v2821 = vunpack.c.l.b16 %v2533
        %v2822 = vunpack.c.l.b16 %v2534
        %v2823 = vunpack.c.l.b16 %v2535
        %v2824 = vunpack.c.l.b16 %v2536
        %v2825 = vunpack.c.l.b16 %v2537
        %v2826 = vunpack.c.l.b16 %v2538
        %v2827 = vunpack.c.l.b16 %v2539
        %v2828 = vunpack.c.l.b16 %v2540
        %v2829 = vunpack.c.l.b16 %v2541
        %v2830 = vunpack.c.l.b16 %v2542
        %v2831 = vunpack.c.l.b16 %v2543
        %v2832 = vunpack.c.l.b16 %v2544
        %v2833 = vunpack.c.l.b16 %v2545
        %v2834 = vunpack.c.l.b16 %v2546
        %v2835 = vunpack.c.l.b16 %v2547
        %v2836 = vunpack.c.l.b16 %v2548
        %v2837 = vunpack.c.l.b16 %v2549
        %v2838 = vunpack.c.l.b16 %v2550
        %v2839 = vunpack.c.l.b16 %v2551
        %v2840 = vunpack.c.l.b16 %v2552
        %v2841 = vunpack.c.l.b16 %v2553
        %v2842 = vunpack.c.l.b16 %v2554
        %v2843 = vunpack.c.l.b16 %v2555
        %v2844 = vunpack.c.l.b16 %v2556
        %v2845 = vunpack.c.l.b16 %v2557
        %v2846 = vunpack.c.l.b16 %v2558
        %v2847 = vunpack.c.l.b16 %v2559
        %v2848 = vunpack.c.l.b16 %v2560
        %v2849 = vunpack.c.l.b16 %v2561
        %v2850 = vunpack.c.l.b16 %v2562
        %v2851 = vunpack.c.l.b16 %v2563
        %v2852 = vunpack.c.l.b16 %v2564
        %v2853 = vunpack.c.l.b16 %v2565
        %v2854 = vunpack.c.l.b16 %v2566
        %v2855 = vunpack.c.l.b16 %v2567
        %v2856 = vunpack.c.l.b16 %v2568
        %v2857 = vunpack.c.l.b16 %v2569
        %v2858 = vunpack.c.l.b16 %v2570
        %v2859 = vunpack.c.l.b16 %v2571
        %v2860 = vunpack.c.l.b16 %v2572
        %v2861 = vunpack.c.l.b16 %v2573
        %v2862 = vunpack.c.l.b16 %v2574
        %v2863 = vunpack.c.l.b16 %v2575
        %v2864 = vunpack.c.l.b16 %v2576
        %v2865 = vunpack.c.l.b16 %v2577
        %v2866 = vunpack.c.l.b16 %v2578
        %v2867 = vunpack.c.l.b16 %v2579
        %v2868 = vunpack.c.l.b16 %v2580
        %v2869 = vunpack.c.l.b16 %v2581
        %v2870 = vunpack.c.l.b16 %v2582
        %v2871 = vunpack.c.l.b16 %v2583
        %v2872 = vunpack.c.l.b16 %v2584
        %v2873 = vunpack.c.l.b16 %v2585
        %v2874 = vunpack.c.l.b16 %v2586
        %v2875 = vunpack.c.l.b16 %v2587
        %v2876 = vunpack.c.l.b16 %v2588
        %v2877 = vunpack.c.l.b16 %v2589
        %v2878 = vunpack.c.l.b16 %v2590
        %v2879 = vunpack.c.l.b16 %v2591
        %v2880 = vunpack.c.l.b16 %v2592
        %v2881 = vunpack.c.l.b16 %v2593
        %v2882 = vunpack.c.l.b16 %v2594
        %v2883 = vunpack.c.l.b16 %v2595
        %v2884 = vunpack.c.l.b16 %v2596
        %v2885 = vunpack.c.l.b16 %v2597
        %v2886 = vunpack.c.l.b16 %v2598
        %v2887 = vunpack.c.l.b16 %v2599
        %v2888 = vunpack.c.l.b16 %v2600
        %v2889 = vunpack.c.l.b16 %v2601
        %v2890 = vunpack.c.l.b16 %v2602
        %v2891 = vunpack.c.l.b16 %v2603
        %v2892 = vunpack.c.l.b16 %v2604
        %v2893 = vunpack.c.l.b16 %v2605
        %v2894 = vunpack.c.l.b16 %v2606
        %v2895 = vunpack.c.l.b16 %v2607
        %v2896 = vunpack.c.l.b16 %v2608
        %v2897 = vunpack.c.l.b16 %v2609
        %v2898 = vunpack.c.l.b16 %v2610
        %v2899 = vunpack.c.l.b16 %v2611
        %v2900 = vunpack.c.l.b16 %v2612
        %v2901 = vunpack.c.l.b16 %v2613
        %v2902 = vunpack.c.l.b16 %v2614
        %v2903 = vunpack.c.l.b16 %v2615
        %v2904 = vunpack.c.l.b16 %v2616
        %v2905 = vunpack.c.l.b16 %v2617
        %v2906 = vunpack.c.l.b16 %v2618
        %v2907 = vunpack.c.l.b16 %v2619
        %v2908 = vunpack.c.l.b16 %v2620
        %v2909 = vunpack.c.l.b16 %v2621
        %v2910 = vunpack.c.l.b16 %v2622
        %v2911 = vunpack.c.l.b16 %v2623
        %v2912 = vunpack.c.l.b16 %v2624
        %v2913 = vunpack.c.l.b16 %v2625
        %v2914 = vunpack.c.l.b16 %v2626
        %v2915 = vunpack.c.l.b16 %v2627
        %v2916 = vunpack.c.l.b16 %v2628
        %v2917 = vunpack.c.l.b16 %v2629
        %v2918 = vunpack.c.l.b16 %v2630
        %v2919 = vunpack.c.l.b16 %v2631
        %v2920 = vunpack.c.l.b16 %v2632
        %v2921 = vunpack.c.l.b16 %v2633
        %v2922 = vunpack.c.l.b16 %v2634
        %v2923 = vunpack.c.l.b16 %v2635
        %v2924 = vunpack.c.l.b16 %v2636
        %v2925 = vunpack.c.l.b16 %v2637
        %v2926 = vunpack.c.l.b16 %v2638
        %v2927 = vunpack.c.l.b16 %v2639
        %v2928 = vunpack.c.l.b16 %v2640
        %v2929 = vunpack.c.l.b16 %v2641
        %v2930 = vunpack.c.l.b16 %v2642
        %v2931 = vunpack.c.l.b16 %v2643
        %v2932 = vunpack.c.l.b16 %v2644
        %v2933 = vunpack.c.l.b16 %v2645
        %v2934 = vunpack.c.l.b16 %v2646
        %v2935 = vunpack.c.l.b16 %v2647
        %v2936 = vunpack.c.l.b16 %v2648
        %v2937 = vunpack.c.l.b16 %v2649
        %v2938 = vpack.c.b16 %v2795, %v2794
        %v2939 = vpack.c.b16 %v2797, %v2796
        %v2940 = vpack.c.b16 %v2799, %v2798
        %v2941 = vpack.c.b16 %v2801, %v2800
        %v2942 = vpack.c.b16 %v2803, %v2802
        %v2943 = vpack.c.b16 %v2805, %v2804
        %v2944 = vpack.c.b16 %v2807, %v2806
        %v2945 = vpack.c.b16 %v2809, %v2808
        %v2946 = vpack.c.b16 %v2811, %v2810
        %v2947 = vpack.c.b16 %v2813, %v2812
        %v2948 = vpack.c.b16 %v2815, %v2814
        %v2949 = vpack.c.b16 %v2817, %v2816
        %v2950 = vpack.c.b16 %v2819, %v2818
        %v2951 = vpack.c.b16 %v2821, %v2820
        %v2952 = vpack.c.b16 %v2823, %v2822
        %v2953 = vpack.c.b16 %v2825, %v2824
        %v2954 = vpack.c.b16 %v2827, %v2826
        %v2955 = vpack.c.b16 %v2829, %v2828
        %v2956 = vpack.c.b16 %v2831, %v2830
        %v2957 = vpack.c.b16 %v2833, %v2832
        %v2958 = vpack.c.b16 %v2835, %v2834
        %v2959 = vpack.c.b16 %v2837, %v2836
        %v2960 = vpack.c.b16 %v2839, %v2838
        %v2961 = vpack.c.b16 %v2841, %v2840
        %v2962 = vpack.c.b16 %v2843, %v2842
        %v2963 = vpack.c.b16 %v2845, %v2844
        %v2964 = vpack.c.b16 %v2847, %v2846
        %v2965 = vpack.c.b16 %v2849, %v2848
        %v2966 = vpack.c.b16 %v2851, %v2850
        %v2967 = vpack.c.b16 %v2853, %v2852
        %v2968 = vpack.c.b16 %v2855, %v2854
        %v2969 = vpack.c.b16 %v2857, %v2856
        %v2970 = vpack.c.b16 %v2859, %v2858
        %v2971 = vpack.c.b16 %v2861, %v2860
        %v2972 = vpack.c.b16 %v2863, %v2862
        %v2973 = vpack.c.b16 %v2865, %v2864
        %v2974 = vpack.c.b16 %v2867, %v2866
        %v2975 = vpack.c.b16 %v2869, %v2868
        %v2976 = vpack.c.b16 %v2871, %v2870
        %v2977 = vpack.c.b16 %v2873, %v2872
        %v2978 = vpack.c.b16 %v2875, %v2874
        %v2979 = vpack.c.b16 %v2877, %v2876
        %v2980 = vpack.c.b16 %v2879, %v2878
        %v2981 = vpack.c.b16 %v2881, %v2880
        %v2982 = vpack.c.b16 %v2883, %v2882
        %v2983 = vpack.c.b16 %v2885, %v2884
        %v2984 = vpack.c.b16 %v2887, %v2886
        %v2985 = vpack.c.b16 %v2889, %v2888
        %v2986 = vpack.c.b16 %v2891, %v2890
        %v2987 = vpack.c.b16 %v2893, %v2892
        %v2988 = vpack.c.b16 %v2895, %v2894
        %v2989 = vpack.c.b16 %v2897, %v2896
        %v2990 = vpack.c.b16 %v2899, %v2898
        %v2991 = vpack.c.b16 %v2901, %v2900
        %v2992 = vpack.c.b16 %v2903, %v2902
        %v2993 = vpack.c.b16 %v2905, %v2904
        %v2994 = vpack.c.b16 %v2907, %v2906
        %v2995 = vpack.c.b16 %v2909, %v2908
        %v2996 = vpack.c.b16 %v2911, %v2910
        %v2997 = vpack.c.b16 %v2913, %v2912
        %v2998 = vpack.c.b16 %v2915, %v2914
        %v2999 = vpack.c.b16 %v2917, %v2916
        %v3000 = vpack.c.b16 %v2919, %v2918
        %v3001 = vpack.c.b16 %v2921, %v2920
        %v3002 = vpack.c.b16 %v2923, %v2922
        %v3003 = vpack.c.b16 %v2925, %v2924
        %v3004 = vpack.c.b16 %v2927, %v2926
        %v3005 = vpack.c.b16 %v2929, %v2928
        %v3006 = vpack.c.b16 %v2931, %v2930
        %v3007 = vpack.c.b16 %v2933, %v2932
        %v3008 = vpack.c.b16 %v2935, %v2934
        %v3009 = vpack.c.b16 %v2937, %v2936
        %3082 = vmatprep.subr.bf16.mxu0 0
        %3083 = vmatpush1.bf16.msra.mxu0 %v2938
        %3084 = vmatprep.subr.bf16.mxu0 0
        %3085 = vmatpush1.bf16.msra.mxu0 %v2939
        %3086 = vmatprep.subr.bf16.mxu0 0
        %3087 = vmatpush1.bf16.msra.mxu0 %v2940
        %3088 = vmatprep.subr.bf16.mxu0 0
        %3089 = vmatpush1.bf16.msra.mxu0 %v2941
        %3090 = vmatprep.subr.bf16.mxu0 0
        %3091 = vmatpush1.bf16.msra.mxu0 %v2942
        %3092 = vmatprep.subr.bf16.mxu0 0
        %3093 = vmatpush1.bf16.msra.mxu0 %v2943
        %3094 = vmatprep.subr.bf16.mxu0 0
        %3095 = vmatpush1.bf16.msra.mxu0 %v2944
        %3096 = vmatprep.subr.bf16.mxu0 0
        %3097 = vmatpush1.bf16.msra.mxu0 %v2945
        %3098 = vmatprep.subr.bf16.mxu0 0
        %3099 = vmatpush1.bf16.msra.mxu0 %v2946
        %3100 = vmatprep.subr.bf16.mxu0 0
        %3101 = vmatpush1.bf16.msra.mxu0 %v2947
        %3102 = vmatprep.subr.bf16.mxu0 0
        %3103 = vmatpush1.bf16.msra.mxu0 %v2948
        %3104 = vmatprep.subr.bf16.mxu0 0
        %3105 = vmatpush1.bf16.msra.mxu0 %v2949
        %3106 = vmatprep.subr.bf16.mxu0 0
        %3107 = vmatpush1.bf16.msra.mxu0 %v2950
        %3108 = vmatprep.subr.bf16.mxu0 0
        %3109 = vmatpush1.bf16.msra.mxu0 %v2951
        %3110 = vmatprep.subr.bf16.mxu0 0
        %3111 = vmatpush1.bf16.msra.mxu0 %v2952
        %3112 = vmatprep.subr.bf16.mxu0 0
        %3113 = vmatpush1.bf16.msra.mxu0 %v2953
        %3114 = vmatprep.mubr.bf16.mxu0 %v2471
        %3115 = vmatmul.mubr.bf16.gmra.mrb[0].mxu0 %v2470
        %v3116 = vpop.f32.mrb[0].mxu0
        %v3117 = vadd.f32 0.0, %v3116
        %v3118 = vpop.f32.mrb[0].mxu0
        %v3119 = vpop.f32.mrb[0].mxu0
        %v3120 = vadd.f32 0.0, %v3119
        %v3121 = vpop.f32.mrb[0].mxu0
        %3122 = vmatprep.mubr.bf16.mxu0 %v2480
        %3123 = vmatmul.mubr.bf16.gmra.mrb[0].mxu0 %v2479
        %v3124 = vpop.f32.mrb[0].mxu0
        %v3125 = vadd.f32 0.0, %v3124
        %v3126 = vpop.f32.mrb[0].mxu0
        %v3127 = vpop.f32.mrb[0].mxu0
        %v3128 = vadd.f32 0.0, %v3127
        %v3129 = vpop.f32.mrb[0].mxu0
        %3130 = vmatprep.mubr.bf16.mxu0 %v2489
        %3131 = vmatmul.mubr.bf16.gmra.mrb[0].mxu0 %v2488
        %v3132 = vpop.f32.mrb[0].mxu0
        %v3133 = vadd.f32 0.0, %v3132
        %v3134 = vpop.f32.mrb[0].mxu0
        %v3135 = vpop.f32.mrb[0].mxu0
        %v3136 = vadd.f32 0.0, %v3135
        %v3137 = vpop.f32.mrb[0].mxu0
        %3138 = vmatprep.mubr.bf16.mxu0 %v2498
        %3139 = vmatmul.mubr.bf16.gmra.mrb[0].mxu0 %v2497
        %v3140 = vpop.f32.mrb[0].mxu0
        %v3141 = vadd.f32 0.0, %v3140
        %v3142 = vpop.f32.mrb[0].mxu0
        %v3143 = vpop.f32.mrb[0].mxu0
        %v3144 = vadd.f32 0.0, %v3143
        %v3145 = vpop.f32.mrb[0].mxu0
        %3146 = vdwg.mxu0
        %3147 = vmatprep.subr.bf16.mxu0 0
        %3148 = vmatpush1.bf16.msra.mxu0 %v2954
        %3149 = vmatprep.subr.bf16.mxu0 0
        %3150 = vmatpush1.bf16.msra.mxu0 %v2955
        %3151 = vmatprep.subr.bf16.mxu0 0
        %3152 = vmatpush1.bf16.msra.mxu0 %v2956
        %3153 = vmatprep.subr.bf16.mxu0 0
        %3154 = vmatpush1.bf16.msra.mxu0 %v2957
        %3155 = vmatprep.subr.bf16.mxu0 0
        %3156 = vmatpush1.bf16.msra.mxu0 %v2958
        %3157 = vmatprep.subr.bf16.mxu0 0
        %3158 = vmatpush1.bf16.msra.mxu0 %v2959
        %3159 = vmatprep.subr.bf16.mxu0 0
        %3160 = vmatpush1.bf16.msra.mxu0 %v2960
        %3161 = vmatprep.subr.bf16.mxu0 0
        %3162 = vmatpush1.bf16.msra.mxu0 %v2961
        %3163 = vmatprep.subr.bf16.mxu0 0
        %3164 = vmatpush1.bf16.msra.mxu0 %v2962
        %3165 = vmatprep.subr.bf16.mxu0 0
        %3166 = vmatpush1.bf16.msra.mxu0 %v2963
        %3167 = vmatprep.subr.bf16.mxu0 0
        %3168 = vmatpush1.bf16.msra.mxu0 %v2964
        %3169 = vmatprep.subr.bf16.mxu0 0
        %3170 = vmatpush1.bf16.msra.mxu0 %v2965
        %3171 = vmatprep.subr.bf16.mxu0 0
        %3172 = vmatpush1.bf16.msra.mxu0 %v2966
        %3173 = vmatprep.subr.bf16.mxu0 0
        %3174 = vmatpush1.bf16.msra.mxu0 %v2967
        %3175 = vmatprep.subr.bf16.mxu0 0
        %3176 = vmatpush1.bf16.msra.mxu0 %v2968
        %3177 = vmatprep.subr.bf16.mxu0 0
        %3178 = vmatpush1.bf16.msra.mxu0 %v2969
        %3179 = vmatprep.mubr.bf16.mxu0 %v2473
        %3180 = vmatmul.mubr.bf16.gmra.mrb[0].mxu0 %v2472
        %v3181 = vpop.f32.mrb[0].mxu0
        %v3182 = vadd.f32 %v3117, %v3181
        %v3183 = vpop.f32.mrb[0].mxu0
        %v3184 = vpop.f32.mrb[0].mxu0
        %v3185 = vadd.f32 %v3120, %v3184
        %v3186 = vpop.f32.mrb[0].mxu0
        %3187 = vmatprep.mubr.bf16.mxu0 %v2482
        %3188 = vmatmul.mubr.bf16.gmra.mrb[0].mxu0 %v2481
        %v3189 = vpop.f32.mrb[0].mxu0
        %v3190 = vadd.f32 %v3125, %v3189
        %v3191 = vpop.f32.mrb[0].mxu0
        %v3192 = vpop.f32.mrb[0].mxu0
        %v3193 = vadd.f32 %v3128, %v3192
        %v3194 = vpop.f32.mrb[0].mxu0
        %3195 = vmatprep.mubr.bf16.mxu0 %v2491
        %3196 = vmatmul.mubr.bf16.gmra.mrb[0].mxu0 %v2490
        %v3197 = vpop.f32.mrb[0].mxu0
        %v3198 = vadd.f32 %v3133, %v3197
        %v3199 = vpop.f32.mrb[0].mxu0
        %v3200 = vpop.f32.mrb[0].mxu0
        %v3201 = vadd.f32 %v3136, %v3200
        %v3202 = vpop.f32.mrb[0].mxu0
        %3203 = vmatprep.mubr.bf16.mxu0 %v2500
        %3204 = vmatmul.mubr.bf16.gmra.mrb[0].mxu0 %v2499
        %v3205 = vpop.f32.mrb[0].mxu0
        %v3206 = vadd.f32 %v3141, %v3205
        %v3207 = vpop.f32.mrb[0].mxu0
        %v3208 = vpop.f32.mrb[0].mxu0
        %v3209 = vadd.f32 %v3144, %v3208
        %v3210 = vpop.f32.mrb[0].mxu0
        %3211 = vdwg.mxu0
        %3212 = vmatprep.subr.bf16.mxu0 0
        %3213 = vmatpush1.bf16.msra.mxu0 %v2970
        %3214 = vmatprep.subr.bf16.mxu0 0
        %3215 = vmatpush1.bf16.msra.mxu0 %v2971
        %3216 = vmatprep.subr.bf16.mxu0 0
        %3217 = vmatpush1.bf16.msra.mxu0 %v2972
        %3218 = vmatprep.subr.bf16.mxu0 0
        %3219 = vmatpush1.bf16.msra.mxu0 %v2973
        %3220 = vmatprep.subr.bf16.mxu0 0
        %3221 = vmatpush1.bf16.msra.mxu0 %v2974
        %3222 = vmatprep.subr.bf16.mxu0 0
        %3223 = vmatpush1.bf16.msra.mxu0 %v2975
        %3224 = vmatprep.subr.bf16.mxu0 0
        %3225 = vmatpush1.bf16.msra.mxu0 %v2976
        %3226 = vmatprep.subr.bf16.mxu0 0
        %3227 = vmatpush1.bf16.msra.mxu0 %v2977
        %3228 = vmatprep.subr.bf16.mxu0 0
        %3229 = vmatpush1.bf16.msra.mxu0 %v2978
        %3230 = vmatprep.subr.bf16.mxu0 0
        %3231 = vmatpush1.bf16.msra.mxu0 %v2979
        %3232 = vmatprep.subr.bf16.mxu0 0
        %3233 = vmatpush1.bf16.msra.mxu0 %v2980
        %3234 = vmatprep.subr.bf16.mxu0 0
        %3235 = vmatpush1.bf16.msra.mxu0 %v2981
        %3236 = vmatprep.subr.bf16.mxu0 0
        %3237 = vmatpush1.bf16.msra.mxu0 %v2982
        %3238 = vmatprep.subr.bf16.mxu0 0
        %3239 = vmatpush1.bf16.msra.mxu0 %v2983
        %3240 = vmatprep.subr.bf16.mxu0 0
        %3241 = vmatpush1.bf16.msra.mxu0 %v2984
        %3242 = vmatprep.subr.bf16.mxu0 0
        %3243 = vmatpush1.bf16.msra.mxu0 %v2985
        %3244 = vmatprep.mubr.bf16.mxu0 %v2475
        %3245 = vmatmul.mubr.bf16.gmra.mrb[0].mxu0 %v2474
        %v3246 = vpop.f32.mrb[0].mxu0
        %v3247 = vadd.f32 %v3182, %v3246
        %v3248 = vpop.f32.mrb[0].mxu0
        %v3249 = vpop.f32.mrb[0].mxu0
        %v3250 = vadd.f32 %v3185, %v3249
        %v3251 = vpop.f32.mrb[0].mxu0
        %3252 = vmatprep.mubr.bf16.mxu0 %v2484
        %3253 = vmatmul.mubr.bf16.gmra.mrb[0].mxu0 %v2483
        %v3254 = vpop.f32.mrb[0].mxu0
        %v3255 = vadd.f32 %v3190, %v3254
        %v3256 = vpop.f32.mrb[0].mxu0
        %v3257 = vpop.f32.mrb[0].mxu0
        %v3258 = vadd.f32 %v3193, %v3257
        %v3259 = vpop.f32.mrb[0].mxu0
        %3260 = vmatprep.mubr.bf16.mxu0 %v2493
        %3261 = vmatmul.mubr.bf16.gmra.mrb[0].mxu0 %v2492
        %v3262 = vpop.f32.mrb[0].mxu0
        %v3263 = vadd.f32 %v3198, %v3262
        %v3264 = vpop.f32.mrb[0].mxu0
        %v3265 = vpop.f32.mrb[0].mxu0
        %v3266 = vadd.f32 %v3201, %v3265
        %v3267 = vpop.f32.mrb[0].mxu0
        %3268 = vmatprep.mubr.bf16.mxu0 %v2502
        %3269 = vmatmul.mubr.bf16.gmra.mrb[0].mxu0 %v2501
        %v3270 = vpop.f32.mrb[0].mxu0
        %v3271 = vadd.f32 %v3206, %v3270
        %v3272 = vpop.f32.mrb[0].mxu0
        %v3273 = vpop.f32.mrb[0].mxu0
        %v3274 = vadd.f32 %v3209, %v3273
        %v3275 = vpop.f32.mrb[0].mxu0
        %3276 = vdwg.mxu0
        %3277 = vmatprep.subr.bf16.mxu0 0
        %3278 = vmatpush1.bf16.msra.mxu0 %v2986
        %3279 = vmatprep.subr.bf16.mxu0 0
        %3280 = vmatpush1.bf16.msra.mxu0 %v2987
        %3281 = vmatprep.subr.bf16.mxu0 0
        %3282 = vmatpush1.bf16.msra.mxu0 %v2988
        %3283 = vmatprep.subr.bf16.mxu0 0
        %3284 = vmatpush1.bf16.msra.mxu0 %v2989
        %3285 = vmatprep.subr.bf16.mxu0 0
        %3286 = vmatpush1.bf16.msra.mxu0 %v2990
        %3287 = vmatprep.subr.bf16.mxu0 0
        %3288 = vmatpush1.bf16.msra.mxu0 %v2991
        %3289 = vmatprep.subr.bf16.mxu0 0
        %3290 = vmatpush1.bf16.msra.mxu0 %v2992
        %3291 = vmatprep.subr.bf16.mxu0 0
        %3292 = vmatpush1.bf16.msra.mxu0 %v2993
        %3293 = vmatprep.subr.bf16.mxu0 0
        %3294 = vmatpush1.bf16.msra.mxu0 %v2994
        %3295 = vmatprep.subr.bf16.mxu0 0
        %3296 = vmatpush1.bf16.msra.mxu0 %v2995
        %3297 = vmatprep.subr.bf16.mxu0 0
        %3298 = vmatpush1.bf16.msra.mxu0 %v2996
        %3299 = vmatprep.subr.bf16.mxu0 0
        %3300 = vmatpush1.bf16.msra.mxu0 %v2997
        %3301 = vmatprep.subr.bf16.mxu0 0
        %3302 = vmatpush1.bf16.msra.mxu0 %v2998
        %3303 = vmatprep.subr.bf16.mxu0 0
        %3304 = vmatpush1.bf16.msra.mxu0 %v2999
        %3305 = vmatprep.subr.bf16.mxu0 0
        %3306 = vmatpush1.bf16.msra.mxu0 %v3000
        %3307 = vmatprep.subr.bf16.mxu0 0
        %3308 = vmatpush1.bf16.msra.mxu0 %v3001
        %3309 = vmatprep.mubr.bf16.mxu0 %v2477
        %3310 = vmatmul.mubr.bf16.gmra.mrb[0].mxu0 %v2476
        %v3311 = vpop.f32.mrb[0].mxu0
        %v3312 = vadd.f32 %v3247, %v3311
        %v3313 = vpop.f32.mrb[0].mxu0
        %v3314 = vpop.f32.mrb[0].mxu0
        %v3315 = vadd.f32 %v3250, %v3314
        %v3316 = vpop.f32.mrb[0].mxu0
        %3317 = vmatprep.mubr.bf16.mxu0 %v2486
        %3318 = vmatmul.mubr.bf16.gmra.mrb[0].mxu0 %v2485
        %v3319 = vpop.f32.mrb[0].mxu0
        %v3320 = vadd.f32 %v3255, %v3319
        %v3321 = vpop.f32.mrb[0].mxu0
        %v3322 = vpop.f32.mrb[0].mxu0
        %v3323 = vadd.f32 %v3258, %v3322
        %v3324 = vpop.f32.mrb[0].mxu0
        %3325 = vmatprep.mubr.bf16.mxu0 %v2495
        %3326 = vmatmul.mubr.bf16.gmra.mrb[0].mxu0 %v2494
        %v3327 = vpop.f32.mrb[0].mxu0
        %v3328 = vadd.f32 %v3263, %v3327
        %v3329 = vpop.f32.mrb[0].mxu0
        %v3330 = vpop.f32.mrb[0].mxu0
        %v3331 = vadd.f32 %v3266, %v3330
        %v3332 = vpop.f32.mrb[0].mxu0
        %3333 = vmatprep.mubr.bf16.mxu0 %v2504
        %3334 = vmatmul.mubr.bf16.gmra.mrb[0].mxu0 %v2503
        %v3335 = vpop.f32.mrb[0].mxu0
        %v3336 = vadd.f32 %v3271, %v3335
        %v3337 = vpop.f32.mrb[0].mxu0
        %v3338 = vpop.f32.mrb[0].mxu0
        %v3339 = vadd.f32 %v3274, %v3338
        %v3340 = vpop.f32.mrb[0].mxu0
        %3341 = vdwg.mxu0
        %3342 = vmatprep.subr.bf16.mxu0 0
        %3343 = vmatpush1.bf16.msra.mxu0 %v3002
        %3344 = vmatprep.subr.bf16.mxu0 0
        %3345 = vmatpush1.bf16.msra.mxu0 %v3003
        %3346 = vmatprep.subr.bf16.mxu0 0
        %3347 = vmatpush1.bf16.msra.mxu0 %v3004
        %3348 = vmatprep.subr.bf16.mxu0 0
        %3349 = vmatpush1.bf16.msra.mxu0 %v3005
        %3350 = vmatprep.subr.bf16.mxu0 0
        %3351 = vmatpush1.bf16.msra.mxu0 %v3006
        %3352 = vmatprep.subr.bf16.mxu0 0
        %3353 = vmatpush1.bf16.msra.mxu0 %v3007
        %3354 = vmatprep.subr.bf16.mxu0 0
        %3355 = vmatpush1.bf16.msra.mxu0 %v3008
        %3356 = vmatprep.subr.bf16.mxu0 0
        %3357 = vmatpush1.bf16.msra.mxu0 %v3009
        %3358 = vmatprep.subr.bf16.mxu0 0
        %3359 = vmatpush1.bf16.msra.mxu0 0
        %3360 = vmatprep.subr.bf16.mxu0 0
        %3361 = vmatpush1.bf16.msra.mxu0 0
        %3362 = vmatprep.subr.bf16.mxu0 0
        %3363 = vmatpush1.bf16.msra.mxu0 0
        %3364 = vmatprep.subr.bf16.mxu0 0
        %3365 = vmatpush1.bf16.msra.mxu0 0
        %3366 = vmatprep.subr.bf16.mxu0 0
        %3367 = vmatpush1.bf16.msra.mxu0 0
        %3368 = vmatprep.subr.bf16.mxu0 0
        %3369 = vmatpush1.bf16.msra.mxu0 0
        %3370 = vmatprep.subr.bf16.mxu0 0
        %3371 = vmatpush1.bf16.msra.mxu0 0
        %3372 = vmatprep.subr.bf16.mxu0 0
        %3373 = vmatpush1.bf16.msra.mxu0 0
        %3374 = vmatprep.mubr.bf16.mxu0 0
        %3375 = vmatmul.mubr.bf16.gmra.mrb[0].mxu0 %v2478
        %v3376 = vpop.f32.mrb[0].mxu0
        %v3377 = vadd.f32 %v3312, %v3376
        %v3378 = vpop.f32.mrb[0].mxu0
        %v3379 = vpop.f32.mrb[0].mxu0
        %v3380 = vadd.f32 %v3315, %v3379
        %v3381 = vpop.f32.mrb[0].mxu0
        %3382 = vmatprep.mubr.bf16.mxu0 0
        %3383 = vmatmul.mubr.bf16.gmra.mrb[0].mxu0 %v2487
        %v3384 = vpop.f32.mrb[0].mxu0
        %v3385 = vadd.f32 %v3320, %v3384
        %v3386 = vpop.f32.mrb[0].mxu0
        %v3387 = vpop.f32.mrb[0].mxu0
        %v3388 = vadd.f32 %v3323, %v3387
        %v3389 = vpop.f32.mrb[0].mxu0
        %3390 = vmatprep.mubr.bf16.mxu0 0
        %3391 = vmatmul.mubr.bf16.gmra.mrb[0].mxu0 %v2496
        %v3392 = vpop.f32.mrb[0].mxu0
        %v3393 = vadd.f32 %v3328, %v3392
        %v3394 = vpop.f32.mrb[0].mxu0
        %v3395 = vpop.f32.mrb[0].mxu0
        %v3396 = vadd.f32 %v3331, %v3395
        %v3397 = vpop.f32.mrb[0].mxu0
        %3398 = vmatprep.mubr.bf16.mxu0 0
        %3399 = vmatmul.mubr.bf16.gmra.mrb[0].mxu0 %v2505
        %v3400 = vpop.f32.mrb[0].mxu0
        %v3401 = vadd.f32 %v3336, %v3400
        %v3402 = vpop.f32.mrb[0].mxu0
        %v3403 = vpop.f32.mrb[0].mxu0
        %v3404 = vadd.f32 %v3339, %v3403
        %v3405 = vpop.f32.mrb[0].mxu0
        %3406 = vdwg.mxu0
        %v3407 = vld [vmem:[%s4 + $0x1] sm:$0x1]
        %v3408 = vld [vmem:[%s5 + $0x1] sm:$0x1]
        %v3409 = vlaneseq
        %v3410 = vshrl.u32 %v3409, 7
        %v3411 = vsub.s32 0, %v3410
        %v3412 = vrot.slane %v3407, %v3411
        %v3413 = vmul.f32 %v3377, %v3412
        %v3414 = vmul.f32 %v3380, %v3412
        %v3415 = vmul.f32 %v3385, %v3412
        %v3416 = vmul.f32 %v3388, %v3412
        %v3417 = vmul.f32 %v3393, %v3412
        %v3418 = vmul.f32 %v3396, %v3412
        %v3419 = vmul.f32 %v3401, %v3412
        %v3420 = vmul.f32 %v3404, %v3412
        %v3421 = vlaneseq
        %v3422 = vshrl.u32 %v3421, 7
        %v3423 = vsub.s32 0, %v3422
        %v3424 = vrot.slane %v3408, %v3423
        %v3425 = vadd.f32 %v3413, %v3424
        %v3426 = vadd.f32 %v3414, %v3424
        %v3427 = vadd.f32 %v3415, %v3424
        %v3428 = vadd.f32 %v3416, %v3424
        %v3429 = vadd.f32 %v3417, %v3424
        %v3430 = vadd.f32 %v3418, %v3424
        %v3431 = vadd.f32 %v3419, %v3424
        %v3432 = vadd.f32 %v3420, %v3424
        %v3433 = vmax.f32 %v3425, 0.0
        %v3434 = vmax.f32 %v3426, 0.0
        %v3435 = vmax.f32 %v3427, 0.0
        %v3436 = vmax.f32 %v3428, 0.0
        %v3437 = vmax.f32 %v3429, 0.0
        %v3438 = vmax.f32 %v3430, 0.0
        %v3439 = vmax.f32 %v3431, 0.0
        %v3440 = vmax.f32 %v3432, 0.0
        %3441 = vst [vmem:[%s2388 + $0x1] sm:$0xff] %v3433
        %3442 = vst [vmem:[%s2388 + $0x11] sm:$0xff] %v3434
        %3443 = vst [vmem:[%s2388 + $0x21] sm:$0xff] %v3435
        %3444 = vst [vmem:[%s2388 + $0x31] sm:$0xff] %v3436
        %3445 = vst [vmem:[%s2388 + $0x41] sm:$0xff] %v3437
        %3446 = vst [vmem:[%s2388 + $0x51] sm:$0xff] %v3438
        %3447 = vst [vmem:[%s2388 + $0x61] sm:$0xff] %v3439
        %3448 = vst [vmem:[%s2388 + $0x71] sm:$0xff] %v3440
        %v3449 = vld [vmem:[#allocation3] sm:$0xff]
        %v3450 = vld [vmem:[#allocation3 + $0x10] sm:$0xff]
        %v3451 = vld [vmem:[#allocation3 + $0x20] sm:$0xff]
        %v3452 = vld [vmem:[#allocation3 + $0x30] sm:$0xff]
        %v3453 = vld [vmem:[#allocation3 + $0x40] sm:$0xff]
        %v3454 = vld [vmem:[#allocation3 + $0x50] sm:$0xff]
        %v3455 = vld [vmem:[#allocation3 + $0x60] sm:$0xff]
        %v3456 = vld [vmem:[#allocation3 + $0x70] sm:$0xff]
        %v3457 = vld [vmem:[#allocation3 + $0x1] sm:$0xff]
        %v3458 = vld [vmem:[#allocation3 + $0x11] sm:$0xff]
        %v3459 = vld [vmem:[#allocation3 + $0x21] sm:$0xff]
        %v3460 = vld [vmem:[#allocation3 + $0x31] sm:$0xff]
        %v3461 = vld [vmem:[#allocation3 + $0x41] sm:$0xff]
        %v3462 = vld [vmem:[#allocation3 + $0x51] sm:$0xff]
        %v3463 = vld [vmem:[#allocation3 + $0x61] sm:$0xff]
        %v3464 = vld [vmem:[#allocation3 + $0x71] sm:$0xff]
        %v3465 = vld [vmem:[#allocation3 + $0x2] sm:$0xff]
        %v3466 = vld [vmem:[#allocation3 + $0x12] sm:$0xff]
        %v3467 = vld [vmem:[#allocation3 + $0x22] sm:$0xff]
        %v3468 = vld [vmem:[#allocation3 + $0x32] sm:$0xff]
        %v3469 = vld [vmem:[#allocation3 + $0x42] sm:$0xff]
        %v3470 = vld [vmem:[#allocation3 + $0x52] sm:$0xff]
        %v3471 = vld [vmem:[#allocation3 + $0x62] sm:$0xff]
        %v3472 = vld [vmem:[#allocation3 + $0x72] sm:$0xff]
        %v3473 = vld [vmem:[%s2388] sm:$0xff]
        %v3474 = vld [vmem:[%s2388 + $0x10] sm:$0xff]
        %v3475 = vld [vmem:[%s2388 + $0x20] sm:$0xff]
        %v3476 = vld [vmem:[%s2388 + $0x30] sm:$0xff]
        %v3477 = vld [vmem:[%s2388 + $0x40] sm:$0xff]
        %v3478 = vld [vmem:[%s2388 + $0x50] sm:$0xff]
        %v3479 = vld [vmem:[%s2388 + $0x60] sm:$0xff]
        %v3480 = vld [vmem:[%s2388 + $0x70] sm:$0xff]
        %v3481 = vld [vmem:[%s2388 + $0x1] sm:$0xff]
        %v3482 = vld [vmem:[%s2388 + $0x11] sm:$0xff]
        %v3483 = vld [vmem:[%s2388 + $0x21] sm:$0xff]
        %v3484 = vld [vmem:[%s2388 + $0x31] sm:$0xff]
        %v3485 = vld [vmem:[%s2388 + $0x41] sm:$0xff]
        %v3486 = vld [vmem:[%s2388 + $0x51] sm:$0xff]
        %v3487 = vld [vmem:[%s2388 + $0x61] sm:$0xff]
        %v3488 = vld [vmem:[%s2388 + $0x71] sm:$0xff]
        %v3489 = vld [vmem:[%s2388 + $0x2] sm:$0xff]
        %v3490 = vld [vmem:[%s2388 + $0x12] sm:$0xff]
        %v3491 = vld [vmem:[%s2388 + $0x22] sm:$0xff]
        %v3492 = vld [vmem:[%s2388 + $0x32] sm:$0xff]
        %v3493 = vld [vmem:[%s2388 + $0x42] sm:$0xff]
        %v3494 = vld [vmem:[%s2388 + $0x52] sm:$0xff]
        %v3495 = vld [vmem:[%s2388 + $0x62] sm:$0xff]
        %v3496 = vld [vmem:[%s2388 + $0x72] sm:$0xff]
        %v3497 = vld [vmem:[%s2445] sm:$0xff]
        %v3498 = vld [vmem:[%s2445 + $0x10] sm:$0xff]
        %v3499 = vld [vmem:[%s2445 + $0x20] sm:$0xff]
        %v3500 = vld [vmem:[%s2445 + $0x30] sm:$0xff]
        %v3501 = vld [vmem:[%s2445 + $0x40] sm:$0xff]
        %v3502 = vld [vmem:[%s2445 + $0x50] sm:$0xff]
        %v3503 = vld [vmem:[%s2445 + $0x60] sm:$0xff]
        %v3504 = vld [vmem:[%s2445 + $0x70] sm:$0xff]
        %v3505 = vld [vmem:[%s2445 + $0x1] sm:$0xff]
        %v3506 = vld [vmem:[%s2445 + $0x11] sm:$0xff]
        %v3507 = vld [vmem:[%s2445 + $0x21] sm:$0xff]
        %v3508 = vld [vmem:[%s2445 + $0x31] sm:$0xff]
        %v3509 = vld [vmem:[%s2445 + $0x41] sm:$0xff]
        %v3510 = vld [vmem:[%s2445 + $0x51] sm:$0xff]
        %v3511 = vld [vmem:[%s2445 + $0x61] sm:$0xff]
        %v3512 = vld [vmem:[%s2445 + $0x71] sm:$0xff]
        %v3513 = vld [vmem:[%s2445 + $0x2] sm:$0xff]
        %v3514 = vld [vmem:[%s2445 + $0x12] sm:$0xff]
        %v3515 = vld [vmem:[%s2445 + $0x22] sm:$0xff]
        %v3516 = vld [vmem:[%s2445 + $0x32] sm:$0xff]
        %v3517 = vld [vmem:[%s2445 + $0x42] sm:$0xff]
        %v3518 = vld [vmem:[%s2445 + $0x52] sm:$0xff]
        %v3519 = vld [vmem:[%s2445 + $0x62] sm:$0xff]
        %v3520 = vld [vmem:[%s2445 + $0x72] sm:$0xff]
        %v3521 = vpack.c.bf16 %v3450, %v3449
        %v3522 = vpack.c.bf16 %v3458, %v3457
        %v3523 = vpack.c.bf16 %v3466, %v3465
        %v3524 = vpack.c.bf16 %v3474, %v3473
        %v3525 = vpack.c.bf16 %v3482, %v3481
        %v3526 = vpack.c.bf16 %v3490, %v3489
        %v3527 = vpack.c.bf16 %v3498, %v3497
        %v3528 = vpack.c.bf16 %v3506, %v3505
        %v3529 = vpack.c.bf16 %v3514, %v3513
        %v3530 = vpack.c.bf16 %v3452, %v3451
        %v3531 = vpack.c.bf16 %v3460, %v3459
        %v3532 = vpack.c.bf16 %v3468, %v3467
        %v3533 = vpack.c.bf16 %v3476, %v3475
        %v3534 = vpack.c.bf16 %v3484, %v3483
        %v3535 = vpack.c.bf16 %v3492, %v3491
        %v3536 = vpack.c.bf16 %v3500, %v3499
        %v3537 = vpack.c.bf16 %v3508, %v3507
        %v3538 = vpack.c.bf16 %v3516, %v3515
        %v3539 = vpack.c.bf16 %v3454, %v3453
        %v3540 = vpack.c.bf16 %v3462, %v3461
        %v3541 = vpack.c.bf16 %v3470, %v3469
        %v3542 = vpack.c.bf16 %v3478, %v3477
        %v3543 = vpack.c.bf16 %v3486, %v3485
        %v3544 = vpack.c.bf16 %v3494, %v3493
        %v3545 = vpack.c.bf16 %v3502, %v3501
        %v3546 = vpack.c.bf16 %v3510, %v3509
        %v3547 = vpack.c.bf16 %v3518, %v3517
        %v3548 = vpack.c.bf16 %v3456, %v3455
        %v3549 = vpack.c.bf16 %v3464, %v3463
        %v3550 = vpack.c.bf16 %v3472, %v3471
        %v3551 = vpack.c.bf16 %v3480, %v3479
        %v3552 = vpack.c.bf16 %v3488, %v3487
        %v3553 = vpack.c.bf16 %v3496, %v3495
        %v3554 = vpack.c.bf16 %v3504, %v3503
        %v3555 = vpack.c.bf16 %v3512, %v3511
        %v3556 = vpack.c.bf16 %v3520, %v3519
        %v3557 = vld [vmem:[#allocation8] sm:$0xf]
        %v3558 = vld [vmem:[#allocation8 + $0x4] sm:$0xf]
        %v3559 = vld [vmem:[#allocation8 + $0x8] sm:$0xf]
        %v3560 = vld [vmem:[#allocation8 + $0xc] sm:$0xf]
        %v3561 = vld [vmem:[#allocation8 + $0x10] sm:$0xf]
        %v3562 = vld [vmem:[#allocation8 + $0x14] sm:$0xf]
        %v3563 = vld [vmem:[#allocation8 + $0x18] sm:$0xf]
        %v3564 = vld [vmem:[#allocation8 + $0x1c] sm:$0xf]
        %v3565 = vld [vmem:[#allocation8 + $0x20] sm:$0xf]
        %v3566 = vld [vmem:[#allocation8 + $0x24] sm:$0xf]
        %v3567 = vld [vmem:[#allocation8 + $0x28] sm:$0xf]
        %v3568 = vld [vmem:[#allocation8 + $0x2c] sm:$0xf]
        %v3569 = vld [vmem:[#allocation8 + $0x30] sm:$0xf]
        %v3570 = vld [vmem:[#allocation8 + $0x34] sm:$0xf]
        %v3571 = vld [vmem:[#allocation8 + $0x38] sm:$0xf]
        %v3572 = vld [vmem:[#allocation8 + $0x3c] sm:$0xf]
        %v3573 = vld [vmem:[#allocation8 + $0x40] sm:$0xf]
        %v3574 = vld [vmem:[#allocation8 + $0x44] sm:$0xf]
        %v3575 = vld [vmem:[#allocation8 + $0x48] sm:$0xf]
        %v3576 = vld [vmem:[#allocation8 + $0x4c] sm:$0xf]
        %v3577 = vld [vmem:[#allocation8 + $0x50] sm:$0xf]
        %v3578 = vld [vmem:[#allocation8 + $0x54] sm:$0xf]
        %v3579 = vld [vmem:[#allocation8 + $0x58] sm:$0xf]
        %v3580 = vld [vmem:[#allocation8 + $0x5c] sm:$0xf]
        %v3581 = vld [vmem:[#allocation8 + $0x60] sm:$0xf]
        %v3582 = vld [vmem:[#allocation8 + $0x64] sm:$0xf]
        %v3583 = vld [vmem:[#allocation8 + $0x68] sm:$0xf]
        %v3584 = vld [vmem:[#allocation8 + $0x6c] sm:$0xf]
        %v3585 = vld [vmem:[#allocation8 + $0x70] sm:$0xf]
        %v3586 = vld [vmem:[#allocation8 + $0x74] sm:$0xf]
        %v3587 = vld [vmem:[#allocation8 + $0x78] sm:$0xf]
        %v3588 = vld [vmem:[#allocation8 + $0x7c] sm:$0xf]
        %v3589 = vld [vmem:[#allocation8 + $0x80] sm:$0xf]
        %v3590 = vld [vmem:[#allocation8 + $0x84] sm:$0xf]
        %v3591 = vld [vmem:[#allocation8 + $0x88] sm:$0xf]
        %v3592 = vld [vmem:[#allocation8 + $0x8c] sm:$0xf]
        %v3593 = vld [vmem:[#allocation8 + $0x90] sm:$0xf]
        %v3594 = vld [vmem:[#allocation8 + $0x94] sm:$0xf]
        %v3595 = vld [vmem:[#allocation8 + $0x98] sm:$0xf]
        %v3596 = vld [vmem:[#allocation8 + $0x9c] sm:$0xf]
        %v3597 = vld [vmem:[#allocation8 + $0xa0] sm:$0xf]
        %v3598 = vld [vmem:[#allocation8 + $0xa4] sm:$0xf]
        %v3599 = vld [vmem:[#allocation8 + $0xa8] sm:$0xf]
        %v3600 = vld [vmem:[#allocation8 + $0xac] sm:$0xf]
        %v3601 = vld [vmem:[#allocation8 + $0xb0] sm:$0xf]
        %v3602 = vld [vmem:[#allocation8 + $0xb4] sm:$0xf]
        %v3603 = vld [vmem:[#allocation8 + $0xb8] sm:$0xf]
        %v3604 = vld [vmem:[#allocation8 + $0xbc] sm:$0xf]
        %v3605 = vld [vmem:[#allocation8 + $0xc0] sm:$0xf]
        %v3606 = vld [vmem:[#allocation8 + $0xc4] sm:$0xf]
        %v3607 = vld [vmem:[#allocation8 + $0xc8] sm:$0xf]
        %v3608 = vld [vmem:[#allocation8 + $0xcc] sm:$0xf]
        %v3609 = vld [vmem:[#allocation8 + $0xd0] sm:$0xf]
        %v3610 = vld [vmem:[#allocation8 + $0xd4] sm:$0xf]
        %v3611 = vld [vmem:[#allocation8 + $0xd8] sm:$0xf]
        %v3612 = vld [vmem:[#allocation8 + $0xdc] sm:$0xf]
        %v3613 = vld [vmem:[#allocation8 + $0xe0] sm:$0xf]
        %v3614 = vld [vmem:[#allocation8 + $0xe4] sm:$0xf]
        %v3615 = vld [vmem:[#allocation8 + $0xe8] sm:$0xf]
        %v3616 = vld [vmem:[#allocation8 + $0xec] sm:$0xf]
        %v3617 = vld [vmem:[#allocation8 + $0xf0] sm:$0xf]
        %v3618 = vld [vmem:[#allocation8 + $0xf4] sm:$0xf]
        %v3619 = vld [vmem:[#allocation8 + $0xf8] sm:$0xf]
        %v3620 = vld [vmem:[#allocation8 + $0xfc] sm:$0xf]
        %v3621 = vld [vmem:[#allocation8 + $0x100] sm:$0xf]
        %v3622 = vld [vmem:[#allocation8 + $0x104] sm:$0xf]
        %v3623 = vld [vmem:[#allocation8 + $0x108] sm:$0xf]
        %v3624 = vld [vmem:[#allocation8 + $0x10c] sm:$0xf]
        %v3625 = vld [vmem:[#allocation8 + $0x110] sm:$0xf]
        %v3626 = vld [vmem:[#allocation8 + $0x114] sm:$0xf]
        %v3627 = vld [vmem:[#allocation8 + $0x118] sm:$0xf]
        %v3628 = vld [vmem:[#allocation8 + $0x11c] sm:$0xf]
        %v3629 = vld [vmem:[#allocation8 + $0x120] sm:$0xf]
        %v3630 = vld [vmem:[#allocation8 + $0x124] sm:$0xf]
        %v3631 = vld [vmem:[#allocation8 + $0x128] sm:$0xf]
        %v3632 = vld [vmem:[#allocation8 + $0x12c] sm:$0xf]
        %v3633 = vld [vmem:[#allocation8 + $0x130] sm:$0xf]
        %v3634 = vld [vmem:[#allocation8 + $0x134] sm:$0xf]
        %v3635 = vld [vmem:[#allocation8 + $0x138] sm:$0xf]
        %v3636 = vld [vmem:[#allocation8 + $0x13c] sm:$0xf]
        %v3637 = vld [vmem:[#allocation8 + $0x140] sm:$0xf]
        %v3638 = vld [vmem:[#allocation8 + $0x144] sm:$0xf]
        %v3639 = vld [vmem:[#allocation8 + $0x148] sm:$0xf]
        %v3640 = vld [vmem:[#allocation8 + $0x14c] sm:$0xf]
        %v3641 = vld [vmem:[#allocation8 + $0x150] sm:$0xf]
        %v3642 = vld [vmem:[#allocation8 + $0x154] sm:$0xf]
        %v3643 = vld [vmem:[#allocation8 + $0x158] sm:$0xf]
        %v3644 = vld [vmem:[#allocation8 + $0x15c] sm:$0xf]
        %v3645 = vld [vmem:[#allocation8 + $0x160] sm:$0xf]
        %v3646 = vld [vmem:[#allocation8 + $0x164] sm:$0xf]
        %v3647 = vld [vmem:[#allocation8 + $0x168] sm:$0xf]
        %v3648 = vld [vmem:[#allocation8 + $0x16c] sm:$0xf]
        %v3649 = vld [vmem:[#allocation8 + $0x170] sm:$0xf]
        %v3650 = vld [vmem:[#allocation8 + $0x174] sm:$0xf]
        %v3651 = vld [vmem:[#allocation8 + $0x178] sm:$0xf]
        %v3652 = vld [vmem:[#allocation8 + $0x17c] sm:$0xf]
        %v3653 = vld [vmem:[#allocation8 + $0x180] sm:$0xf]
        %v3654 = vld [vmem:[#allocation8 + $0x184] sm:$0xf]
        %v3655 = vld [vmem:[#allocation8 + $0x188] sm:$0xf]
        %v3656 = vld [vmem:[#allocation8 + $0x18c] sm:$0xf]
        %v3657 = vld [vmem:[#allocation8 + $0x190] sm:$0xf]
        %v3658 = vld [vmem:[#allocation8 + $0x194] sm:$0xf]
        %v3659 = vld [vmem:[#allocation8 + $0x198] sm:$0xf]
        %v3660 = vld [vmem:[#allocation8 + $0x19c] sm:$0xf]
        %v3661 = vld [vmem:[#allocation8 + $0x1a0] sm:$0xf]
        %v3662 = vld [vmem:[#allocation8 + $0x1a4] sm:$0xf]
        %v3663 = vld [vmem:[#allocation8 + $0x1a8] sm:$0xf]
        %v3664 = vld [vmem:[#allocation8 + $0x1ac] sm:$0xf]
        %v3665 = vld [vmem:[#allocation8 + $0x1b0] sm:$0xf]
        %v3666 = vld [vmem:[#allocation8 + $0x1b4] sm:$0xf]
        %v3667 = vld [vmem:[#allocation8 + $0x1b8] sm:$0xf]
        %v3668 = vld [vmem:[#allocation8 + $0x1bc] sm:$0xf]
        %v3669 = vld [vmem:[#allocation8 + $0x1c0] sm:$0xf]
        %v3670 = vld [vmem:[#allocation8 + $0x1c4] sm:$0xf]
        %v3671 = vld [vmem:[#allocation8 + $0x1c8] sm:$0xf]
        %v3672 = vld [vmem:[#allocation8 + $0x1cc] sm:$0xf]
        %v3673 = vld [vmem:[#allocation8 + $0x1d0] sm:$0xf]
        %v3674 = vld [vmem:[#allocation8 + $0x1d4] sm:$0xf]
        %v3675 = vld [vmem:[#allocation8 + $0x1d8] sm:$0xf]
        %v3676 = vld [vmem:[#allocation8 + $0x1dc] sm:$0xf]
        %v3677 = vld [vmem:[#allocation8 + $0x1e0] sm:$0xf]
        %v3678 = vld [vmem:[#allocation8 + $0x1e4] sm:$0xf]
        %v3679 = vld [vmem:[#allocation8 + $0x1e8] sm:$0xf]
        %v3680 = vld [vmem:[#allocation8 + $0x1ec] sm:$0xf]
        %v3681 = vld [vmem:[#allocation8 + $0x1f0] sm:$0xf]
        %v3682 = vld [vmem:[#allocation8 + $0x1f4] sm:$0xf]
        %v3683 = vld [vmem:[#allocation8 + $0x1f8] sm:$0xf]
        %v3684 = vld [vmem:[#allocation8 + $0x1fc] sm:$0xf]
        %v3685 = vld [vmem:[#allocation8 + $0x200] sm:$0xf]
        %v3686 = vld [vmem:[#allocation8 + $0x204] sm:$0xf]
        %v3687 = vld [vmem:[#allocation8 + $0x208] sm:$0xf]
        %v3688 = vld [vmem:[#allocation8 + $0x20c] sm:$0xf]
        %v3689 = vld [vmem:[#allocation8 + $0x210] sm:$0xf]
        %v3690 = vld [vmem:[#allocation8 + $0x214] sm:$0xf]
        %v3691 = vld [vmem:[#allocation8 + $0x218] sm:$0xf]
        %v3692 = vld [vmem:[#allocation8 + $0x21c] sm:$0xf]
        %v3693 = vld [vmem:[#allocation8 + $0x220] sm:$0xf]
        %v3694 = vld [vmem:[#allocation8 + $0x224] sm:$0xf]
        %v3695 = vld [vmem:[#allocation8 + $0x228] sm:$0xf]
        %v3696 = vld [vmem:[#allocation8 + $0x22c] sm:$0xf]
        %v3697 = vld [vmem:[#allocation8 + $0x230] sm:$0xf]
        %v3698 = vld [vmem:[#allocation8 + $0x234] sm:$0xf]
        %v3699 = vld [vmem:[#allocation8 + $0x238] sm:$0xf]
        %v3700 = vld [vmem:[#allocation8 + $0x23c] sm:$0xf]
        %v3845 = vunpack.c.l.b16 %v3557
        %v3846 = vunpack.c.l.b16 %v3558
        %v3847 = vunpack.c.l.b16 %v3559
        %v3848 = vunpack.c.l.b16 %v3560
        %v3849 = vunpack.c.l.b16 %v3561
        %v3850 = vunpack.c.l.b16 %v3562
        %v3851 = vunpack.c.l.b16 %v3563
        %v3852 = vunpack.c.l.b16 %v3564
        %v3853 = vunpack.c.l.b16 %v3565
        %v3854 = vunpack.c.l.b16 %v3566
        %v3855 = vunpack.c.l.b16 %v3567
        %v3856 = vunpack.c.l.b16 %v3568
        %v3857 = vunpack.c.l.b16 %v3569
        %v3858 = vunpack.c.l.b16 %v3570
        %v3859 = vunpack.c.l.b16 %v3571
        %v3860 = vunpack.c.l.b16 %v3572
        %v3861 = vunpack.c.l.b16 %v3573
        %v3862 = vunpack.c.l.b16 %v3574
        %v3863 = vunpack.c.l.b16 %v3575
        %v3864 = vunpack.c.l.b16 %v3576
        %v3865 = vunpack.c.l.b16 %v3577
        %v3866 = vunpack.c.l.b16 %v3578
        %v3867 = vunpack.c.l.b16 %v3579
        %v3868 = vunpack.c.l.b16 %v3580
        %v3869 = vunpack.c.l.b16 %v3581
        %v3870 = vunpack.c.l.b16 %v3582
        %v3871 = vunpack.c.l.b16 %v3583
        %v3872 = vunpack.c.l.b16 %v3584
        %v3873 = vunpack.c.l.b16 %v3585
        %v3874 = vunpack.c.l.b16 %v3586
        %v3875 = vunpack.c.l.b16 %v3587
        %v3876 = vunpack.c.l.b16 %v3588
        %v3877 = vunpack.c.l.b16 %v3589
        %v3878 = vunpack.c.l.b16 %v3590
        %v3879 = vunpack.c.l.b16 %v3591
        %v3880 = vunpack.c.l.b16 %v3592
        %v3881 = vunpack.c.l.b16 %v3593
        %v3882 = vunpack.c.l.b16 %v3594
        %v3883 = vunpack.c.l.b16 %v3595
        %v3884 = vunpack.c.l.b16 %v3596
        %v3885 = vunpack.c.l.b16 %v3597
        %v3886 = vunpack.c.l.b16 %v3598
        %v3887 = vunpack.c.l.b16 %v3599
        %v3888 = vunpack.c.l.b16 %v3600
        %v3889 = vunpack.c.l.b16 %v3601
        %v3890 = vunpack.c.l.b16 %v3602
        %v3891 = vunpack.c.l.b16 %v3603
        %v3892 = vunpack.c.l.b16 %v3604
        %v3893 = vunpack.c.l.b16 %v3605
        %v3894 = vunpack.c.l.b16 %v3606
        %v3895 = vunpack.c.l.b16 %v3607
        %v3896 = vunpack.c.l.b16 %v3608
        %v3897 = vunpack.c.l.b16 %v3609
        %v3898 = vunpack.c.l.b16 %v3610
        %v3899 = vunpack.c.l.b16 %v3611
        %v3900 = vunpack.c.l.b16 %v3612
        %v3901 = vunpack.c.l.b16 %v3613
        %v3902 = vunpack.c.l.b16 %v3614
        %v3903 = vunpack.c.l.b16 %v3615
        %v3904 = vunpack.c.l.b16 %v3616
        %v3905 = vunpack.c.l.b16 %v3617
        %v3906 = vunpack.c.l.b16 %v3618
        %v3907 = vunpack.c.l.b16 %v3619
        %v3908 = vunpack.c.l.b16 %v3620
        %v3909 = vunpack.c.l.b16 %v3621
        %v3910 = vunpack.c.l.b16 %v3622
        %v3911 = vunpack.c.l.b16 %v3623
        %v3912 = vunpack.c.l.b16 %v3624
        %v3913 = vunpack.c.l.b16 %v3625
        %v3914 = vunpack.c.l.b16 %v3626
        %v3915 = vunpack.c.l.b16 %v3627
        %v3916 = vunpack.c.l.b16 %v3628
        %v3917 = vunpack.c.l.b16 %v3629
        %v3918 = vunpack.c.l.b16 %v3630
        %v3919 = vunpack.c.l.b16 %v3631
        %v3920 = vunpack.c.l.b16 %v3632
        %v3921 = vunpack.c.l.b16 %v3633
        %v3922 = vunpack.c.l.b16 %v3634
        %v3923 = vunpack.c.l.b16 %v3635
        %v3924 = vunpack.c.l.b16 %v3636
        %v3925 = vunpack.c.l.b16 %v3637
        %v3926 = vunpack.c.l.b16 %v3638
        %v3927 = vunpack.c.l.b16 %v3639
        %v3928 = vunpack.c.l.b16 %v3640
        %v3929 = vunpack.c.l.b16 %v3641
        %v3930 = vunpack.c.l.b16 %v3642
        %v3931 = vunpack.c.l.b16 %v3643
        %v3932 = vunpack.c.l.b16 %v3644
        %v3933 = vunpack.c.l.b16 %v3645
        %v3934 = vunpack.c.l.b16 %v3646
        %v3935 = vunpack.c.l.b16 %v3647
        %v3936 = vunpack.c.l.b16 %v3648
        %v3937 = vunpack.c.l.b16 %v3649
        %v3938 = vunpack.c.l.b16 %v3650
        %v3939 = vunpack.c.l.b16 %v3651
        %v3940 = vunpack.c.l.b16 %v3652
        %v3941 = vunpack.c.l.b16 %v3653
        %v3942 = vunpack.c.l.b16 %v3654
        %v3943 = vunpack.c.l.b16 %v3655
        %v3944 = vunpack.c.l.b16 %v3656
        %v3945 = vunpack.c.l.b16 %v3657
        %v3946 = vunpack.c.l.b16 %v3658
        %v3947 = vunpack.c.l.b16 %v3659
        %v3948 = vunpack.c.l.b16 %v3660
        %v3949 = vunpack.c.l.b16 %v3661
        %v3950 = vunpack.c.l.b16 %v3662
        %v3951 = vunpack.c.l.b16 %v3663
        %v3952 = vunpack.c.l.b16 %v3664
        %v3953 = vunpack.c.l.b16 %v3665
        %v3954 = vunpack.c.l.b16 %v3666
        %v3955 = vunpack.c.l.b16 %v3667
        %v3956 = vunpack.c.l.b16 %v3668
        %v3957 = vunpack.c.l.b16 %v3669
        %v3958 = vunpack.c.l.b16 %v3670
        %v3959 = vunpack.c.l.b16 %v3671
        %v3960 = vunpack.c.l.b16 %v3672
        %v3961 = vunpack.c.l.b16 %v3673
        %v3962 = vunpack.c.l.b16 %v3674
        %v3963 = vunpack.c.l.b16 %v3675
        %v3964 = vunpack.c.l.b16 %v3676
        %v3965 = vunpack.c.l.b16 %v3677
        %v3966 = vunpack.c.l.b16 %v3678
        %v3967 = vunpack.c.l.b16 %v3679
        %v3968 = vunpack.c.l.b16 %v3680
        %v3969 = vunpack.c.l.b16 %v3681
        %v3970 = vunpack.c.l.b16 %v3682
        %v3971 = vunpack.c.l.b16 %v3683
        %v3972 = vunpack.c.l.b16 %v3684
        %v3973 = vunpack.c.l.b16 %v3685
        %v3974 = vunpack.c.l.b16 %v3686
        %v3975 = vunpack.c.l.b16 %v3687
        %v3976 = vunpack.c.l.b16 %v3688
        %v3977 = vunpack.c.l.b16 %v3689
        %v3978 = vunpack.c.l.b16 %v3690
        %v3979 = vunpack.c.l.b16 %v3691
        %v3980 = vunpack.c.l.b16 %v3692
        %v3981 = vunpack.c.l.b16 %v3693
        %v3982 = vunpack.c.l.b16 %v3694
        %v3983 = vunpack.c.l.b16 %v3695
        %v3984 = vunpack.c.l.b16 %v3696
        %v3985 = vunpack.c.l.b16 %v3697
        %v3986 = vunpack.c.l.b16 %v3698
        %v3987 = vunpack.c.l.b16 %v3699
        %v3988 = vunpack.c.l.b16 %v3700
        %v3989 = vpack.c.b16 %v3846, %v3845
        %v3990 = vpack.c.b16 %v3848, %v3847
        %v3991 = vpack.c.b16 %v3850, %v3849
        %v3992 = vpack.c.b16 %v3852, %v3851
        %v3993 = vpack.c.b16 %v3854, %v3853
        %v3994 = vpack.c.b16 %v3856, %v3855
        %v3995 = vpack.c.b16 %v3858, %v3857
        %v3996 = vpack.c.b16 %v3860, %v3859
        %v3997 = vpack.c.b16 %v3862, %v3861
        %v3998 = vpack.c.b16 %v3864, %v3863
        %v3999 = vpack.c.b16 %v3866, %v3865
        %v4000 = vpack.c.b16 %v3868, %v3867
        %v4001 = vpack.c.b16 %v3870, %v3869
        %v4002 = vpack.c.b16 %v3872, %v3871
        %v4003 = vpack.c.b16 %v3874, %v3873
        %v4004 = vpack.c.b16 %v3876, %v3875
        %v4005 = vpack.c.b16 %v3878, %v3877
        %v4006 = vpack.c.b16 %v3880, %v3879
        %v4007 = vpack.c.b16 %v3882, %v3881
        %v4008 = vpack.c.b16 %v3884, %v3883
        %v4009 = vpack.c.b16 %v3886, %v3885
        %v4010 = vpack.c.b16 %v3888, %v3887
        %v4011 = vpack.c.b16 %v3890, %v3889
        %v4012 = vpack.c.b16 %v3892, %v3891
        %v4013 = vpack.c.b16 %v3894, %v3893
        %v4014 = vpack.c.b16 %v3896, %v3895
        %v4015 = vpack.c.b16 %v3898, %v3897
        %v4016 = vpack.c.b16 %v3900, %v3899
        %v4017 = vpack.c.b16 %v3902, %v3901
        %v4018 = vpack.c.b16 %v3904, %v3903
        %v4019 = vpack.c.b16 %v3906, %v3905
        %v4020 = vpack.c.b16 %v3908, %v3907
        %v4021 = vpack.c.b16 %v3910, %v3909
        %v4022 = vpack.c.b16 %v3912, %v3911
        %v4023 = vpack.c.b16 %v3914, %v3913
        %v4024 = vpack.c.b16 %v3916, %v3915
        %v4025 = vpack.c.b16 %v3918, %v3917
        %v4026 = vpack.c.b16 %v3920, %v3919
        %v4027 = vpack.c.b16 %v3922, %v3921
        %v4028 = vpack.c.b16 %v3924, %v3923
        %v4029 = vpack.c.b16 %v3926, %v3925
        %v4030 = vpack.c.b16 %v3928, %v3927
        %v4031 = vpack.c.b16 %v3930, %v3929
        %v4032 = vpack.c.b16 %v3932, %v3931
        %v4033 = vpack.c.b16 %v3934, %v3933
        %v4034 = vpack.c.b16 %v3936, %v3935
        %v4035 = vpack.c.b16 %v3938, %v3937
        %v4036 = vpack.c.b16 %v3940, %v3939
        %v4037 = vpack.c.b16 %v3942, %v3941
        %v4038 = vpack.c.b16 %v3944, %v3943
        %v4039 = vpack.c.b16 %v3946, %v3945
        %v4040 = vpack.c.b16 %v3948, %v3947
        %v4041 = vpack.c.b16 %v3950, %v3949
        %v4042 = vpack.c.b16 %v3952, %v3951
        %v4043 = vpack.c.b16 %v3954, %v3953
        %v4044 = vpack.c.b16 %v3956, %v3955
        %v4045 = vpack.c.b16 %v3958, %v3957
        %v4046 = vpack.c.b16 %v3960, %v3959
        %v4047 = vpack.c.b16 %v3962, %v3961
        %v4048 = vpack.c.b16 %v3964, %v3963
        %v4049 = vpack.c.b16 %v3966, %v3965
        %v4050 = vpack.c.b16 %v3968, %v3967
        %v4051 = vpack.c.b16 %v3970, %v3969
        %v4052 = vpack.c.b16 %v3972, %v3971
        %v4053 = vpack.c.b16 %v3974, %v3973
        %v4054 = vpack.c.b16 %v3976, %v3975
        %v4055 = vpack.c.b16 %v3978, %v3977
        %v4056 = vpack.c.b16 %v3980, %v3979
        %v4057 = vpack.c.b16 %v3982, %v3981
        %v4058 = vpack.c.b16 %v3984, %v3983
        %v4059 = vpack.c.b16 %v3986, %v3985
        %v4060 = vpack.c.b16 %v3988, %v3987
        %4133 = vmatprep.subr.bf16.mxu0 0
        %4134 = vmatpush1.bf16.msra.mxu0 %v3989
        %4135 = vmatprep.subr.bf16.mxu0 0
        %4136 = vmatpush1.bf16.msra.mxu0 %v3990
        %4137 = vmatprep.subr.bf16.mxu0 0
        %4138 = vmatpush1.bf16.msra.mxu0 %v3991
        %4139 = vmatprep.subr.bf16.mxu0 0
        %4140 = vmatpush1.bf16.msra.mxu0 %v3992
        %4141 = vmatprep.subr.bf16.mxu0 0
        %4142 = vmatpush1.bf16.msra.mxu0 %v3993
        %4143 = vmatprep.subr.bf16.mxu0 0
        %4144 = vmatpush1.bf16.msra.mxu0 %v3994
        %4145 = vmatprep.subr.bf16.mxu0 0
        %4146 = vmatpush1.bf16.msra.mxu0 %v3995
        %4147 = vmatprep.subr.bf16.mxu0 0
        %4148 = vmatpush1.bf16.msra.mxu0 %v3996
        %4149 = vmatprep.subr.bf16.mxu0 0
        %4150 = vmatpush1.bf16.msra.mxu0 %v3997
        %4151 = vmatprep.subr.bf16.mxu0 0
        %4152 = vmatpush1.bf16.msra.mxu0 %v3998
        %4153 = vmatprep.subr.bf16.mxu0 0
        %4154 = vmatpush1.bf16.msra.mxu0 %v3999
        %4155 = vmatprep.subr.bf16.mxu0 0
        %4156 = vmatpush1.bf16.msra.mxu0 %v4000
        %4157 = vmatprep.subr.bf16.mxu0 0
        %4158 = vmatpush1.bf16.msra.mxu0 %v4001
        %4159 = vmatprep.subr.bf16.mxu0 0
        %4160 = vmatpush1.bf16.msra.mxu0 %v4002
        %4161 = vmatprep.subr.bf16.mxu0 0
        %4162 = vmatpush1.bf16.msra.mxu0 %v4003
        %4163 = vmatprep.subr.bf16.mxu0 0
        %4164 = vmatpush1.bf16.msra.mxu0 %v4004
        %4165 = vmatprep.mubr.bf16.mxu0 %v3522
        %4166 = vmatmul.mubr.bf16.gmra.mrb[0].mxu0 %v3521
        %v4167 = vpop.f32.mrb[0].mxu0
        %v4168 = vadd.f32 0.0, %v4167
        %v4169 = vpop.f32.mrb[0].mxu0
        %v4170 = vpop.f32.mrb[0].mxu0
        %v4171 = vadd.f32 0.0, %v4170
        %v4172 = vpop.f32.mrb[0].mxu0
        %4173 = vmatprep.mubr.bf16.mxu0 %v3531
        %4174 = vmatmul.mubr.bf16.gmra.mrb[0].mxu0 %v3530
        %v4175 = vpop.f32.mrb[0].mxu0
        %v4176 = vadd.f32 0.0, %v4175
        %v4177 = vpop.f32.mrb[0].mxu0
        %v4178 = vpop.f32.mrb[0].mxu0
        %v4179 = vadd.f32 0.0, %v4178
        %v4180 = vpop.f32.mrb[0].mxu0
        %4181 = vmatprep.mubr.bf16.mxu0 %v3540
        %4182 = vmatmul.mubr.bf16.gmra.mrb[0].mxu0 %v3539
        %v4183 = vpop.f32.mrb[0].mxu0
        %v4184 = vadd.f32 0.0, %v4183
        %v4185 = vpop.f32.mrb[0].mxu0
        %v4186 = vpop.f32.mrb[0].mxu0
        %v4187 = vadd.f32 0.0, %v4186
        %v4188 = vpop.f32.mrb[0].mxu0
        %4189 = vmatprep.mubr.bf16.mxu0 %v3549
        %4190 = vmatmul.mubr.bf16.gmra.mrb[0].mxu0 %v3548
        %v4191 = vpop.f32.mrb[0].mxu0
        %v4192 = vadd.f32 0.0, %v4191
        %v4193 = vpop.f32.mrb[0].mxu0
        %v4194 = vpop.f32.mrb[0].mxu0
        %v4195 = vadd.f32 0.0, %v4194
        %v4196 = vpop.f32.mrb[0].mxu0
        %4197 = vdwg.mxu0
        %4198 = vmatprep.subr.bf16.mxu0 0
        %4199 = vmatpush1.bf16.msra.mxu0 %v4005
        %4200 = vmatprep.subr.bf16.mxu0 0
        %4201 = vmatpush1.bf16.msra.mxu0 %v4006
        %4202 = vmatprep.subr.bf16.mxu0 0
        %4203 = vmatpush1.bf16.msra.mxu0 %v4007
        %4204 = vmatprep.subr.bf16.mxu0 0
        %4205 = vmatpush1.bf16.msra.mxu0 %v4008
        %4206 = vmatprep.subr.bf16.mxu0 0
        %4207 = vmatpush1.bf16.msra.mxu0 %v4009
        %4208 = vmatprep.subr.bf16.mxu0 0
        %4209 = vmatpush1.bf16.msra.mxu0 %v4010
        %4210 = vmatprep.subr.bf16.mxu0 0
        %4211 = vmatpush1.bf16.msra.mxu0 %v4011
        %4212 = vmatprep.subr.bf16.mxu0 0
        %4213 = vmatpush1.bf16.msra.mxu0 %v4012
        %4214 = vmatprep.subr.bf16.mxu0 0
        %4215 = vmatpush1.bf16.msra.mxu0 %v4013
        %4216 = vmatprep.subr.bf16.mxu0 0
        %4217 = vmatpush1.bf16.msra.mxu0 %v4014
        %4218 = vmatprep.subr.bf16.mxu0 0
        %4219 = vmatpush1.bf16.msra.mxu0 %v4015
        %4220 = vmatprep.subr.bf16.mxu0 0
        %4221 = vmatpush1.bf16.msra.mxu0 %v4016
        %4222 = vmatprep.subr.bf16.mxu0 0
        %4223 = vmatpush1.bf16.msra.mxu0 %v4017
        %4224 = vmatprep.subr.bf16.mxu0 0
        %4225 = vmatpush1.bf16.msra.mxu0 %v4018
        %4226 = vmatprep.subr.bf16.mxu0 0
        %4227 = vmatpush1.bf16.msra.mxu0 %v4019
        %4228 = vmatprep.subr.bf16.mxu0 0
        %4229 = vmatpush1.bf16.msra.mxu0 %v4020
        %4230 = vmatprep.mubr.bf16.mxu0 %v3524
        %4231 = vmatmul.mubr.bf16.gmra.mrb[0].mxu0 %v3523
        %v4232 = vpop.f32.mrb[0].mxu0
        %v4233 = vadd.f32 %v4168, %v4232
        %v4234 = vpop.f32.mrb[0].mxu0
        %v4235 = vpop.f32.mrb[0].mxu0
        %v4236 = vadd.f32 %v4171, %v4235
        %v4237 = vpop.f32.mrb[0].mxu0
        %4238 = vmatprep.mubr.bf16.mxu0 %v3533
        %4239 = vmatmul.mubr.bf16.gmra.mrb[0].mxu0 %v3532
        %v4240 = vpop.f32.mrb[0].mxu0
        %v4241 = vadd.f32 %v4176, %v4240
        %v4242 = vpop.f32.mrb[0].mxu0
        %v4243 = vpop.f32.mrb[0].mxu0
        %v4244 = vadd.f32 %v4179, %v4243
        %v4245 = vpop.f32.mrb[0].mxu0
        %4246 = vmatprep.mubr.bf16.mxu0 %v3542
        %4247 = vmatmul.mubr.bf16.gmra.mrb[0].mxu0 %v3541
        %v4248 = vpop.f32.mrb[0].mxu0
        %v4249 = vadd.f32 %v4184, %v4248
        %v4250 = vpop.f32.mrb[0].mxu0
        %v4251 = vpop.f32.mrb[0].mxu0
        %v4252 = vadd.f32 %v4187, %v4251
        %v4253 = vpop.f32.mrb[0].mxu0
        %4254 = vmatprep.mubr.bf16.mxu0 %v3551
        %4255 = vmatmul.mubr.bf16.gmra.mrb[0].mxu0 %v3550
        %v4256 = vpop.f32.mrb[0].mxu0
        %v4257 = vadd.f32 %v4192, %v4256
        %v4258 = vpop.f32.mrb[0].mxu0
        %v4259 = vpop.f32.mrb[0].mxu0
        %v4260 = vadd.f32 %v4195, %v4259
        %v4261 = vpop.f32.mrb[0].mxu0
        %4262 = vdwg.mxu0
        %4263 = vmatprep.subr.bf16.mxu0 0
        %4264 = vmatpush1.bf16.msra.mxu0 %v4021
        %4265 = vmatprep.subr.bf16.mxu0 0
        %4266 = vmatpush1.bf16.msra.mxu0 %v4022
        %4267 = vmatprep.subr.bf16.mxu0 0
        %4268 = vmatpush1.bf16.msra.mxu0 %v4023
        %4269 = vmatprep.subr.bf16.mxu0 0
        %4270 = vmatpush1.bf16.msra.mxu0 %v4024
        %4271 = vmatprep.subr.bf16.mxu0 0
        %4272 = vmatpush1.bf16.msra.mxu0 %v4025
        %4273 = vmatprep.subr.bf16.mxu0 0
        %4274 = vmatpush1.bf16.msra.mxu0 %v4026
        %4275 = vmatprep.subr.bf16.mxu0 0
        %4276 = vmatpush1.bf16.msra.mxu0 %v4027
        %4277 = vmatprep.subr.bf16.mxu0 0
        %4278 = vmatpush1.bf16.msra.mxu0 %v4028
        %4279 = vmatprep.subr.bf16.mxu0 0
        %4280 = vmatpush1.bf16.msra.mxu0 %v4029
        %4281 = vmatprep.subr.bf16.mxu0 0
        %4282 = vmatpush1.bf16.msra.mxu0 %v4030
        %4283 = vmatprep.subr.bf16.mxu0 0
        %4284 = vmatpush1.bf16.msra.mxu0 %v4031
        %4285 = vmatprep.subr.bf16.mxu0 0
        %4286 = vmatpush1.bf16.msra.mxu0 %v4032
        %4287 = vmatprep.subr.bf16.mxu0 0
        %4288 = vmatpush1.bf16.msra.mxu0 %v4033
        %4289 = vmatprep.subr.bf16.mxu0 0
        %4290 = vmatpush1.bf16.msra.mxu0 %v4034
        %4291 = vmatprep.subr.bf16.mxu0 0
        %4292 = vmatpush1.bf16.msra.mxu0 %v4035
        %4293 = vmatprep.subr.bf16.mxu0 0
        %4294 = vmatpush1.bf16.msra.mxu0 %v4036
        %4295 = vmatprep.mubr.bf16.mxu0 %v3526
        %4296 = vmatmul.mubr.bf16.gmra.mrb[0].mxu0 %v3525
        %v4297 = vpop.f32.mrb[0].mxu0
        %v4298 = vadd.f32 %v4233, %v4297
        %v4299 = vpop.f32.mrb[0].mxu0
        %v4300 = vpop.f32.mrb[0].mxu0
        %v4301 = vadd.f32 %v4236, %v4300
        %v4302 = vpop.f32.mrb[0].mxu0
        %4303 = vmatprep.mubr.bf16.mxu0 %v3535
        %4304 = vmatmul.mubr.bf16.gmra.mrb[0].mxu0 %v3534
        %v4305 = vpop.f32.mrb[0].mxu0
        %v4306 = vadd.f32 %v4241, %v4305
        %v4307 = vpop.f32.mrb[0].mxu0
        %v4308 = vpop.f32.mrb[0].mxu0
        %v4309 = vadd.f32 %v4244, %v4308
        %v4310 = vpop.f32.mrb[0].mxu0
        %4311 = vmatprep.mubr.bf16.mxu0 %v3544
        %4312 = vmatmul.mubr.bf16.gmra.mrb[0].mxu0 %v3543
        %v4313 = vpop.f32.mrb[0].mxu0
        %v4314 = vadd.f32 %v4249, %v4313
        %v4315 = vpop.f32.mrb[0].mxu0
        %v4316 = vpop.f32.mrb[0].mxu0
        %v4317 = vadd.f32 %v4252, %v4316
        %v4318 = vpop.f32.mrb[0].mxu0
        %4319 = vmatprep.mubr.bf16.mxu0 %v3553
        %4320 = vmatmul.mubr.bf16.gmra.mrb[0].mxu0 %v3552
        %v4321 = vpop.f32.mrb[0].mxu0
        %v4322 = vadd.f32 %v4257, %v4321
        %v4323 = vpop.f32.mrb[0].mxu0
        %v4324 = vpop.f32.mrb[0].mxu0
        %v4325 = vadd.f32 %v4260, %v4324
        %v4326 = vpop.f32.mrb[0].mxu0
        %4327 = vdwg.mxu0
        %4328 = vmatprep.subr.bf16.mxu0 0
        %4329 = vmatpush1.bf16.msra.mxu0 %v4037
        %4330 = vmatprep.subr.bf16.mxu0 0
        %4331 = vmatpush1.bf16.msra.mxu0 %v4038
        %4332 = vmatprep.subr.bf16.mxu0 0
        %4333 = vmatpush1.bf16.msra.mxu0 %v4039
        %4334 = vmatprep.subr.bf16.mxu0 0
        %4335 = vmatpush1.bf16.msra.mxu0 %v4040
        %4336 = vmatprep.subr.bf16.mxu0 0
        %4337 = vmatpush1.bf16.msra.mxu0 %v4041
        %4338 = vmatprep.subr.bf16.mxu0 0
        %4339 = vmatpush1.bf16.msra.mxu0 %v4042
        %4340 = vmatprep.subr.bf16.mxu0 0
        %4341 = vmatpush1.bf16.msra.mxu0 %v4043
        %4342 = vmatprep.subr.bf16.mxu0 0
        %4343 = vmatpush1.bf16.msra.mxu0 %v4044
        %4344 = vmatprep.subr.bf16.mxu0 0
        %4345 = vmatpush1.bf16.msra.mxu0 %v4045
        %4346 = vmatprep.subr.bf16.mxu0 0
        %4347 = vmatpush1.bf16.msra.mxu0 %v4046
        %4348 = vmatprep.subr.bf16.mxu0 0
        %4349 = vmatpush1.bf16.msra.mxu0 %v4047
        %4350 = vmatprep.subr.bf16.mxu0 0
        %4351 = vmatpush1.bf16.msra.mxu0 %v4048
        %4352 = vmatprep.subr.bf16.mxu0 0
        %4353 = vmatpush1.bf16.msra.mxu0 %v4049
        %4354 = vmatprep.subr.bf16.mxu0 0
        %4355 = vmatpush1.bf16.msra.mxu0 %v4050
        %4356 = vmatprep.subr.bf16.mxu0 0
        %4357 = vmatpush1.bf16.msra.mxu0 %v4051
        %4358 = vmatprep.subr.bf16.mxu0 0
        %4359 = vmatpush1.bf16.msra.mxu0 %v4052
        %4360 = vmatprep.mubr.bf16.mxu0 %v3528
        %4361 = vmatmul.mubr.bf16.gmra.mrb[0].mxu0 %v3527
        %v4362 = vpop.f32.mrb[0].mxu0
        %v4363 = vadd.f32 %v4298, %v4362
        %v4364 = vpop.f32.mrb[0].mxu0
        %v4365 = vpop.f32.mrb[0].mxu0
        %v4366 = vadd.f32 %v4301, %v4365
        %v4367 = vpop.f32.mrb[0].mxu0
        %4368 = vmatprep.mubr.bf16.mxu0 %v3537
        %4369 = vmatmul.mubr.bf16.gmra.mrb[0].mxu0 %v3536
        %v4370 = vpop.f32.mrb[0].mxu0
        %v4371 = vadd.f32 %v4306, %v4370
        %v4372 = vpop.f32.mrb[0].mxu0
        %v4373 = vpop.f32.mrb[0].mxu0
        %v4374 = vadd.f32 %v4309, %v4373
        %v4375 = vpop.f32.mrb[0].mxu0
        %4376 = vmatprep.mubr.bf16.mxu0 %v3546
        %4377 = vmatmul.mubr.bf16.gmra.mrb[0].mxu0 %v3545
        %v4378 = vpop.f32.mrb[0].mxu0
        %v4379 = vadd.f32 %v4314, %v4378
        %v4380 = vpop.f32.mrb[0].mxu0
        %v4381 = vpop.f32.mrb[0].mxu0
        %v4382 = vadd.f32 %v4317, %v4381
        %v4383 = vpop.f32.mrb[0].mxu0
        %4384 = vmatprep.mubr.bf16.mxu0 %v3555
        %4385 = vmatmul.mubr.bf16.gmra.mrb[0].mxu0 %v3554
        %v4386 = vpop.f32.mrb[0].mxu0
        %v4387 = vadd.f32 %v4322, %v4386
        %v4388 = vpop.f32.mrb[0].mxu0
        %v4389 = vpop.f32.mrb[0].mxu0
        %v4390 = vadd.f32 %v4325, %v4389
        %v4391 = vpop.f32.mrb[0].mxu0
        %4392 = vdwg.mxu0
        %4393 = vmatprep.subr.bf16.mxu0 0
        %4394 = vmatpush1.bf16.msra.mxu0 %v4053
        %4395 = vmatprep.subr.bf16.mxu0 0
        %4396 = vmatpush1.bf16.msra.mxu0 %v4054
        %4397 = vmatprep.subr.bf16.mxu0 0
        %4398 = vmatpush1.bf16.msra.mxu0 %v4055
        %4399 = vmatprep.subr.bf16.mxu0 0
        %4400 = vmatpush1.bf16.msra.mxu0 %v4056
        %4401 = vmatprep.subr.bf16.mxu0 0
        %4402 = vmatpush1.bf16.msra.mxu0 %v4057
        %4403 = vmatprep.subr.bf16.mxu0 0
        %4404 = vmatpush1.bf16.msra.mxu0 %v4058
        %4405 = vmatprep.subr.bf16.mxu0 0
        %4406 = vmatpush1.bf16.msra.mxu0 %v4059
        %4407 = vmatprep.subr.bf16.mxu0 0
        %4408 = vmatpush1.bf16.msra.mxu0 %v4060
        %4409 = vmatprep.subr.bf16.mxu0 0
        %4410 = vmatpush1.bf16.msra.mxu0 0
        %4411 = vmatprep.subr.bf16.mxu0 0
        %4412 = vmatpush1.bf16.msra.mxu0 0
        %4413 = vmatprep.subr.bf16.mxu0 0
        %4414 = vmatpush1.bf16.msra.mxu0 0
        %4415 = vmatprep.subr.bf16.mxu0 0
        %4416 = vmatpush1.bf16.msra.mxu0 0
        %4417 = vmatprep.subr.bf16.mxu0 0
        %4418 = vmatpush1.bf16.msra.mxu0 0
        %4419 = vmatprep.subr.bf16.mxu0 0
        %4420 = vmatpush1.bf16.msra.mxu0 0
        %4421 = vmatprep.subr.bf16.mxu0 0
        %4422 = vmatpush1.bf16.msra.mxu0 0
        %4423 = vmatprep.subr.bf16.mxu0 0
        %4424 = vmatpush1.bf16.msra.mxu0 0
        %4425 = vmatprep.mubr.bf16.mxu0 0
        %4426 = vmatmul.mubr.bf16.gmra.mrb[0].mxu0 %v3529
        %v4427 = vpop.f32.mrb[0].mxu0
        %v4428 = vadd.f32 %v4363, %v4427
        %v4429 = vpop.f32.mrb[0].mxu0
        %v4430 = vpop.f32.mrb[0].mxu0
        %v4431 = vadd.f32 %v4366, %v4430
        %v4432 = vpop.f32.mrb[0].mxu0
        %4433 = vmatprep.mubr.bf16.mxu0 0
        %4434 = vmatmul.mubr.bf16.gmra.mrb[0].mxu0 %v3538
        %v4435 = vpop.f32.mrb[0].mxu0
        %v4436 = vadd.f32 %v4371, %v4435
        %v4437 = vpop.f32.mrb[0].mxu0
        %v4438 = vpop.f32.mrb[0].mxu0
        %v4439 = vadd.f32 %v4374, %v4438
        %v4440 = vpop.f32.mrb[0].mxu0
        %4441 = vmatprep.mubr.bf16.mxu0 0
        %4442 = vmatmul.mubr.bf16.gmra.mrb[0].mxu0 %v3547
        %v4443 = vpop.f32.mrb[0].mxu0
        %v4444 = vadd.f32 %v4379, %v4443
        %v4445 = vpop.f32.mrb[0].mxu0
        %v4446 = vpop.f32.mrb[0].mxu0
        %v4447 = vadd.f32 %v4382, %v4446
        %v4448 = vpop.f32.mrb[0].mxu0
        %4449 = vmatprep.mubr.bf16.mxu0 0
        %4450 = vmatmul.mubr.bf16.gmra.mrb[0].mxu0 %v3556
        %v4451 = vpop.f32.mrb[0].mxu0
        %v4452 = vadd.f32 %v4387, %v4451
        %v4453 = vpop.f32.mrb[0].mxu0
        %v4454 = vpop.f32.mrb[0].mxu0
        %v4455 = vadd.f32 %v4390, %v4454
        %v4456 = vpop.f32.mrb[0].mxu0
        %4457 = vdwg.mxu0
        %v4458 = vld [vmem:[%s4 + $0x2] sm:$0x1]
        %v4459 = vld [vmem:[%s5 + $0x2] sm:$0x1]
        %v4460 = vlaneseq
        %v4461 = vshrl.u32 %v4460, 7
        %v4462 = vsub.s32 0, %v4461
        %v4463 = vrot.slane %v4458, %v4462
        %v4464 = vmul.f32 %v4428, %v4463
        %v4465 = vmul.f32 %v4431, %v4463
        %v4466 = vmul.f32 %v4436, %v4463
        %v4467 = vmul.f32 %v4439, %v4463
        %v4468 = vmul.f32 %v4444, %v4463
        %v4469 = vmul.f32 %v4447, %v4463
        %v4470 = vmul.f32 %v4452, %v4463
        %v4471 = vmul.f32 %v4455, %v4463
        %v4472 = vlaneseq
        %v4473 = vshrl.u32 %v4472, 7
        %v4474 = vsub.s32 0, %v4473
        %v4475 = vrot.slane %v4459, %v4474
        %v4476 = vadd.f32 %v4464, %v4475
        %v4477 = vadd.f32 %v4465, %v4475
        %v4478 = vadd.f32 %v4466, %v4475
        %v4479 = vadd.f32 %v4467, %v4475
        %v4480 = vadd.f32 %v4468, %v4475
        %v4481 = vadd.f32 %v4469, %v4475
        %v4482 = vadd.f32 %v4470, %v4475
        %v4483 = vadd.f32 %v4471, %v4475
        %v4484 = vmax.f32 %v4476, 0.0
        %v4485 = vmax.f32 %v4477, 0.0
        %v4486 = vmax.f32 %v4478, 0.0
        %v4487 = vmax.f32 %v4479, 0.0
        %v4488 = vmax.f32 %v4480, 0.0
        %v4489 = vmax.f32 %v4481, 0.0
        %v4490 = vmax.f32 %v4482, 0.0
        %v4491 = vmax.f32 %v4483, 0.0
        %v4492 = vadd.f32 %v4484, %v2380
        %v4493 = vadd.f32 %v4485, %v2381
        %v4494 = vadd.f32 %v4486, %v2382
        %v4495 = vadd.f32 %v4487, %v2383
        %v4496 = vadd.f32 %v4488, %v2384
        %v4497 = vadd.f32 %v4489, %v2385
        %v4498 = vadd.f32 %v4490, %v2386
        %v4499 = vadd.f32 %v4491, %v2387
        %vm4500 = vcmask 64512
        %4501 = vst.msk [vmem:[%s274] sm:$0xff] %vm4500, %v4492
        %4502 = vst.msk [vmem:[%s274 + $0x8] sm:$0xff] %vm4500, %v4493
        %4503 = vst.msk [vmem:[%s274 + $0x10] sm:$0xff] %vm4500, %v4494
        %4504 = vst.msk [vmem:[%s274 + $0x18] sm:$0xff] %vm4500, %v4495
        %4505 = vst.msk [vmem:[%s274 + $0x20] sm:$0xff] %vm4500, %v4496
        %4506 = vst.msk [vmem:[%s274 + $0x28] sm:$0xff] %vm4500, %v4497
        %4507 = vst.msk [vmem:[%s274 + $0x30] sm:$0xff] %vm4500, %v4498
        %4508 = vst.msk [vmem:[%s274 + $0x38] sm:$0xff] %vm4500, %v4499
        %s4509 = sand.u32 %s161, 1
        %s4510 = scalar_lea.sflag [#allocation7], %s4509
        %s4511 = sand.u32 %s161, 1
        %s4512 = smul.addr %s4511, 64
        %s4513 = scalar_lea.vmem [#allocation10], %s4512
        // Predicated region
        $region53: #{tpu_custom_call.1} parent=43 // pred_check
          %p4514 = pneg %p171
        $region54: #{tpu_custom_call.1} parent=43 // pred_check_branch
          %4516 = sbr.rel (%p4514) target = $region56
        $region55: #{tpu_custom_call.1} parent=43 // pred_region
          %s4518 = ssub.s32 1024, 1024
          %4519 = vsyncadd %s4510, %s4518
          %s4520 = smul.addr %s22, 8
          %s4521 = smul.addr %s4520, 128
          %s4522 = scalar_lea.hbm %s6, %s4521
          %s4523 = sshll.u32 %s4513, 4
          %s4524 = int_to_ptr.vmem [resolvable:$true] %s4523
          %4529 = dma.vmem_to_hbm [thread:$0]  %s4524, 1024, %s4522, %s4510, 128, 128, 8
        $region56: #{tpu_custom_call.1} parent=43 // pred_fallthru
          _
      $region44: #{tpu_custom_call.1} parent=5 // pred_fallthru
        _
      %p4530 = scmp.le.s32.totalorder 2, %s17
      // Predicated region
      $region57: #{tpu_custom_call.1} parent=5 // pred_check
        %p4531 = pneg %p4530
      $region58: #{tpu_custom_call.1} parent=5 // pred_check_branch
        %4533 = sbr.rel (%p4531) target = $region60
      $region59: #{tpu_custom_call.1} parent=5 // pred_region
        %s4534 = ssub.s32 %s17, 2
        // Predicated region
        $region61: #{tpu_custom_call.1} parent=59 // pred_check
          %p4535 = pneg %p177
        $region62: #{tpu_custom_call.1} parent=59 // pred_check_branch
          %4537 = sbr.rel (%p4535) target = $region64
        $region63: #{tpu_custom_call.1} parent=59 // pred_region
          %s4538 = sand.u32 %s162, 1
          %s4539 = scalar_lea.sflag [#allocation7], %s4538
          %s4540 = sand.u32 %s162, 1
          %s4541 = smul.addr %s4540, 64
          %s4542 = scalar_lea.vmem [#allocation10], %s4541
          %4543 = dma.done %s4539, 1024
        $region64: #{tpu_custom_call.1} parent=59 // pred_fallthru
          _
      $region60: #{tpu_custom_call.1} parent=5 // pred_fallthru
        _
    $region6: #{tpu_custom_call.1} parent=1 // loop_footer
      %s21 = sadd.s32 1, %s17
    $region7: #{tpu_custom_call.1} parent=1 // loop_footer_branch
      %16 = sbr.rel target = $region3
    $region8: #{tpu_custom_call.1} parent=1 // loop_exit
      _
    %4544 = vsyncpa [#allocation6], 1
    %s4545 = scalar_lea.sflag [#allocation6], 1
    %4546 = vsyncpa %s4545, 1
    %4547 = vsyncpa [#allocation9], 1
    %4548 = vsyncpa [#allocation7], 1
    %s4549 = scalar_lea.sflag [#allocation7], 1
    %4550 = vsyncpa %s4549, 1

</llo_original>
